<compile_context>
chip_gen: v7x
topology: tpu7x:2x2x1
jax: 0.10.0
libtpu: 0.0.40
codegen_flags: <defaults>
</compile_context>

<pallas_src>
import functools
import math

import jax
import jax.numpy as jnp
from jax import lax
from jax.experimental import pallas as pl
from jax.experimental.pallas import tpu as pltpu

# ----------------------------- model config -----------------------------

VOCAB = 100
BERT_HIDDEN = 32                 # LSTM input size I
LSTM_HIDDEN = 32                 # per-direction hidden H
EMBED_DIM = 2 * LSTM_HIDDEN      # E = 64 (BiLSTM output == attention embed_dim)
NUM_HEADS = 4
HEAD_DIM = EMBED_DIM // NUM_HEADS
NUM_TAGS = 8
NT_PAD = 128                     # lane-padded classifier width
SEQ_LEN = 8

PAD_MASK = -1e30                 # additive mask for padded keys (same sequence)
CROSS_MASK = -2e30               # additive mask for cross-sequence pairs (more
                                 # negative so all-pad rows stay within their seq)


# ----------------------------- fused Pallas kernel -----------------------------


def _fused_forward_kernel(
    x_ref,        # [N, I]     N = S*B_BLK, time-major rows: i = p*B_BLK + b
    amask_ref,    # [G, N, N]  resident additive attention mask
    wih_ref,      # [I, 8H]    x->gate weights, fwd(i,f,o,g) | bwd(i,f,o,g)
    bih_ref,      # [1, 8H]    packed (b_ih + b_hh) per direction
    whh_ref,      # [2H, 8H]   block-diagonal recurrent weights (both directions)
    ln1_g_ref, ln1_b_ref,      # [1, E]
    qkv_w_ref, qkv_b_ref,      # [E, 3E], [1, 3E]
    out_w_ref, out_b_ref,      # [E, E],  [1, E]
    ln2_g_ref, ln2_b_ref,      # [1, E]
    cls_w_ref, cls_b_ref,      # [E, NT_PAD], [1, NT_PAD]
    logits_ref,   # [N, NT_PAD]
    lstm_buf,     # scratch VMEM [N, E]  (BiLSTM output assembly)
    *, seq_len,
):
    N = x_ref.shape[0]
    S = seq_len
    Bb = N // S
    H = LSTM_HIDDEN
    E = EMBED_DIM
    nh = NUM_HEADS
    dh = HEAD_DIM
    f32 = jnp.float32

    def dot(a, b):
        return jnp.dot(a, b, preferred_element_type=f32)

    def layer_norm(x, g_ref, b_ref):
        mu = jnp.mean(x, axis=-1, keepdims=True)
        d = x - mu
        var = jnp.mean(d * d, axis=-1, keepdims=True)
        return d * lax.rsqrt(var + 1e-5) * g_ref[...] + b_ref[...]

    # ---------------- BiLSTM ----------------
    # x->gate projection for all time steps & both directions in one MXU matmul.
    xg = dot(x_ref[...], wih_ref[...]) + bih_ref[...]            # [N, 8H]
    whh = whh_ref[...]                                           # [2H, 8H]

    h = jnp.zeros((Bb, 2 * H), f32)                              # [hf | hb]
    cf = jnp.zeros((Bb, H), f32)
    cb = jnp.zeros((Bb, H), f32)
    for t in range(S):                     # static unroll; carries stay in vregs
        tb = S - 1 - t                     # bwd direction time reversal in-kernel
        z = dot(h, whh)                    # both directions: ONE MXU op per step
        zf = xg[t * Bb:(t + 1) * Bb, 0:4 * H] + z[:, 0:4 * H]
        zb = xg[tb * Bb:(tb + 1) * Bb, 4 * H:8 * H] + z[:, 4 * H:8 * H]
        # gate layout per direction: (i, f, o, g)
        sf = jax.nn.sigmoid(zf[:, 0:3 * H])
        sb = jax.nn.sigmoid(zb[:, 0:3 * H])
        gf = jnp.tanh(zf[:, 3 * H:4 * H])
        gb = jnp.tanh(zb[:, 3 * H:4 * H])
        cf = sf[:, H:2 * H] * cf + sf[:, 0:H] * gf
        cb = sb[:, H:2 * H] * cb + sb[:, 0:H] * gb
        hf = sf[:, 2 * H:3 * H] * jnp.tanh(cf)
        hb = sb[:, 2 * H:3 * H] * jnp.tanh(cb)
        h = jnp.concatenate([hf, hb], axis=-1)
        # assemble the time-major BiLSTM output (off the recurrence crit. path)
        lstm_buf[t * Bb:(t + 1) * Bb, 0:H] = hf
        lstm_buf[tb * Bb:(tb + 1) * Bb, H:2 * H] = hb

    lstm_out = lstm_buf[...]                                     # [N, E]

    # ---------------- LayerNorm 1 (dropouts are identity in eval) ----------------
    h1 = layer_norm(lstm_out, ln1_g_ref, ln1_b_ref)

    # ---------------- Multi-head self-attention ----------------
    # All B_BLK sequences share one [N, N] score matrix per head; cross-sequence
    # pairs and padded keys are removed by the resident additive mask.
    qkv = dot(h1, qkv_w_ref[...]) + qkv_b_ref[...]               # [N, 3E]
    amask = amask_ref[pl.program_id(0)]                          # [N, N]
    scale = 1.0 / math.sqrt(dh)

    scores = []
    for hd in range(nh):
        lo = hd * dh
        q = qkv[:, lo:lo + dh] * scale
        k = qkv[:, E + lo:E + lo + dh]
        s = jnp.einsum("qd,kd->qk", q, k, preferred_element_type=f32)
        scores.append(s + amask)
    s_all = jnp.concatenate(scores, axis=0)                      # [nh*N, N]
    mx = jnp.max(s_all, axis=-1, keepdims=True)                  # one softmax pass
    p_all = jnp.exp(s_all - mx)
    p_all = p_all / jnp.sum(p_all, axis=-1, keepdims=True)       # exact softmax

    ctx = []
    for hd in range(nh):
        lo = hd * dh
        v = qkv[:, 2 * E + lo:2 * E + lo + dh]
        ctx.append(dot(p_all[hd * N:(hd + 1) * N, :], v))        # [N, dh]
    attn = dot(jnp.concatenate(ctx, axis=-1), out_w_ref[...]) + out_b_ref[...]

    # ---------- residual + LayerNorm 2 + classifier (lane-padded, unmasked store) ----------
    h2 = layer_norm(h1 + attn, ln2_g_ref, ln2_b_ref)
    logits_ref[...] = dot(h2, cls_w_ref[...]) + cls_b_ref[...]   # [N, NT_PAD]


# ----------------------------- params -----------------------------


def init_params(key):
    ks = jax.random.split(key, 8)
    p = {}
    # TODO(synk): pretrained BertModel encoder is not reproduced; substituted with a
    # deterministic embedding lookup producing the [B, S, input_size] hidden states.
    p["emb"] = jax.random.normal(ks[0], (VOCAB, BERT_HIDDEN), jnp.float32) * 0.02

    # BiLSTM (1 layer). PyTorch gate order i, f, g, o; biases zero-initialized.
    for idx, d in enumerate(("fwd", "bwd")):
        kk = jax.random.split(ks[1 + idx], 2)
        p[f"lstm_w_ih_{d}"] = jax.random.normal(kk[0], (4 * LSTM_HIDDEN, BERT_HIDDEN)) * 0.1
        p[f"lstm_w_hh_{d}"] = jax.random.normal(kk[1], (4 * LSTM_HIDDEN, LSTM_HIDDEN)) * 0.1
        p[f"lstm_b_ih_{d}"] = jnp.zeros((4 * LSTM_HIDDEN,), jnp.float32)
        p[f"lstm_b_hh_{d}"] = jnp.zeros((4 * LSTM_HIDDEN,), jnp.float32)

    # LayerNorms (weight=1, bias=0 as in _init_weights)
    p["ln1_g"] = jnp.ones((EMBED_DIM,), jnp.float32)
    p["ln1_b"] = jnp.zeros((EMBED_DIM,), jnp.float32)
    p["ln2_g"] = jnp.ones((EMBED_DIM,), jnp.float32)
    p["ln2_b"] = jnp.zeros((EMBED_DIM,), jnp.float32)

    # MultiheadAttention packed in-projection [3E, E] and out-projection [E, E]
    p["attn_in_w"] = jax.random.normal(ks[4], (3 * EMBED_DIM, EMBED_DIM)) * 0.05
    p["attn_in_b"] = jnp.zeros((3 * EMBED_DIM,), jnp.float32)
    p["attn_out_w"] = jax.random.normal(ks[5], (EMBED_DIM, EMBED_DIM)) * 0.05
    p["attn_out_b"] = jnp.zeros((EMBED_DIM,), jnp.float32)

    # Classifier
    p["cls_w"] = jax.random.normal(ks[6], (NUM_TAGS, EMBED_DIM)) * 0.1
    p["cls_b"] = jnp.zeros((NUM_TAGS,), jnp.float32)
    return p


def _reorder_gates(w):
    """PyTorch LSTM gate blocks (i, f, g, o) -> kernel gate order (i, f, o, g)."""
    Hh = LSTM_HIDDEN
    return jnp.concatenate([w[0:Hh], w[Hh:2 * Hh], w[3 * Hh:4 * Hh], w[2 * Hh:3 * Hh]], axis=0)


def prepare_params(p):
    """One-time packing of weights into kernel-friendly layouts."""
    Hh = LSTM_HIDDEN
    E = EMBED_DIM
    f32 = jnp.float32

    # x->gate weights for both directions packed along columns: [I, 8H]
    wih = jnp.concatenate(
        [_reorder_gates(p["lstm_w_ih_fwd"]).T, _reorder_gates(p["lstm_w_ih_bwd"]).T],
        axis=1).astype(f32)
    bih = jnp.concatenate(
        [_reorder_gates(p["lstm_b_ih_fwd"] + p["lstm_b_hh_fwd"]),
         _reorder_gates(p["lstm_b_ih_bwd"] + p["lstm_b_hh_bwd"])])[None, :].astype(f32)

    # block-diagonal recurrent weight: [hf | hb] @ whh -> fwd gates | bwd gates
    whh_f = _reorder_gates(p["lstm_w_hh_fwd"]).T                 # [H, 4H]
    whh_b = _reorder_gates(p["lstm_w_hh_bwd"]).T                 # [H, 4H]
    zero = jnp.zeros((Hh, 4 * Hh), f32)
    whh = jnp.concatenate(
        [jnp.concatenate([whh_f, zero], axis=1),
         jnp.concatenate([zero, whh_b], axis=1)], axis=0).astype(f32)   # [2H, 8H]

    # classifier lane-padded to 128 output columns
    cls_w = jnp.zeros((E, NT_PAD), f32).at[:, :NUM_TAGS].set(p["cls_w"].T)
    cls_b = jnp.zeros((1, NT_PAD), f32).at[0, :NUM_TAGS].set(p["cls_b"])

    return {
        "emb": p["emb"],
        "wih": wih, "bih": bih, "whh": whh,
        "ln1_g": p["ln1_g"][None, :], "ln1_b": p["ln1_b"][None, :],
        "qkv_w": p["attn_in_w"].T, "qkv_b": p["attn_in_b"][None, :],
        "out_w": p["attn_out_w"].T, "out_b": p["attn_out_b"][None, :],
        "ln2_g": p["ln2_g"][None, :], "ln2_b": p["ln2_b"][None, :],
        "cls_w": cls_w, "cls_b": cls_b,
    }


# ----------------------------- forward -----------------------------


def _choose_batch_block(batch):
    """Largest divisor of `batch` <= 16 that keeps the grid length >= 2 (megacore)."""
    if batch <= 1:
        return 1
    best = 1
    for cand in range(1, min(batch // 2, 16) + 1):
        if batch % cand == 0:
            best = cand
    return best


@jax.jit
def forward(prep, input_ids, attention_mask):
    B, S = input_ids.shape
    I = prep["wih"].shape[0]
    f32 = jnp.float32

    b_blk = _choose_batch_block(B)
    G = B // b_blk
    N = S * b_blk

    # "BERT" hidden states (see TODO in init_params); bert_dropout is identity (eval).
    seq = prep["emb"][input_ids].astype(f32)                              # [B, S, I]
    # per-block TIME-major rows (i = p*b_blk + b) so the LSTM slices whole
    # B_BLK-wide slabs per time step with no in-kernel transposes.
    x_tm = seq.reshape(G, b_blk, S, I).transpose(0, 2, 1, 3).reshape(G, N, I)

    # Resident additive attention mask: padded keys (-1e30) + cross-sequence (-2e30).
    key_ok = attention_mask.reshape(G, b_blk, S)
    col = jnp.arange(N)
    b_of = col % b_blk
    p_of = col // b_blk
    same_seq = (b_of[:, None] == b_of[None, :])[None, :, :]               # [1, N, N]
    key_valid = (key_ok[:, b_of, p_of] != 0)[:, None, :]                  # [G, 1, N]
    amask = jnp.where(same_seq,
                      jnp.where(key_valid, 0.0, PAD_MASK),
                      CROSS_MASK).astype(f32)                             # [G, N, N]

    weights = (
        prep["wih"], prep["bih"], prep["whh"],
        prep["ln1_g"], prep["ln1_b"],
        prep["qkv_w"], prep["qkv_b"],
        prep["out_w"], prep["out_b"],
        prep["ln2_g"], prep["ln2_b"],
        prep["cls_w"], prep["cls_b"],
    )

    def resident(a):
        nd = a.ndim
        return pl.BlockSpec(a.shape, lambda g: (0,) * nd)   # fetched once, stays in VMEM

    logits_pad = pl.pallas_call(
        functools.partial(_fused_forward_kernel, seq_len=S),
        grid=(G,),
        out_shape=jax.ShapeDtypeStruct((G, N, NT_PAD), f32),
        in_specs=[
            pl.BlockSpec((None, N, I), lambda g: (g, 0, 0)),   # per-block hidden states
            resident(amask),                                   # resident attention mask
        ] + [resident(w) for w in weights],                    # resident weights
        out_specs=pl.BlockSpec((None, N, NT_PAD), lambda g: (g, 0, 0)),
        scratch_shapes=[pltpu.VMEM((N, EMBED_DIM), f32)],      # BiLSTM output assembly
        compiler_params=pltpu.CompilerParams(
            dimension_semantics=("parallel",),   # v7x: shard batch blocks across TCs
            vmem_limit_bytes=32 * 1024 * 1024,
        ),
    )(x_tm, amask, *weights)

    # back to [B, S, NUM_TAGS]; sigmoid / predictions on the tiny sliced tensor (XLA)
    logits = (logits_pad.reshape(G, S, b_blk, NT_PAD)
              .transpose(0, 2, 1, 3)
              .reshape(B, S, NT_PAD)[:, :, :NUM_TAGS])
    probs = jax.nn.sigmoid(logits)
    # tags/mask not provided -> loss is None, matching the reference forward.
    return {
        "logits": logits,
        "probs": probs,
        "loss": None,
        "predictions": (probs > 0.5).astype(jnp.int32),
    }


# ----------------------------- main -----------------------------

if __name__ == "__main__":
    B, S = 8, SEQ_LEN
    key = jax.random.PRNGKey(0)
    k_param, k_ids = jax.random.split(key)

    params = init_params(k_param)
    prep = prepare_params(params)

    input_ids = jax.random.randint(k_ids, (B, S), 0, VOCAB, dtype=jnp.int32)
    # a couple of sequences with trailing padding
    attention_mask = (jnp.ones((B, S), dtype=jnp.int32)
                      .at[1, -2:].set(0)
                      .at[5, -3:].set(0))

    out = forward(prep, input_ids, attention_mask)
    jax.block_until_ready(out["logits"])
    jax.block_until_ready(out["probs"])
    jax.block_until_ready(out["predictions"])

    assert out["logits"].shape == (B, S, NUM_TAGS)
    assert out["probs"].shape == (B, S, NUM_TAGS)
    assert out["predictions"].shape == (B, S, NUM_TAGS)
    assert bool(jnp.all(jnp.isfinite(out["logits"])))
    assert bool(jnp.all(jnp.isfinite(out["probs"])))
    print("KERNEL_OK")
</pallas_src>

<mosaic_0001>
module attributes {stable_mosaic.version = 11 : i64} {
  func.func @_fused_forward_kernel(%arg0: i32, %arg1: memref<1x32x32xf32, #tpu.memory_space<vmem>>, %arg2: memref<2x32x32xf32, #tpu.memory_space<vmem>>, %arg3: memref<32x256xf32, #tpu.memory_space<vmem>>, %arg4: memref<1x256xf32, #tpu.memory_space<vmem>>, %arg5: memref<64x256xf32, #tpu.memory_space<vmem>>, %arg6: memref<1x64xf32, #tpu.memory_space<vmem>>, %arg7: memref<1x64xf32, #tpu.memory_space<vmem>>, %arg8: memref<64x192xf32, #tpu.memory_space<vmem>>, %arg9: memref<1x192xf32, #tpu.memory_space<vmem>>, %arg10: memref<64x64xf32, #tpu.memory_space<vmem>>, %arg11: memref<1x64xf32, #tpu.memory_space<vmem>>, %arg12: memref<1x64xf32, #tpu.memory_space<vmem>>, %arg13: memref<1x64xf32, #tpu.memory_space<vmem>>, %arg14: memref<64x128xf32, #tpu.memory_space<vmem>>, %arg15: memref<1x128xf32, #tpu.memory_space<vmem>>, %arg16: memref<1x32x128xf32, #tpu.memory_space<vmem>>, %arg17: memref<32x64xf32, #tpu.memory_space<vmem>>) attributes {dimension_semantics = [#tpu.dimension_semantics<parallel>], iteration_bounds = array<i64: 2>, scalar_prefetch = 0 : i64, scratch_operands = 1 : i64, tpu.core_type = #tpu.core_type<tc>, window_params = [{transform_indices = @transform_0, window_bounds = array<i64: 1, 32, 32>}, {pipeline_mode = #tpu.pipeline_mode<synchronous>, transform_indices = @transform_1, window_bounds = array<i64: 2, 32, 32>}, {pipeline_mode = #tpu.pipeline_mode<synchronous>, transform_indices = @transform_2, window_bounds = array<i64: 32, 256>}, {pipeline_mode = #tpu.pipeline_mode<synchronous>, transform_indices = @transform_3, window_bounds = array<i64: 1, 256>}, {pipeline_mode = #tpu.pipeline_mode<synchronous>, transform_indices = @transform_4, window_bounds = array<i64: 64, 256>}, {pipeline_mode = #tpu.pipeline_mode<synchronous>, transform_indices = @transform_5, window_bounds = array<i64: 1, 64>}, {pipeline_mode = #tpu.pipeline_mode<synchronous>, transform_indices = @transform_6, window_bounds = array<i64: 1, 64>}, {pipeline_mode = #tpu.pipeline_mode<synchronous>, transform_indices = @transform_7, window_bounds = array<i64: 64, 192>}, {pipeline_mode = #tpu.pipeline_mode<synchronous>, transform_indices = @transform_8, window_bounds = array<i64: 1, 192>}, {pipeline_mode = #tpu.pipeline_mode<synchronous>, transform_indices = @transform_9, window_bounds = array<i64: 64, 64>}, {pipeline_mode = #tpu.pipeline_mode<synchronous>, transform_indices = @transform_10, window_bounds = array<i64: 1, 64>}, {pipeline_mode = #tpu.pipeline_mode<synchronous>, transform_indices = @transform_11, window_bounds = array<i64: 1, 64>}, {pipeline_mode = #tpu.pipeline_mode<synchronous>, transform_indices = @transform_12, window_bounds = array<i64: 1, 64>}, {pipeline_mode = #tpu.pipeline_mode<synchronous>, transform_indices = @transform_13, window_bounds = array<i64: 64, 128>}, {pipeline_mode = #tpu.pipeline_mode<synchronous>, transform_indices = @transform_14, window_bounds = array<i64: 1, 128>}, {transform_indices = @transform_15, window_bounds = array<i64: 1, 32, 128>}]} {
    %c0 = arith.constant 0 : index
    %c0_0 = arith.constant 0 : index
    %c0_1 = arith.constant 0 : index
    %0 = vector.load %arg1[%c0, %c0_0, %c0_1] : memref<1x32x32xf32, #tpu.memory_space<vmem>>, vector<1x32x32xf32>
    %1 = vector.shape_cast %0 : vector<1x32x32xf32> to vector<32x32xf32>
    %c0_2 = arith.constant 0 : index
    %c0_3 = arith.constant 0 : index
    %2 = vector.load %arg3[%c0_2, %c0_3] : memref<32x256xf32, #tpu.memory_space<vmem>>, vector<32x256xf32>
    %cst = arith.constant dense<0.000000e+00> : vector<32x256xf32>
    %3 = tpu.matmul %1, %2, %cst {dimension_numbers = #tpu.dot_dimension_numbers<[1], [0], [0], [1], [0, 0, 1, 1], [], []>} : vector<32x32xf32>, vector<32x256xf32>, vector<32x256xf32> -> vector<32x256xf32>
    %c0_4 = arith.constant 0 : index
    %c0_5 = arith.constant 0 : index
    %4 = vector.load %arg4[%c0_4, %c0_5] : memref<1x256xf32, #tpu.memory_space<vmem>>, vector<1x256xf32>
    %5 = vector.broadcast %4 : vector<1x256xf32> to vector<32x256xf32>
    %6 = arith.addf %3, %5 : vector<32x256xf32>
    %c0_6 = arith.constant 0 : index
    %c0_7 = arith.constant 0 : index
    %7 = vector.load %arg5[%c0_6, %c0_7] : memref<64x256xf32, #tpu.memory_space<vmem>>, vector<64x256xf32>
    %cst_8 = arith.constant 0.000000e+00 : f32
    %8 = vector.broadcast %cst_8 : f32 to vector<4x64xf32>
    %cst_9 = arith.constant 0.000000e+00 : f32
    %9 = vector.broadcast %cst_9 : f32 to vector<4x32xf32>
    %cst_10 = arith.constant 0.000000e+00 : f32
    %10 = vector.broadcast %cst_10 : f32 to vector<4x32xf32>
    %cst_11 = arith.constant dense<0.000000e+00> : vector<4x256xf32>
    %11 = tpu.matmul %8, %7, %cst_11 {dimension_numbers = #tpu.dot_dimension_numbers<[1], [0], [0], [1], [0, 0, 1, 1], [], []>} : vector<4x64xf32>, vector<64x256xf32>, vector<4x256xf32> -> vector<4x256xf32>
    %12 = vector.extract_strided_slice %6 {offsets = [0, 0], sizes = [4, 128], strides = [1, 1]} : vector<32x256xf32> to vector<4x128xf32>
    %13 = vector.extract_strided_slice %11 {offsets = [0, 0], sizes = [4, 128], strides = [1, 1]} : vector<4x256xf32> to vector<4x128xf32>
    %14 = arith.addf %12, %13 : vector<4x128xf32>
    %15 = vector.extract_strided_slice %6 {offsets = [28, 128], sizes = [4, 128], strides = [1, 1]} : vector<32x256xf32> to vector<4x128xf32>
    %16 = vector.extract_strided_slice %11 {offsets = [0, 128], sizes = [4, 128], strides = [1, 1]} : vector<4x256xf32> to vector<4x128xf32>
    %17 = arith.addf %15, %16 : vector<4x128xf32>
    %18 = vector.extract_strided_slice %14 {offsets = [0, 0], sizes = [4, 96], strides = [1, 1]} : vector<4x128xf32> to vector<4x96xf32>
    %19 = arith.negf %18 : vector<4x96xf32>
    %20 = math.exp %19 : vector<4x96xf32>
    %cst_12 = arith.constant 1.000000e+00 : f32
    %21 = vector.broadcast %cst_12 : f32 to vector<4x96xf32>
    %22 = arith.addf %21, %20 : vector<4x96xf32>
    %23 = arith.divf %21, %22 : vector<4x96xf32>
    %24 = vector.extract_strided_slice %17 {offsets = [0, 0], sizes = [4, 96], strides = [1, 1]} : vector<4x128xf32> to vector<4x96xf32>
    %25 = arith.negf %24 : vector<4x96xf32>
    %26 = math.exp %25 : vector<4x96xf32>
    %cst_13 = arith.constant 1.000000e+00 : f32
    %27 = vector.broadcast %cst_13 : f32 to vector<4x96xf32>
    %28 = arith.addf %27, %26 : vector<4x96xf32>
    %29 = arith.divf %27, %28 : vector<4x96xf32>
    %30 = vector.extract_strided_slice %14 {offsets = [0, 96], sizes = [4, 32], strides = [1, 1]} : vector<4x128xf32> to vector<4x32xf32>
    %31 = math.tanh %30 : vector<4x32xf32>
    %32 = vector.extract_strided_slice %17 {offsets = [0, 96], sizes = [4, 32], strides = [1, 1]} : vector<4x128xf32> to vector<4x32xf32>
    %33 = math.tanh %32 : vector<4x32xf32>
    %34 = vector.extract_strided_slice %23 {offsets = [0, 32], sizes = [4, 32], strides = [1, 1]} : vector<4x96xf32> to vector<4x32xf32>
    %35 = arith.mulf %34, %9 : vector<4x32xf32>
    %36 = vector.extract_strided_slice %23 {offsets = [0, 0], sizes = [4, 32], strides = [1, 1]} : vector<4x96xf32> to vector<4x32xf32>
    %37 = arith.mulf %36, %31 : vector<4x32xf32>
    %38 = arith.addf %35, %37 : vector<4x32xf32>
    %39 = vector.extract_strided_slice %29 {offsets = [0, 32], sizes = [4, 32], strides = [1, 1]} : vector<4x96xf32> to vector<4x32xf32>
    %40 = arith.mulf %39, %10 : vector<4x32xf32>
    %41 = vector.extract_strided_slice %29 {offsets = [0, 0], sizes = [4, 32], strides = [1, 1]} : vector<4x96xf32> to vector<4x32xf32>
    %42 = arith.mulf %41, %33 : vector<4x32xf32>
    %43 = arith.addf %40, %42 : vector<4x32xf32>
    %44 = vector.extract_strided_slice %23 {offsets = [0, 64], sizes = [4, 32], strides = [1, 1]} : vector<4x96xf32> to vector<4x32xf32>
    %45 = math.tanh %38 : vector<4x32xf32>
    %46 = arith.mulf %44, %45 : vector<4x32xf32>
    %47 = vector.extract_strided_slice %29 {offsets = [0, 64], sizes = [4, 32], strides = [1, 1]} : vector<4x96xf32> to vector<4x32xf32>
    %48 = math.tanh %43 : vector<4x32xf32>
    %49 = arith.mulf %47, %48 : vector<4x32xf32>
    %50 = tpu.concatenate %46, %49 in 1 : vector<4x32xf32>, vector<4x32xf32> -> vector<4x64xf32>
    %c0_14 = arith.constant 0 : index
    %c0_15 = arith.constant 0 : index
    %51 = vector.load %arg17[%c0_14, %c0_15] : memref<32x64xf32, #tpu.memory_space<vmem>>, vector<4x32xf32>
    tpu.vector_store %arg17[%c0_14, %c0_15], %46 {strides = array<i32>} : memref<32x64xf32, #tpu.memory_space<vmem>>, vector<4x32xf32>,
    %c28 = arith.constant 28 : index
    %c32 = arith.constant 32 : index
    %52 = vector.load %arg17[%c28, %c32] : memref<32x64xf32, #tpu.memory_space<vmem>>, vector<4x32xf32>
    tpu.vector_store %arg17[%c28, %c32], %49 {strides = array<i32>} : memref<32x64xf32, #tpu.memory_space<vmem>>, vector<4x32xf32>,
    %cst_16 = arith.constant dense<0.000000e+00> : vector<4x256xf32>
    %53 = tpu.matmul %50, %7, %cst_16 {dimension_numbers = #tpu.dot_dimension_numbers<[1], [0], [0], [1], [0, 0, 1, 1], [], []>} : vector<4x64xf32>, vector<64x256xf32>, vector<4x256xf32> -> vector<4x256xf32>
    %54 = vector.extract_strided_slice %6 {offsets = [4, 0], sizes = [4, 128], strides = [1, 1]} : vector<32x256xf32> to vector<4x128xf32>
    %55 = vector.extract_strided_slice %53 {offsets = [0, 0], sizes = [4, 128], strides = [1, 1]} : vector<4x256xf32> to vector<4x128xf32>
    %56 = arith.addf %54, %55 : vector<4x128xf32>
    %57 = vector.extract_strided_slice %6 {offsets = [24, 128], sizes = [4, 128], strides = [1, 1]} : vector<32x256xf32> to vector<4x128xf32>
    %58 = vector.extract_strided_slice %53 {offsets = [0, 128], sizes = [4, 128], strides = [1, 1]} : vector<4x256xf32> to vector<4x128xf32>
    %59 = arith.addf %57, %58 : vector<4x128xf32>
    %60 = vector.extract_strided_slice %56 {offsets = [0, 0], sizes = [4, 96], strides = [1, 1]} : vector<4x128xf32> to vector<4x96xf32>
    %61 = arith.negf %60 : vector<4x96xf32>
    %62 = math.exp %61 : vector<4x96xf32>
    %cst_17 = arith.constant 1.000000e+00 : f32
    %63 = vector.broadcast %cst_17 : f32 to vector<4x96xf32>
    %64 = arith.addf %63, %62 : vector<4x96xf32>
    %65 = arith.divf %63, %64 : vector<4x96xf32>
    %66 = vector.extract_strided_slice %59 {offsets = [0, 0], sizes = [4, 96], strides = [1, 1]} : vector<4x128xf32> to vector<4x96xf32>
    %67 = arith.negf %66 : vector<4x96xf32>
    %68 = math.exp %67 : vector<4x96xf32>
    %cst_18 = arith.constant 1.000000e+00 : f32
    %69 = vector.broadcast %cst_18 : f32 to vector<4x96xf32>
    %70 = arith.addf %69, %68 : vector<4x96xf32>
    %71 = arith.divf %69, %70 : vector<4x96xf32>
    %72 = vector.extract_strided_slice %56 {offsets = [0, 96], sizes = [4, 32], strides = [1, 1]} : vector<4x128xf32> to vector<4x32xf32>
    %73 = math.tanh %72 : vector<4x32xf32>
    %74 = vector.extract_strided_slice %59 {offsets = [0, 96], sizes = [4, 32], strides = [1, 1]} : vector<4x128xf32> to vector<4x32xf32>
    %75 = math.tanh %74 : vector<4x32xf32>
    %76 = vector.extract_strided_slice %65 {offsets = [0, 32], sizes = [4, 32], strides = [1, 1]} : vector<4x96xf32> to vector<4x32xf32>
    %77 = arith.mulf %76, %38 : vector<4x32xf32>
    %78 = vector.extract_strided_slice %65 {offsets = [0, 0], sizes = [4, 32], strides = [1, 1]} : vector<4x96xf32> to vector<4x32xf32>
    %79 = arith.mulf %78, %73 : vector<4x32xf32>
    %80 = arith.addf %77, %79 : vector<4x32xf32>
    %81 = vector.extract_strided_slice %71 {offsets = [0, 32], sizes = [4, 32], strides = [1, 1]} : vector<4x96xf32> to vector<4x32xf32>
    %82 = arith.mulf %81, %43 : vector<4x32xf32>
    %83 = vector.extract_strided_slice %71 {offsets = [0, 0], sizes = [4, 32], strides = [1, 1]} : vector<4x96xf32> to vector<4x32xf32>
    %84 = arith.mulf %83, %75 : vector<4x32xf32>
    %85 = arith.addf %82, %84 : vector<4x32xf32>
    %86 = vector.extract_strided_slice %65 {offsets = [0, 64], sizes = [4, 32], strides = [1, 1]} : vector<4x96xf32> to vector<4x32xf32>
    %87 = math.tanh %80 : vector<4x32xf32>
    %88 = arith.mulf %86, %87 : vector<4x32xf32>
    %89 = vector.extract_strided_slice %71 {offsets = [0, 64], sizes = [4, 32], strides = [1, 1]} : vector<4x96xf32> to vector<4x32xf32>
    %90 = math.tanh %85 : vector<4x32xf32>
    %91 = arith.mulf %89, %90 : vector<4x32xf32>
    %92 = tpu.concatenate %88, %91 in 1 : vector<4x32xf32>, vector<4x32xf32> -> vector<4x64xf32>
    %c4 = arith.constant 4 : index
    %c0_19 = arith.constant 0 : index
    %93 = vector.load %arg17[%c4, %c0_19] : memref<32x64xf32, #tpu.memory_space<vmem>>, vector<4x32xf32>
    tpu.vector_store %arg17[%c4, %c0_19], %88 {strides = array<i32>} : memref<32x64xf32, #tpu.memory_space<vmem>>, vector<4x32xf32>,
    %c24 = arith.constant 24 : index
    %c32_20 = arith.constant 32 : index
    %94 = vector.load %arg17[%c24, %c32_20] : memref<32x64xf32, #tpu.memory_space<vmem>>, vector<4x32xf32>
    tpu.vector_store %arg17[%c24, %c32_20], %91 {strides = array<i32>} : memref<32x64xf32, #tpu.memory_space<vmem>>, vector<4x32xf32>,
    %cst_21 = arith.constant dense<0.000000e+00> : vector<4x256xf32>
    %95 = tpu.matmul %92, %7, %cst_21 {dimension_numbers = #tpu.dot_dimension_numbers<[1], [0], [0], [1], [0, 0, 1, 1], [], []>} : vector<4x64xf32>, vector<64x256xf32>, vector<4x256xf32> -> vector<4x256xf32>
    %96 = vector.extract_strided_slice %6 {offsets = [8, 0], sizes = [4, 128], strides = [1, 1]} : vector<32x256xf32> to vector<4x128xf32>
    %97 = vector.extract_strided_slice %95 {offsets = [0, 0], sizes = [4, 128], strides = [1, 1]} : vector<4x256xf32> to vector<4x128xf32>
    %98 = arith.addf %96, %97 : vector<4x128xf32>
    %99 = vector.extract_strided_slice %6 {offsets = [20, 128], sizes = [4, 128], strides = [1, 1]} : vector<32x256xf32> to vector<4x128xf32>
    %100 = vector.extract_strided_slice %95 {offsets = [0, 128], sizes = [4, 128], strides = [1, 1]} : vector<4x256xf32> to vector<4x128xf32>
    %101 = arith.addf %99, %100 : vector<4x128xf32>
    %102 = vector.extract_strided_slice %98 {offsets = [0, 0], sizes = [4, 96], strides = [1, 1]} : vector<4x128xf32> to vector<4x96xf32>
    %103 = arith.negf %102 : vector<4x96xf32>
    %104 = math.exp %103 : vector<4x96xf32>
    %cst_22 = arith.constant 1.000000e+00 : f32
    %105 = vector.broadcast %cst_22 : f32 to vector<4x96xf32>
    %106 = arith.addf %105, %104 : vector<4x96xf32>
    %107 = arith.divf %105, %106 : vector<4x96xf32>
    %108 = vector.extract_strided_slice %101 {offsets = [0, 0], sizes = [4, 96], strides = [1, 1]} : vector<4x128xf32> to vector<4x96xf32>
    %109 = arith.negf %108 : vector<4x96xf32>
    %110 = math.exp %109 : vector<4x96xf32>
    %cst_23 = arith.constant 1.000000e+00 : f32
    %111 = vector.broadcast %cst_23 : f32 to vector<4x96xf32>
    %112 = arith.addf %111, %110 : vector<4x96xf32>
    %113 = arith.divf %111, %112 : vector<4x96xf32>
    %114 = vector.extract_strided_slice %98 {offsets = [0, 96], sizes = [4, 32], strides = [1, 1]} : vector<4x128xf32> to vector<4x32xf32>
    %115 = math.tanh %114 : vector<4x32xf32>
    %116 = vector.extract_strided_slice %101 {offsets = [0, 96], sizes = [4, 32], strides = [1, 1]} : vector<4x128xf32> to vector<4x32xf32>
    %117 = math.tanh %116 : vector<4x32xf32>
    %118 = vector.extract_strided_slice %107 {offsets = [0, 32], sizes = [4, 32], strides = [1, 1]} : vector<4x96xf32> to vector<4x32xf32>
    %119 = arith.mulf %118, %80 : vector<4x32xf32>
    %120 = vector.extract_strided_slice %107 {offsets = [0, 0], sizes = [4, 32], strides = [1, 1]} : vector<4x96xf32> to vector<4x32xf32>
    %121 = arith.mulf %120, %115 : vector<4x32xf32>
    %122 = arith.addf %119, %121 : vector<4x32xf32>
    %123 = vector.extract_strided_slice %113 {offsets = [0, 32], sizes = [4, 32], strides = [1, 1]} : vector<4x96xf32> to vector<4x32xf32>
    %124 = arith.mulf %123, %85 : vector<4x32xf32>
    %125 = vector.extract_strided_slice %113 {offsets = [0, 0], sizes = [4, 32], strides = [1, 1]} : vector<4x96xf32> to vector<4x32xf32>
    %126 = arith.mulf %125, %117 : vector<4x32xf32>
    %127 = arith.addf %124, %126 : vector<4x32xf32>
    %128 = vector.extract_strided_slice %107 {offsets = [0, 64], sizes = [4, 32], strides = [1, 1]} : vector<4x96xf32> to vector<4x32xf32>
    %129 = math.tanh %122 : vector<4x32xf32>
    %130 = arith.mulf %128, %129 : vector<4x32xf32>
    %131 = vector.extract_strided_slice %113 {offsets = [0, 64], sizes = [4, 32], strides = [1, 1]} : vector<4x96xf32> to vector<4x32xf32>
    %132 = math.tanh %127 : vector<4x32xf32>
    %133 = arith.mulf %131, %132 : vector<4x32xf32>
    %134 = tpu.concatenate %130, %133 in 1 : vector<4x32xf32>, vector<4x32xf32> -> vector<4x64xf32>
    %c8 = arith.constant 8 : index
    %c0_24 = arith.constant 0 : index
    %135 = vector.load %arg17[%c8, %c0_24] : memref<32x64xf32, #tpu.memory_space<vmem>>, vector<4x32xf32>
    tpu.vector_store %arg17[%c8, %c0_24], %130 {strides = array<i32>} : memref<32x64xf32, #tpu.memory_space<vmem>>, vector<4x32xf32>,
    %c20 = arith.constant 20 : index
    %c32_25 = arith.constant 32 : index
    %136 = vector.load %arg17[%c20, %c32_25] : memref<32x64xf32, #tpu.memory_space<vmem>>, vector<4x32xf32>
    tpu.vector_store %arg17[%c20, %c32_25], %133 {strides = array<i32>} : memref<32x64xf32, #tpu.memory_space<vmem>>, vector<4x32xf32>,
    %cst_26 = arith.constant dense<0.000000e+00> : vector<4x256xf32>
    %137 = tpu.matmul %134, %7, %cst_26 {dimension_numbers = #tpu.dot_dimension_numbers<[1], [0], [0], [1], [0, 0, 1, 1], [], []>} : vector<4x64xf32>, vector<64x256xf32>, vector<4x256xf32> -> vector<4x256xf32>
    %138 = vector.extract_strided_slice %6 {offsets = [12, 0], sizes = [4, 128], strides = [1, 1]} : vector<32x256xf32> to vector<4x128xf32>
    %139 = vector.extract_strided_slice %137 {offsets = [0, 0], sizes = [4, 128], strides = [1, 1]} : vector<4x256xf32> to vector<4x128xf32>
    %140 = arith.addf %138, %139 : vector<4x128xf32>
    %141 = vector.extract_strided_slice %6 {offsets = [16, 128], sizes = [4, 128], strides = [1, 1]} : vector<32x256xf32> to vector<4x128xf32>
    %142 = vector.extract_strided_slice %137 {offsets = [0, 128], sizes = [4, 128], strides = [1, 1]} : vector<4x256xf32> to vector<4x128xf32>
    %143 = arith.addf %141, %142 : vector<4x128xf32>
    %144 = vector.extract_strided_slice %140 {offsets = [0, 0], sizes = [4, 96], strides = [1, 1]} : vector<4x128xf32> to vector<4x96xf32>
    %145 = arith.negf %144 : vector<4x96xf32>
    %146 = math.exp %145 : vector<4x96xf32>
    %cst_27 = arith.constant 1.000000e+00 : f32
    %147 = vector.broadcast %cst_27 : f32 to vector<4x96xf32>
    %148 = arith.addf %147, %146 : vector<4x96xf32>
    %149 = arith.divf %147, %148 : vector<4x96xf32>
    %150 = vector.extract_strided_slice %143 {offsets = [0, 0], sizes = [4, 96], strides = [1, 1]} : vector<4x128xf32> to vector<4x96xf32>
    %151 = arith.negf %150 : vector<4x96xf32>
    %152 = math.exp %151 : vector<4x96xf32>
    %cst_28 = arith.constant 1.000000e+00 : f32
    %153 = vector.broadcast %cst_28 : f32 to vector<4x96xf32>
    %154 = arith.addf %153, %152 : vector<4x96xf32>
    %155 = arith.divf %153, %154 : vector<4x96xf32>
    %156 = vector.extract_strided_slice %140 {offsets = [0, 96], sizes = [4, 32], strides = [1, 1]} : vector<4x128xf32> to vector<4x32xf32>
    %157 = math.tanh %156 : vector<4x32xf32>
    %158 = vector.extract_strided_slice %143 {offsets = [0, 96], sizes = [4, 32], strides = [1, 1]} : vector<4x128xf32> to vector<4x32xf32>
    %159 = math.tanh %158 : vector<4x32xf32>
    %160 = vector.extract_strided_slice %149 {offsets = [0, 32], sizes = [4, 32], strides = [1, 1]} : vector<4x96xf32> to vector<4x32xf32>
    %161 = arith.mulf %160, %122 : vector<4x32xf32>
    %162 = vector.extract_strided_slice %149 {offsets = [0, 0], sizes = [4, 32], strides = [1, 1]} : vector<4x96xf32> to vector<4x32xf32>
    %163 = arith.mulf %162, %157 : vector<4x32xf32>
    %164 = arith.addf %161, %163 : vector<4x32xf32>
    %165 = vector.extract_strided_slice %155 {offsets = [0, 32], sizes = [4, 32], strides = [1, 1]} : vector<4x96xf32> to vector<4x32xf32>
    %166 = arith.mulf %165, %127 : vector<4x32xf32>
    %167 = vector.extract_strided_slice %155 {offsets = [0, 0], sizes = [4, 32], strides = [1, 1]} : vector<4x96xf32> to vector<4x32xf32>
    %168 = arith.mulf %167, %159 : vector<4x32xf32>
    %169 = arith.addf %166, %168 : vector<4x32xf32>
    %170 = vector.extract_strided_slice %149 {offsets = [0, 64], sizes = [4, 32], strides = [1, 1]} : vector<4x96xf32> to vector<4x32xf32>
    %171 = math.tanh %164 : vector<4x32xf32>
    %172 = arith.mulf %170, %171 : vector<4x32xf32>
    %173 = vector.extract_strided_slice %155 {offsets = [0, 64], sizes = [4, 32], strides = [1, 1]} : vector<4x96xf32> to vector<4x32xf32>
    %174 = math.tanh %169 : vector<4x32xf32>
    %175 = arith.mulf %173, %174 : vector<4x32xf32>
    %176 = tpu.concatenate %172, %175 in 1 : vector<4x32xf32>, vector<4x32xf32> -> vector<4x64xf32>
    %c12 = arith.constant 12 : index
    %c0_29 = arith.constant 0 : index
    %177 = vector.load %arg17[%c12, %c0_29] : memref<32x64xf32, #tpu.memory_space<vmem>>, vector<4x32xf32>
    tpu.vector_store %arg17[%c12, %c0_29], %172 {strides = array<i32>} : memref<32x64xf32, #tpu.memory_space<vmem>>, vector<4x32xf32>,
    %c16 = arith.constant 16 : index
    %c32_30 = arith.constant 32 : index
    %178 = vector.load %arg17[%c16, %c32_30] : memref<32x64xf32, #tpu.memory_space<vmem>>, vector<4x32xf32>
    tpu.vector_store %arg17[%c16, %c32_30], %175 {strides = array<i32>} : memref<32x64xf32, #tpu.memory_space<vmem>>, vector<4x32xf32>,
    %cst_31 = arith.constant dense<0.000000e+00> : vector<4x256xf32>
    %179 = tpu.matmul %176, %7, %cst_31 {dimension_numbers = #tpu.dot_dimension_numbers<[1], [0], [0], [1], [0, 0, 1, 1], [], []>} : vector<4x64xf32>, vector<64x256xf32>, vector<4x256xf32> -> vector<4x256xf32>
    %180 = vector.extract_strided_slice %6 {offsets = [16, 0], sizes = [4, 128], strides = [1, 1]} : vector<32x256xf32> to vector<4x128xf32>
    %181 = vector.extract_strided_slice %179 {offsets = [0, 0], sizes = [4, 128], strides = [1, 1]} : vector<4x256xf32> to vector<4x128xf32>
    %182 = arith.addf %180, %181 : vector<4x128xf32>
    %183 = vector.extract_strided_slice %6 {offsets = [12, 128], sizes = [4, 128], strides = [1, 1]} : vector<32x256xf32> to vector<4x128xf32>
    %184 = vector.extract_strided_slice %179 {offsets = [0, 128], sizes = [4, 128], strides = [1, 1]} : vector<4x256xf32> to vector<4x128xf32>
    %185 = arith.addf %183, %184 : vector<4x128xf32>
    %186 = vector.extract_strided_slice %182 {offsets = [0, 0], sizes = [4, 96], strides = [1, 1]} : vector<4x128xf32> to vector<4x96xf32>
    %187 = arith.negf %186 : vector<4x96xf32>
    %188 = math.exp %187 : vector<4x96xf32>
    %cst_32 = arith.constant 1.000000e+00 : f32
    %189 = vector.broadcast %cst_32 : f32 to vector<4x96xf32>
    %190 = arith.addf %189, %188 : vector<4x96xf32>
    %191 = arith.divf %189, %190 : vector<4x96xf32>
    %192 = vector.extract_strided_slice %185 {offsets = [0, 0], sizes = [4, 96], strides = [1, 1]} : vector<4x128xf32> to vector<4x96xf32>
    %193 = arith.negf %192 : vector<4x96xf32>
    %194 = math.exp %193 : vector<4x96xf32>
    %cst_33 = arith.constant 1.000000e+00 : f32
    %195 = vector.broadcast %cst_33 : f32 to vector<4x96xf32>
    %196 = arith.addf %195, %194 : vector<4x96xf32>
    %197 = arith.divf %195, %196 : vector<4x96xf32>
    %198 = vector.extract_strided_slice %182 {offsets = [0, 96], sizes = [4, 32], strides = [1, 1]} : vector<4x128xf32> to vector<4x32xf32>
    %199 = math.tanh %198 : vector<4x32xf32>
    %200 = vector.extract_strided_slice %185 {offsets = [0, 96], sizes = [4, 32], strides = [1, 1]} : vector<4x128xf32> to vector<4x32xf32>
    %201 = math.tanh %200 : vector<4x32xf32>
    %202 = vector.extract_strided_slice %191 {offsets = [0, 32], sizes = [4, 32], strides = [1, 1]} : vector<4x96xf32> to vector<4x32xf32>
    %203 = arith.mulf %202, %164 : vector<4x32xf32>
    %204 = vector.extract_strided_slice %191 {offsets = [0, 0], sizes = [4, 32], strides = [1, 1]} : vector<4x96xf32> to vector<4x32xf32>
    %205 = arith.mulf %204, %199 : vector<4x32xf32>
    %206 = arith.addf %203, %205 : vector<4x32xf32>
    %207 = vector.extract_strided_slice %197 {offsets = [0, 32], sizes = [4, 32], strides = [1, 1]} : vector<4x96xf32> to vector<4x32xf32>
    %208 = arith.mulf %207, %169 : vector<4x32xf32>
    %209 = vector.extract_strided_slice %197 {offsets = [0, 0], sizes = [4, 32], strides = [1, 1]} : vector<4x96xf32> to vector<4x32xf32>
    %210 = arith.mulf %209, %201 : vector<4x32xf32>
    %211 = arith.addf %208, %210 : vector<4x32xf32>
    %212 = vector.extract_strided_slice %191 {offsets = [0, 64], sizes = [4, 32], strides = [1, 1]} : vector<4x96xf32> to vector<4x32xf32>
    %213 = math.tanh %206 : vector<4x32xf32>
    %214 = arith.mulf %212, %213 : vector<4x32xf32>
    %215 = vector.extract_strided_slice %197 {offsets = [0, 64], sizes = [4, 32], strides = [1, 1]} : vector<4x96xf32> to vector<4x32xf32>
    %216 = math.tanh %211 : vector<4x32xf32>
    %217 = arith.mulf %215, %216 : vector<4x32xf32>
    %218 = tpu.concatenate %214, %217 in 1 : vector<4x32xf32>, vector<4x32xf32> -> vector<4x64xf32>
    %c16_34 = arith.constant 16 : index
    %c0_35 = arith.constant 0 : index
    %219 = vector.load %arg17[%c16_34, %c0_35] : memref<32x64xf32, #tpu.memory_space<vmem>>, vector<4x32xf32>
    tpu.vector_store %arg17[%c16_34, %c0_35], %214 {strides = array<i32>} : memref<32x64xf32, #tpu.memory_space<vmem>>, vector<4x32xf32>,
    %c12_36 = arith.constant 12 : index
    %c32_37 = arith.constant 32 : index
    %220 = vector.load %arg17[%c12_36, %c32_37] : memref<32x64xf32, #tpu.memory_space<vmem>>, vector<4x32xf32>
    tpu.vector_store %arg17[%c12_36, %c32_37], %217 {strides = array<i32>} : memref<32x64xf32, #tpu.memory_space<vmem>>, vector<4x32xf32>,
    %cst_38 = arith.constant dense<0.000000e+00> : vector<4x256xf32>
    %221 = tpu.matmul %218, %7, %cst_38 {dimension_numbers = #tpu.dot_dimension_numbers<[1], [0], [0], [1], [0, 0, 1, 1], [], []>} : vector<4x64xf32>, vector<64x256xf32>, vector<4x256xf32> -> vector<4x256xf32>
    %222 = vector.extract_strided_slice %6 {offsets = [20, 0], sizes = [4, 128], strides = [1, 1]} : vector<32x256xf32> to vector<4x128xf32>
    %223 = vector.extract_strided_slice %221 {offsets = [0, 0], sizes = [4, 128], strides = [1, 1]} : vector<4x256xf32> to vector<4x128xf32>
    %224 = arith.addf %222, %223 : vector<4x128xf32>
    %225 = vector.extract_strided_slice %6 {offsets = [8, 128], sizes = [4, 128], strides = [1, 1]} : vector<32x256xf32> to vector<4x128xf32>
    %226 = vector.extract_strided_slice %221 {offsets = [0, 128], sizes = [4, 128], strides = [1, 1]} : vector<4x256xf32> to vector<4x128xf32>
    %227 = arith.addf %225, %226 : vector<4x128xf32>
    %228 = vector.extract_strided_slice %224 {offsets = [0, 0], sizes = [4, 96], strides = [1, 1]} : vector<4x128xf32> to vector<4x96xf32>
    %229 = arith.negf %228 : vector<4x96xf32>
    %230 = math.exp %229 : vector<4x96xf32>
    %cst_39 = arith.constant 1.000000e+00 : f32
    %231 = vector.broadcast %cst_39 : f32 to vector<4x96xf32>
    %232 = arith.addf %231, %230 : vector<4x96xf32>
    %233 = arith.divf %231, %232 : vector<4x96xf32>
    %234 = vector.extract_strided_slice %227 {offsets = [0, 0], sizes = [4, 96], strides = [1, 1]} : vector<4x128xf32> to vector<4x96xf32>
    %235 = arith.negf %234 : vector<4x96xf32>
    %236 = math.exp %235 : vector<4x96xf32>
    %cst_40 = arith.constant 1.000000e+00 : f32
    %237 = vector.broadcast %cst_40 : f32 to vector<4x96xf32>
    %238 = arith.addf %237, %236 : vector<4x96xf32>
    %239 = arith.divf %237, %238 : vector<4x96xf32>
    %240 = vector.extract_strided_slice %224 {offsets = [0, 96], sizes = [4, 32], strides = [1, 1]} : vector<4x128xf32> to vector<4x32xf32>
    %241 = math.tanh %240 : vector<4x32xf32>
    %242 = vector.extract_strided_slice %227 {offsets = [0, 96], sizes = [4, 32], strides = [1, 1]} : vector<4x128xf32> to vector<4x32xf32>
    %243 = math.tanh %242 : vector<4x32xf32>
    %244 = vector.extract_strided_slice %233 {offsets = [0, 32], sizes = [4, 32], strides = [1, 1]} : vector<4x96xf32> to vector<4x32xf32>
    %245 = arith.mulf %244, %206 : vector<4x32xf32>
    %246 = vector.extract_strided_slice %233 {offsets = [0, 0], sizes = [4, 32], strides = [1, 1]} : vector<4x96xf32> to vector<4x32xf32>
    %247 = arith.mulf %246, %241 : vector<4x32xf32>
    %248 = arith.addf %245, %247 : vector<4x32xf32>
    %249 = vector.extract_strided_slice %239 {offsets = [0, 32], sizes = [4, 32], strides = [1, 1]} : vector<4x96xf32> to vector<4x32xf32>
    %250 = arith.mulf %249, %211 : vector<4x32xf32>
    %251 = vector.extract_strided_slice %239 {offsets = [0, 0], sizes = [4, 32], strides = [1, 1]} : vector<4x96xf32> to vector<4x32xf32>
    %252 = arith.mulf %251, %243 : vector<4x32xf32>
    %253 = arith.addf %250, %252 : vector<4x32xf32>
    %254 = vector.extract_strided_slice %233 {offsets = [0, 64], sizes = [4, 32], strides = [1, 1]} : vector<4x96xf32> to vector<4x32xf32>
    %255 = math.tanh %248 : vector<4x32xf32>
    %256 = arith.mulf %254, %255 : vector<4x32xf32>
    %257 = vector.extract_strided_slice %239 {offsets = [0, 64], sizes = [4, 32], strides = [1, 1]} : vector<4x96xf32> to vector<4x32xf32>
    %258 = math.tanh %253 : vector<4x32xf32>
    %259 = arith.mulf %257, %258 : vector<4x32xf32>
    %260 = tpu.concatenate %256, %259 in 1 : vector<4x32xf32>, vector<4x32xf32> -> vector<4x64xf32>
    %c20_41 = arith.constant 20 : index
    %c0_42 = arith.constant 0 : index
    %261 = vector.load %arg17[%c20_41, %c0_42] : memref<32x64xf32, #tpu.memory_space<vmem>>, vector<4x32xf32>
    tpu.vector_store %arg17[%c20_41, %c0_42], %256 {strides = array<i32>} : memref<32x64xf32, #tpu.memory_space<vmem>>, vector<4x32xf32>,
    %c8_43 = arith.constant 8 : index
    %c32_44 = arith.constant 32 : index
    %262 = vector.load %arg17[%c8_43, %c32_44] : memref<32x64xf32, #tpu.memory_space<vmem>>, vector<4x32xf32>
    tpu.vector_store %arg17[%c8_43, %c32_44], %259 {strides = array<i32>} : memref<32x64xf32, #tpu.memory_space<vmem>>, vector<4x32xf32>,
    %cst_45 = arith.constant dense<0.000000e+00> : vector<4x256xf32>
    %263 = tpu.matmul %260, %7, %cst_45 {dimension_numbers = #tpu.dot_dimension_numbers<[1], [0], [0], [1], [0, 0, 1, 1], [], []>} : vector<4x64xf32>, vector<64x256xf32>, vector<4x256xf32> -> vector<4x256xf32>
    %264 = vector.extract_strided_slice %6 {offsets = [24, 0], sizes = [4, 128], strides = [1, 1]} : vector<32x256xf32> to vector<4x128xf32>
    %265 = vector.extract_strided_slice %263 {offsets = [0, 0], sizes = [4, 128], strides = [1, 1]} : vector<4x256xf32> to vector<4x128xf32>
    %266 = arith.addf %264, %265 : vector<4x128xf32>
    %267 = vector.extract_strided_slice %6 {offsets = [4, 128], sizes = [4, 128], strides = [1, 1]} : vector<32x256xf32> to vector<4x128xf32>
    %268 = vector.extract_strided_slice %263 {offsets = [0, 128], sizes = [4, 128], strides = [1, 1]} : vector<4x256xf32> to vector<4x128xf32>
    %269 = arith.addf %267, %268 : vector<4x128xf32>
    %270 = vector.extract_strided_slice %266 {offsets = [0, 0], sizes = [4, 96], strides = [1, 1]} : vector<4x128xf32> to vector<4x96xf32>
    %271 = arith.negf %270 : vector<4x96xf32>
    %272 = math.exp %271 : vector<4x96xf32>
    %cst_46 = arith.constant 1.000000e+00 : f32
    %273 = vector.broadcast %cst_46 : f32 to vector<4x96xf32>
    %274 = arith.addf %273, %272 : vector<4x96xf32>
    %275 = arith.divf %273, %274 : vector<4x96xf32>
    %276 = vector.extract_strided_slice %269 {offsets = [0, 0], sizes = [4, 96], strides = [1, 1]} : vector<4x128xf32> to vector<4x96xf32>
    %277 = arith.negf %276 : vector<4x96xf32>
    %278 = math.exp %277 : vector<4x96xf32>
    %cst_47 = arith.constant 1.000000e+00 : f32
    %279 = vector.broadcast %cst_47 : f32 to vector<4x96xf32>
    %280 = arith.addf %279, %278 : vector<4x96xf32>
    %281 = arith.divf %279, %280 : vector<4x96xf32>
    %282 = vector.extract_strided_slice %266 {offsets = [0, 96], sizes = [4, 32], strides = [1, 1]} : vector<4x128xf32> to vector<4x32xf32>
    %283 = math.tanh %282 : vector<4x32xf32>
    %284 = vector.extract_strided_slice %269 {offsets = [0, 96], sizes = [4, 32], strides = [1, 1]} : vector<4x128xf32> to vector<4x32xf32>
    %285 = math.tanh %284 : vector<4x32xf32>
    %286 = vector.extract_strided_slice %275 {offsets = [0, 32], sizes = [4, 32], strides = [1, 1]} : vector<4x96xf32> to vector<4x32xf32>
    %287 = arith.mulf %286, %248 : vector<4x32xf32>
    %288 = vector.extract_strided_slice %275 {offsets = [0, 0], sizes = [4, 32], strides = [1, 1]} : vector<4x96xf32> to vector<4x32xf32>
    %289 = arith.mulf %288, %283 : vector<4x32xf32>
    %290 = arith.addf %287, %289 : vector<4x32xf32>
    %291 = vector.extract_strided_slice %281 {offsets = [0, 32], sizes = [4, 32], strides = [1, 1]} : vector<4x96xf32> to vector<4x32xf32>
    %292 = arith.mulf %291, %253 : vector<4x32xf32>
    %293 = vector.extract_strided_slice %281 {offsets = [0, 0], sizes = [4, 32], strides = [1, 1]} : vector<4x96xf32> to vector<4x32xf32>
    %294 = arith.mulf %293, %285 : vector<4x32xf32>
    %295 = arith.addf %292, %294 : vector<4x32xf32>
    %296 = vector.extract_strided_slice %275 {offsets = [0, 64], sizes = [4, 32], strides = [1, 1]} : vector<4x96xf32> to vector<4x32xf32>
    %297 = math.tanh %290 : vector<4x32xf32>
    %298 = arith.mulf %296, %297 : vector<4x32xf32>
    %299 = vector.extract_strided_slice %281 {offsets = [0, 64], sizes = [4, 32], strides = [1, 1]} : vector<4x96xf32> to vector<4x32xf32>
    %300 = math.tanh %295 : vector<4x32xf32>
    %301 = arith.mulf %299, %300 : vector<4x32xf32>
    %302 = tpu.concatenate %298, %301 in 1 : vector<4x32xf32>, vector<4x32xf32> -> vector<4x64xf32>
    %c24_48 = arith.constant 24 : index
    %c0_49 = arith.constant 0 : index
    %303 = vector.load %arg17[%c24_48, %c0_49] : memref<32x64xf32, #tpu.memory_space<vmem>>, vector<4x32xf32>
    tpu.vector_store %arg17[%c24_48, %c0_49], %298 {strides = array<i32>} : memref<32x64xf32, #tpu.memory_space<vmem>>, vector<4x32xf32>,
    %c4_50 = arith.constant 4 : index
    %c32_51 = arith.constant 32 : index
    %304 = vector.load %arg17[%c4_50, %c32_51] : memref<32x64xf32, #tpu.memory_space<vmem>>, vector<4x32xf32>
    tpu.vector_store %arg17[%c4_50, %c32_51], %301 {strides = array<i32>} : memref<32x64xf32, #tpu.memory_space<vmem>>, vector<4x32xf32>,
    %cst_52 = arith.constant dense<0.000000e+00> : vector<4x256xf32>
    %305 = tpu.matmul %302, %7, %cst_52 {dimension_numbers = #tpu.dot_dimension_numbers<[1], [0], [0], [1], [0, 0, 1, 1], [], []>} : vector<4x64xf32>, vector<64x256xf32>, vector<4x256xf32> -> vector<4x256xf32>
    %306 = vector.extract_strided_slice %6 {offsets = [28, 0], sizes = [4, 128], strides = [1, 1]} : vector<32x256xf32> to vector<4x128xf32>
    %307 = vector.extract_strided_slice %305 {offsets = [0, 0], sizes = [4, 128], strides = [1, 1]} : vector<4x256xf32> to vector<4x128xf32>
    %308 = arith.addf %306, %307 : vector<4x128xf32>
    %309 = vector.extract_strided_slice %6 {offsets = [0, 128], sizes = [4, 128], strides = [1, 1]} : vector<32x256xf32> to vector<4x128xf32>
    %310 = vector.extract_strided_slice %305 {offsets = [0, 128], sizes = [4, 128], strides = [1, 1]} : vector<4x256xf32> to vector<4x128xf32>
    %311 = arith.addf %309, %310 : vector<4x128xf32>
    %312 = vector.extract_strided_slice %308 {offsets = [0, 0], sizes = [4, 96], strides = [1, 1]} : vector<4x128xf32> to vector<4x96xf32>
    %313 = arith.negf %312 : vector<4x96xf32>
    %314 = math.exp %313 : vector<4x96xf32>
    %cst_53 = arith.constant 1.000000e+00 : f32
    %315 = vector.broadcast %cst_53 : f32 to vector<4x96xf32>
    %316 = arith.addf %315, %314 : vector<4x96xf32>
    %317 = arith.divf %315, %316 : vector<4x96xf32>
    %318 = vector.extract_strided_slice %311 {offsets = [0, 0], sizes = [4, 96], strides = [1, 1]} : vector<4x128xf32> to vector<4x96xf32>
    %319 = arith.negf %318 : vector<4x96xf32>
    %320 = math.exp %319 : vector<4x96xf32>
    %cst_54 = arith.constant 1.000000e+00 : f32
    %321 = vector.broadcast %cst_54 : f32 to vector<4x96xf32>
    %322 = arith.addf %321, %320 : vector<4x96xf32>
    %323 = arith.divf %321, %322 : vector<4x96xf32>
    %324 = vector.extract_strided_slice %308 {offsets = [0, 96], sizes = [4, 32], strides = [1, 1]} : vector<4x128xf32> to vector<4x32xf32>
    %325 = math.tanh %324 : vector<4x32xf32>
    %326 = vector.extract_strided_slice %311 {offsets = [0, 96], sizes = [4, 32], strides = [1, 1]} : vector<4x128xf32> to vector<4x32xf32>
    %327 = math.tanh %326 : vector<4x32xf32>
    %328 = vector.extract_strided_slice %317 {offsets = [0, 32], sizes = [4, 32], strides = [1, 1]} : vector<4x96xf32> to vector<4x32xf32>
    %329 = arith.mulf %328, %290 : vector<4x32xf32>
    %330 = vector.extract_strided_slice %317 {offsets = [0, 0], sizes = [4, 32], strides = [1, 1]} : vector<4x96xf32> to vector<4x32xf32>
    %331 = arith.mulf %330, %325 : vector<4x32xf32>
    %332 = arith.addf %329, %331 : vector<4x32xf32>
    %333 = vector.extract_strided_slice %323 {offsets = [0, 32], sizes = [4, 32], strides = [1, 1]} : vector<4x96xf32> to vector<4x32xf32>
    %334 = arith.mulf %333, %295 : vector<4x32xf32>
    %335 = vector.extract_strided_slice %323 {offsets = [0, 0], sizes = [4, 32], strides = [1, 1]} : vector<4x96xf32> to vector<4x32xf32>
    %336 = arith.mulf %335, %327 : vector<4x32xf32>
    %337 = arith.addf %334, %336 : vector<4x32xf32>
    %338 = vector.extract_strided_slice %317 {offsets = [0, 64], sizes = [4, 32], strides = [1, 1]} : vector<4x96xf32> to vector<4x32xf32>
    %339 = math.tanh %332 : vector<4x32xf32>
    %340 = arith.mulf %338, %339 : vector<4x32xf32>
    %341 = vector.extract_strided_slice %323 {offsets = [0, 64], sizes = [4, 32], strides = [1, 1]} : vector<4x96xf32> to vector<4x32xf32>
    %342 = math.tanh %337 : vector<4x32xf32>
    %343 = arith.mulf %341, %342 : vector<4x32xf32>
    %c28_55 = arith.constant 28 : index
    %c0_56 = arith.constant 0 : index
    %344 = vector.load %arg17[%c28_55, %c0_56] : memref<32x64xf32, #tpu.memory_space<vmem>>, vector<4x32xf32>
    tpu.vector_store %arg17[%c28_55, %c0_56], %340 {strides = array<i32>} : memref<32x64xf32, #tpu.memory_space<vmem>>, vector<4x32xf32>,
    %c0_57 = arith.constant 0 : index
    %c32_58 = arith.constant 32 : index
    %345 = vector.load %arg17[%c0_57, %c32_58] : memref<32x64xf32, #tpu.memory_space<vmem>>, vector<4x32xf32>
    tpu.vector_store %arg17[%c0_57, %c32_58], %343 {strides = array<i32>} : memref<32x64xf32, #tpu.memory_space<vmem>>, vector<4x32xf32>,
    %c0_59 = arith.constant 0 : index
    %c0_60 = arith.constant 0 : index
    %346 = vector.load %arg17[%c0_59, %c0_60] : memref<32x64xf32, #tpu.memory_space<vmem>>, vector<32x64xf32>
    %cst_61 = arith.constant dense<0.000000e+00> : vector<32xf32>
    %347 = vector.multi_reduction <add>, %346, %cst_61 [1] : vector<32x64xf32> to vector<32xf32>
    %348 = vector.shape_cast %347 : vector<32xf32> to vector<32x1xf32>
    %cst_62 = arith.constant 6.400000e+01 : f32
    %349 = vector.broadcast %cst_62 : f32 to vector<32x1xf32>
    %350 = arith.divf %348, %349 : vector<32x1xf32>
    %351 = vector.broadcast %350 : vector<32x1xf32> to vector<32x64xf32>
    %352 = arith.subf %346, %351 : vector<32x64xf32>
    %353 = arith.mulf %352, %352 : vector<32x64xf32>
    %cst_63 = arith.constant dense<0.000000e+00> : vector<32xf32>
    %354 = vector.multi_reduction <add>, %353, %cst_63 [1] : vector<32x64xf32> to vector<32xf32>
    %355 = vector.shape_cast %354 : vector<32xf32> to vector<32x1xf32>
    %cst_64 = arith.constant 6.400000e+01 : f32
    %356 = vector.broadcast %cst_64 : f32 to vector<32x1xf32>
    %357 = arith.divf %355, %356 : vector<32x1xf32>
    %cst_65 = arith.constant 9.99999974E-6 : f32
    %358 = vector.broadcast %cst_65 : f32 to vector<32x1xf32>
    %359 = arith.addf %357, %358 : vector<32x1xf32>
    %360 = math.rsqrt %359 : vector<32x1xf32>
    %361 = vector.broadcast %360 : vector<32x1xf32> to vector<32x64xf32>
    %362 = arith.mulf %352, %361 : vector<32x64xf32>
    %c0_66 = arith.constant 0 : index
    %c0_67 = arith.constant 0 : index
    %363 = vector.load %arg6[%c0_66, %c0_67] : memref<1x64xf32, #tpu.memory_space<vmem>>, vector<1x64xf32>
    %364 = vector.broadcast %363 : vector<1x64xf32> to vector<32x64xf32>
    %365 = arith.mulf %362, %364 : vector<32x64xf32>
    %c0_68 = arith.constant 0 : index
    %c0_69 = arith.constant 0 : index
    %366 = vector.load %arg7[%c0_68, %c0_69] : memref<1x64xf32, #tpu.memory_space<vmem>>, vector<1x64xf32>
    %367 = vector.broadcast %366 : vector<1x64xf32> to vector<32x64xf32>
    %368 = arith.addf %365, %367 : vector<32x64xf32>
    %c0_70 = arith.constant 0 : index
    %c0_71 = arith.constant 0 : index
    %369 = vector.load %arg8[%c0_70, %c0_71] : memref<64x192xf32, #tpu.memory_space<vmem>>, vector<64x192xf32>
    %cst_72 = arith.constant dense<0.000000e+00> : vector<32x192xf32>
    %370 = tpu.matmul %368, %369, %cst_72 {dimension_numbers = #tpu.dot_dimension_numbers<[1], [0], [0], [1], [0, 0, 1, 1], [], []>} : vector<32x64xf32>, vector<64x192xf32>, vector<32x192xf32> -> vector<32x192xf32>
    %c0_73 = arith.constant 0 : index
    %c0_74 = arith.constant 0 : index
    %371 = vector.load %arg9[%c0_73, %c0_74] : memref<1x192xf32, #tpu.memory_space<vmem>>, vector<1x192xf32>
    %372 = vector.broadcast %371 : vector<1x192xf32> to vector<32x192xf32>
    %373 = arith.addf %370, %372 : vector<32x192xf32>
    %374 = arith.index_cast %arg0 : i32 to index
    %c0_75 = arith.constant 0 : index
    %c0_76 = arith.constant 0 : index
    %375 = vector.load %arg2[%374, %c0_75, %c0_76] : memref<2x32x32xf32, #tpu.memory_space<vmem>>, vector<1x32x32xf32>
    %376 = vector.shape_cast %375 : vector<1x32x32xf32> to vector<32x32xf32>
    %377 = vector.extract_strided_slice %373 {offsets = [0, 0], sizes = [32, 16], strides = [1, 1]} : vector<32x192xf32> to vector<32x16xf32>
    %cst_77 = arith.constant 2.500000e-01 : f32
    %378 = vector.broadcast %cst_77 : f32 to vector<32x16xf32>
    %379 = arith.mulf %377, %378 : vector<32x16xf32>
    %380 = vector.extract_strided_slice %373 {offsets = [0, 64], sizes = [32, 16], strides = [1, 1]} : vector<32x192xf32> to vector<32x16xf32>
    "tpu.trace_start"() <{level = 10 : i32, message = "qd,kd->qk"}> : () -> ()
    %cst_78 = arith.constant dense<0.000000e+00> : vector<32x32xf32>
    %381 = tpu.matmul %379, %380, %cst_78 {dimension_numbers = #tpu.dot_dimension_numbers<[1], [1], [0], [0], [0, 0, 1, 0], [], []>} : vector<32x16xf32>, vector<32x16xf32>, vector<32x32xf32> -> vector<32x32xf32>
    "tpu.trace_stop"() : () -> ()
    %382 = arith.addf %381, %376 : vector<32x32xf32>
    %383 = vector.extract_strided_slice %373 {offsets = [0, 16], sizes = [32, 16], strides = [1, 1]} : vector<32x192xf32> to vector<32x16xf32>
    %cst_79 = arith.constant 2.500000e-01 : f32
    %384 = vector.broadcast %cst_79 : f32 to vector<32x16xf32>
    %385 = arith.mulf %383, %384 : vector<32x16xf32>
    %386 = vector.extract_strided_slice %373 {offsets = [0, 80], sizes = [32, 16], strides = [1, 1]} : vector<32x192xf32> to vector<32x16xf32>
    "tpu.trace_start"() <{level = 10 : i32, message = "qd,kd->qk"}> : () -> ()
    %cst_80 = arith.constant dense<0.000000e+00> : vector<32x32xf32>
    %387 = tpu.matmul %385, %386, %cst_80 {dimension_numbers = #tpu.dot_dimension_numbers<[1], [1], [0], [0], [0, 0, 1, 0], [], []>} : vector<32x16xf32>, vector<32x16xf32>, vector<32x32xf32> -> vector<32x32xf32>
    "tpu.trace_stop"() : () -> ()
    %388 = arith.addf %387, %376 : vector<32x32xf32>
    %389 = vector.extract_strided_slice %373 {offsets = [0, 32], sizes = [32, 16], strides = [1, 1]} : vector<32x192xf32> to vector<32x16xf32>
    %cst_81 = arith.constant 2.500000e-01 : f32
    %390 = vector.broadcast %cst_81 : f32 to vector<32x16xf32>
    %391 = arith.mulf %389, %390 : vector<32x16xf32>
    %392 = vector.extract_strided_slice %373 {offsets = [0, 96], sizes = [32, 16], strides = [1, 1]} : vector<32x192xf32> to vector<32x16xf32>
    "tpu.trace_start"() <{level = 10 : i32, message = "qd,kd->qk"}> : () -> ()
    %cst_82 = arith.constant dense<0.000000e+00> : vector<32x32xf32>
    %393 = tpu.matmul %391, %392, %cst_82 {dimension_numbers = #tpu.dot_dimension_numbers<[1], [1], [0], [0], [0, 0, 1, 0], [], []>} : vector<32x16xf32>, vector<32x16xf32>, vector<32x32xf32> -> vector<32x32xf32>
    "tpu.trace_stop"() : () -> ()
    %394 = arith.addf %393, %376 : vector<32x32xf32>
    %395 = vector.extract_strided_slice %373 {offsets = [0, 48], sizes = [32, 16], strides = [1, 1]} : vector<32x192xf32> to vector<32x16xf32>
    %cst_83 = arith.constant 2.500000e-01 : f32
    %396 = vector.broadcast %cst_83 : f32 to vector<32x16xf32>
    %397 = arith.mulf %395, %396 : vector<32x16xf32>
    %398 = vector.extract_strided_slice %373 {offsets = [0, 112], sizes = [32, 16], strides = [1, 1]} : vector<32x192xf32> to vector<32x16xf32>
    "tpu.trace_start"() <{level = 10 : i32, message = "qd,kd->qk"}> : () -> ()
    %cst_84 = arith.constant dense<0.000000e+00> : vector<32x32xf32>
    %399 = tpu.matmul %397, %398, %cst_84 {dimension_numbers = #tpu.dot_dimension_numbers<[1], [1], [0], [0], [0, 0, 1, 0], [], []>} : vector<32x16xf32>, vector<32x16xf32>, vector<32x32xf32> -> vector<32x32xf32>
    "tpu.trace_stop"() : () -> ()
    %400 = arith.addf %399, %376 : vector<32x32xf32>
    %401 = tpu.concatenate %382, %388, %394, %400 in 0 : vector<32x32xf32>, vector<32x32xf32>, vector<32x32xf32>, vector<32x32xf32> -> vector<128x32xf32>
    %cst_85 = arith.constant dense<0xFF800000> : vector<128xf32>
    %402 = vector.multi_reduction <maximumf>, %401, %cst_85 [1] : vector<128x32xf32> to vector<128xf32>
    %403 = vector.shape_cast %402 : vector<128xf32> to vector<128x1xf32>
    %404 = vector.broadcast %403 : vector<128x1xf32> to vector<128x32xf32>
    %405 = arith.subf %401, %404 : vector<128x32xf32>
    %406 = math.exp %405 : vector<128x32xf32>
    %cst_86 = arith.constant dense<0.000000e+00> : vector<128xf32>
    %407 = vector.multi_reduction <add>, %406, %cst_86 [1] : vector<128x32xf32> to vector<128xf32>
    %408 = vector.shape_cast %407 : vector<128xf32> to vector<128x1xf32>
    %409 = vector.broadcast %408 : vector<128x1xf32> to vector<128x32xf32>
    %410 = arith.divf %406, %409 : vector<128x32xf32>
    %411 = vector.extract_strided_slice %373 {offsets = [0, 128], sizes = [32, 16], strides = [1, 1]} : vector<32x192xf32> to vector<32x16xf32>
    %412 = vector.extract_strided_slice %410 {offsets = [0, 0], sizes = [32, 32], strides = [1, 1]} : vector<128x32xf32> to vector<32x32xf32>
    %cst_87 = arith.constant dense<0.000000e+00> : vector<32x16xf32>
    %413 = tpu.matmul %412, %411, %cst_87 {dimension_numbers = #tpu.dot_dimension_numbers<[1], [0], [0], [1], [0, 0, 1, 1], [], []>} : vector<32x32xf32>, vector<32x16xf32>, vector<32x16xf32> -> vector<32x16xf32>
    %414 = vector.extract_strided_slice %373 {offsets = [0, 144], sizes = [32, 16], strides = [1, 1]} : vector<32x192xf32> to vector<32x16xf32>
    %415 = vector.extract_strided_slice %410 {offsets = [32, 0], sizes = [32, 32], strides = [1, 1]} : vector<128x32xf32> to vector<32x32xf32>
    %cst_88 = arith.constant dense<0.000000e+00> : vector<32x16xf32>
    %416 = tpu.matmul %415, %414, %cst_88 {dimension_numbers = #tpu.dot_dimension_numbers<[1], [0], [0], [1], [0, 0, 1, 1], [], []>} : vector<32x32xf32>, vector<32x16xf32>, vector<32x16xf32> -> vector<32x16xf32>
    %417 = vector.extract_strided_slice %373 {offsets = [0, 160], sizes = [32, 16], strides = [1, 1]} : vector<32x192xf32> to vector<32x16xf32>
    %418 = vector.extract_strided_slice %410 {offsets = [64, 0], sizes = [32, 32], strides = [1, 1]} : vector<128x32xf32> to vector<32x32xf32>
    %cst_89 = arith.constant dense<0.000000e+00> : vector<32x16xf32>
    %419 = tpu.matmul %418, %417, %cst_89 {dimension_numbers = #tpu.dot_dimension_numbers<[1], [0], [0], [1], [0, 0, 1, 1], [], []>} : vector<32x32xf32>, vector<32x16xf32>, vector<32x16xf32> -> vector<32x16xf32>
    %420 = vector.extract_strided_slice %373 {offsets = [0, 176], sizes = [32, 16], strides = [1, 1]} : vector<32x192xf32> to vector<32x16xf32>
    %421 = vector.extract_strided_slice %410 {offsets = [96, 0], sizes = [32, 32], strides = [1, 1]} : vector<128x32xf32> to vector<32x32xf32>
    %cst_90 = arith.constant dense<0.000000e+00> : vector<32x16xf32>
    %422 = tpu.matmul %421, %420, %cst_90 {dimension_numbers = #tpu.dot_dimension_numbers<[1], [0], [0], [1], [0, 0, 1, 1], [], []>} : vector<32x32xf32>, vector<32x16xf32>, vector<32x16xf32> -> vector<32x16xf32>
    %423 = tpu.concatenate %413, %416, %419, %422 in 1 : vector<32x16xf32>, vector<32x16xf32>, vector<32x16xf32>, vector<32x16xf32> -> vector<32x64xf32>
    %c0_91 = arith.constant 0 : index
    %c0_92 = arith.constant 0 : index
    %424 = vector.load %arg10[%c0_91, %c0_92] : memref<64x64xf32, #tpu.memory_space<vmem>>, vector<64x64xf32>
    %cst_93 = arith.constant dense<0.000000e+00> : vector<32x64xf32>
    %425 = tpu.matmul %423, %424, %cst_93 {dimension_numbers = #tpu.dot_dimension_numbers<[1], [0], [0], [1], [0, 0, 1, 1], [], []>} : vector<32x64xf32>, vector<64x64xf32>, vector<32x64xf32> -> vector<32x64xf32>
    %c0_94 = arith.constant 0 : index
    %c0_95 = arith.constant 0 : index
    %426 = vector.load %arg11[%c0_94, %c0_95] : memref<1x64xf32, #tpu.memory_space<vmem>>, vector<1x64xf32>
    %427 = vector.broadcast %426 : vector<1x64xf32> to vector<32x64xf32>
    %428 = arith.addf %425, %427 : vector<32x64xf32>
    %429 = arith.addf %368, %428 : vector<32x64xf32>
    %cst_96 = arith.constant dense<0.000000e+00> : vector<32xf32>
    %430 = vector.multi_reduction <add>, %429, %cst_96 [1] : vector<32x64xf32> to vector<32xf32>
    %431 = vector.shape_cast %430 : vector<32xf32> to vector<32x1xf32>
    %cst_97 = arith.constant 6.400000e+01 : f32
    %432 = vector.broadcast %cst_97 : f32 to vector<32x1xf32>
    %433 = arith.divf %431, %432 : vector<32x1xf32>
    %434 = vector.broadcast %433 : vector<32x1xf32> to vector<32x64xf32>
    %435 = arith.subf %429, %434 : vector<32x64xf32>
    %436 = arith.mulf %435, %435 : vector<32x64xf32>
    %cst_98 = arith.constant dense<0.000000e+00> : vector<32xf32>
    %437 = vector.multi_reduction <add>, %436, %cst_98 [1] : vector<32x64xf32> to vector<32xf32>
    %438 = vector.shape_cast %437 : vector<32xf32> to vector<32x1xf32>
    %cst_99 = arith.constant 6.400000e+01 : f32
    %439 = vector.broadcast %cst_99 : f32 to vector<32x1xf32>
    %440 = arith.divf %438, %439 : vector<32x1xf32>
    %cst_100 = arith.constant 9.99999974E-6 : f32
    %441 = vector.broadcast %cst_100 : f32 to vector<32x1xf32>
    %442 = arith.addf %440, %441 : vector<32x1xf32>
    %443 = math.rsqrt %442 : vector<32x1xf32>
    %444 = vector.broadcast %443 : vector<32x1xf32> to vector<32x64xf32>
    %445 = arith.mulf %435, %444 : vector<32x64xf32>
    %c0_101 = arith.constant 0 : index
    %c0_102 = arith.constant 0 : index
    %446 = vector.load %arg12[%c0_101, %c0_102] : memref<1x64xf32, #tpu.memory_space<vmem>>, vector<1x64xf32>
    %447 = vector.broadcast %446 : vector<1x64xf32> to vector<32x64xf32>
    %448 = arith.mulf %445, %447 : vector<32x64xf32>
    %c0_103 = arith.constant 0 : index
    %c0_104 = arith.constant 0 : index
    %449 = vector.load %arg13[%c0_103, %c0_104] : memref<1x64xf32, #tpu.memory_space<vmem>>, vector<1x64xf32>
    %450 = vector.broadcast %449 : vector<1x64xf32> to vector<32x64xf32>
    %451 = arith.addf %448, %450 : vector<32x64xf32>
    %c0_105 = arith.constant 0 : index
    %c0_106 = arith.constant 0 : index
    %452 = vector.load %arg14[%c0_105, %c0_106] : memref<64x128xf32, #tpu.memory_space<vmem>>, vector<64x128xf32>
    %cst_107 = arith.constant dense<0.000000e+00> : vector<32x128xf32>
    %453 = tpu.matmul %451, %452, %cst_107 {dimension_numbers = #tpu.dot_dimension_numbers<[1], [0], [0], [1], [0, 0, 1, 1], [], []>} : vector<32x64xf32>, vector<64x128xf32>, vector<32x128xf32> -> vector<32x128xf32>
    %c0_108 = arith.constant 0 : index
    %c0_109 = arith.constant 0 : index
    %454 = vector.load %arg15[%c0_108, %c0_109] : memref<1x128xf32, #tpu.memory_space<vmem>>, vector<1x128xf32>
    %455 = vector.broadcast %454 : vector<1x128xf32> to vector<32x128xf32>
    %456 = arith.addf %453, %455 : vector<32x128xf32>
    %c0_110 = arith.constant 0 : index
    %c0_111 = arith.constant 0 : index
    %c0_112 = arith.constant 0 : index
    %457 = vector.load %arg16[%c0_110, %c0_111, %c0_112] : memref<1x32x128xf32, #tpu.memory_space<vmem>>, vector<1x32x128xf32>
    %458 = vector.shape_cast %457 : vector<1x32x128xf32> to vector<32x128xf32>
    %459 = vector.shape_cast %456 : vector<32x128xf32> to vector<1x32x128xf32>
    tpu.vector_store %arg16[%c0_110, %c0_111, %c0_112], %459 {strides = array<i32>} : memref<1x32x128xf32, #tpu.memory_space<vmem>>, vector<1x32x128xf32>,
    return
  }
  func.func @transform_0(%arg0: i32) -> (i32, i32, i32) {
    %c0_i32 = arith.constant 0 : i32
    %c0_i32_0 = arith.constant 0 : i32
    %c0_i32_1 = arith.constant 0 : i32
    return %arg0, %c0_i32, %c0_i32_0 : i32, i32, i32
  }
  func.func @transform_1(%arg0: i32) -> (i32, i32, i32) {
    %c0_i32 = arith.constant 0 : i32
    %c0_i32_0 = arith.constant 0 : i32
    %c0_i32_1 = arith.constant 0 : i32
    %c0_i32_2 = arith.constant 0 : i32
    return %c0_i32, %c0_i32_0, %c0_i32_1 : i32, i32, i32
  }
  func.func @transform_2(%arg0: i32) -> (i32, i32) {
    %c0_i32 = arith.constant 0 : i32
    %c0_i32_0 = arith.constant 0 : i32
    %c0_i32_1 = arith.constant 0 : i32
    return %c0_i32, %c0_i32_0 : i32, i32
  }
  func.func @transform_3(%arg0: i32) -> (i32, i32) {
    %c0_i32 = arith.constant 0 : i32
    %c0_i32_0 = arith.constant 0 : i32
    %c0_i32_1 = arith.constant 0 : i32
    return %c0_i32, %c0_i32_0 : i32, i32
  }
  func.func @transform_4(%arg0: i32) -> (i32, i32) {
    %c0_i32 = arith.constant 0 : i32
    %c0_i32_0 = arith.constant 0 : i32
    %c0_i32_1 = arith.constant 0 : i32
    return %c0_i32, %c0_i32_0 : i32, i32
  }
  func.func @transform_5(%arg0: i32) -> (i32, i32) {
    %c0_i32 = arith.constant 0 : i32
    %c0_i32_0 = arith.constant 0 : i32
    %c0_i32_1 = arith.constant 0 : i32
    return %c0_i32, %c0_i32_0 : i32, i32
  }
  func.func @transform_6(%arg0: i32) -> (i32, i32) {
    %c0_i32 = arith.constant 0 : i32
    %c0_i32_0 = arith.constant 0 : i32
    %c0_i32_1 = arith.constant 0 : i32
    return %c0_i32, %c0_i32_0 : i32, i32
  }
  func.func @transform_7(%arg0: i32) -> (i32, i32) {
    %c0_i32 = arith.constant 0 : i32
    %c0_i32_0 = arith.constant 0 : i32
    %c0_i32_1 = arith.constant 0 : i32
    return %c0_i32, %c0_i32_0 : i32, i32
  }
  func.func @transform_8(%arg0: i32) -> (i32, i32) {
    %c0_i32 = arith.constant 0 : i32
    %c0_i32_0 = arith.constant 0 : i32
    %c0_i32_1 = arith.constant 0 : i32
    return %c0_i32, %c0_i32_0 : i32, i32
  }
  func.func @transform_9(%arg0: i32) -> (i32, i32) {
    %c0_i32 = arith.constant 0 : i32
    %c0_i32_0 = arith.constant 0 : i32
    %c0_i32_1 = arith.constant 0 : i32
    return %c0_i32, %c0_i32_0 : i32, i32
  }
  func.func @transform_10(%arg0: i32) -> (i32, i32) {
    %c0_i32 = arith.constant 0 : i32
    %c0_i32_0 = arith.constant 0 : i32
    %c0_i32_1 = arith.constant 0 : i32
    return %c0_i32, %c0_i32_0 : i32, i32
  }
  func.func @transform_11(%arg0: i32) -> (i32, i32) {
    %c0_i32 = arith.constant 0 : i32
    %c0_i32_0 = arith.constant 0 : i32
    %c0_i32_1 = arith.constant 0 : i32
    return %c0_i32, %c0_i32_0 : i32, i32
  }
  func.func @transform_12(%arg0: i32) -> (i32, i32) {
    %c0_i32 = arith.constant 0 : i32
    %c0_i32_0 = arith.constant 0 : i32
    %c0_i32_1 = arith.constant 0 : i32
    return %c0_i32, %c0_i32_0 : i32, i32
  }
  func.func @transform_13(%arg0: i32) -> (i32, i32) {
    %c0_i32 = arith.constant 0 : i32
    %c0_i32_0 = arith.constant 0 : i32
    %c0_i32_1 = arith.constant 0 : i32
    return %c0_i32, %c0_i32_0 : i32, i32
  }
  func.func @transform_14(%arg0: i32) -> (i32, i32) {
    %c0_i32 = arith.constant 0 : i32
    %c0_i32_0 = arith.constant 0 : i32
    %c0_i32_1 = arith.constant 0 : i32
    return %c0_i32, %c0_i32_0 : i32, i32
  }
  func.func @transform_15(%arg0: i32) -> (i32, i32, i32) {
    %c0_i32 = arith.constant 0 : i32
    %c0_i32_0 = arith.constant 0 : i32
    %c0_i32_1 = arith.constant 0 : i32
    return %arg0, %c0_i32, %c0_i32_0 : i32, i32, i32
  }
}

</mosaic_0001>

<llo_original>
// kernel: forward.1
$region0: #{forward.1}
  #allocation0 [shape = 'u32[]', space=smem, size = 0x4, offset = 0x4, fixed_abs, tag = 'smem constant byte address 0x4 - core index']
  #allocation1 [shape = 'u32[144,128]{1,0:T(1,128)}', space=vmem, size = 0x12000, scoped, tag = 'internal scratch']
  #allocation2 [shape = 'f32[32,64]{1,0:T(8,128)}', space=vmem, size = 0x4000, scoped, tag = 'scratch operand']
  %s0 = inlined_call_operand.vmem [shape: f32[2,32,32], index: 0, kind: input, shape index: {}]
  %s1 = inlined_call_operand.vmem [shape: f32[2,32,32], index: 1, kind: input, shape index: {}]
  %s2 = inlined_call_operand.vmem [shape: f32[32,256], index: 2, kind: input, shape index: {}]
  %s3 = inlined_call_operand.vmem [shape: f32[1,256], index: 3, kind: input, shape index: {}]
  %s4 = inlined_call_operand.vmem [shape: f32[64,256], index: 4, kind: input, shape index: {}]
  %s5 = inlined_call_operand.vmem [shape: f32[1,64], index: 5, kind: input, shape index: {}]
  %s6 = inlined_call_operand.vmem [shape: f32[1,64], index: 6, kind: input, shape index: {}]
  %s7 = inlined_call_operand.vmem [shape: f32[64,192], index: 7, kind: input, shape index: {}]
  %s8 = inlined_call_operand.vmem [shape: f32[1,192], index: 8, kind: input, shape index: {}]
  %s9 = inlined_call_operand.vmem [shape: f32[64,64], index: 9, kind: input, shape index: {}]
  %s10 = inlined_call_operand.vmem [shape: f32[1,64], index: 10, kind: input, shape index: {}]
  %s11 = inlined_call_operand.vmem [shape: f32[1,64], index: 11, kind: input, shape index: {}]
  %s12 = inlined_call_operand.vmem [shape: f32[1,64], index: 12, kind: input, shape index: {}]
  %s13 = inlined_call_operand.vmem [shape: f32[64,128], index: 13, kind: input, shape index: {}]
  %s14 = inlined_call_operand.vmem [shape: f32[1,128], index: 14, kind: input, shape index: {}]
  %s15 = inlined_call_operand.vmem [shape: f32[2,32,128], index: 15, kind: output, shape index: {}]
  %s16 = sld [smem:[#allocation0]]
  $region93: #{forward.1} parent=0
    _
  %s18 = ssub.s32 1, %s16
  %s19 = scalar_select 0, %s18, %s16
  loop: start=0, step=1, limit=4
  $region2: #{forward.1} parent=0 // loop_pre_header
    _
  $region3: #{forward.1} parent=0 // loop_header
    %s21 = sphi 0, %s25
    %p22 = scmp.ge.s32.totalorder %s21, 4
    %s31 = sphi 0, %s33
    %s34 = sphi 0, %s31
    %s35 = sphi 0, %s34
    %s51 = sphi 0, %s35
    %s55 = sphi 0, %s55
    %s57 = sphi 0, %s55
    %s58 = sphi 0, %s57
    %s72 = sphi 0, %s58
    %s76 = sphi 0, %s76
    %s78 = sphi 0, %s76
    %s79 = sphi 0, %s78
    %s93 = sphi 0, %s79
    %s97 = sphi 0, %s97
    %s99 = sphi 0, %s97
    %s100 = sphi 0, %s99
    %s114 = sphi 0, %s100
    %s118 = sphi 0, %s118
    %s120 = sphi 0, %s118
    %s121 = sphi 0, %s120
    %s135 = sphi 0, %s121
    %s139 = sphi 0, %s139
    %s141 = sphi 0, %s139
    %s142 = sphi 0, %s141
    %s156 = sphi 0, %s142
    %s160 = sphi 0, %s160
    %s162 = sphi 0, %s160
    %s163 = sphi 0, %s162
    %s177 = sphi 0, %s163
    %s181 = sphi 0, %s181
    %s183 = sphi 0, %s181
    %s184 = sphi 0, %s183
    %s198 = sphi 0, %s184
    %s202 = sphi 0, %s202
    %s204 = sphi 0, %s202
    %s205 = sphi 0, %s204
    %s219 = sphi 0, %s205
    %s223 = sphi 0, %s223
    %s225 = sphi 0, %s223
    %s226 = sphi 0, %s225
    %s240 = sphi 0, %s226
    %s244 = sphi 0, %s244
    %s246 = sphi 0, %s244
    %s247 = sphi 0, %s246
    %s261 = sphi 0, %s247
    %s265 = sphi 0, %s265
    %s267 = sphi 0, %s265
    %s268 = sphi 0, %s267
    %s282 = sphi 0, %s268
    %s286 = sphi 0, %s286
    %s288 = sphi 0, %s286
    %s289 = sphi 0, %s288
    %s303 = sphi 0, %s289
    %s307 = sphi 0, %s307
    %s309 = sphi 0, %s307
    %s310 = sphi 0, %s309
    %s324 = sphi 0, %s310
    %s328 = sphi 0, %s328
    %s330 = sphi 0, %s328
    %s331 = sphi 0, %s330
    %s345 = sphi 0, %s331
    %s351 = sphi 0, %s353
    %s354 = sphi 0, %s351
    %s355 = sphi 0, %s354
    %s371 = sphi 0, %s355
  $region4: #{forward.1} parent=0 // loop_header_branch
    %24 = sbr.rel (%p22) target = $region8
  $region5: #{forward.1} parent=0 // loop_body
    %s26 = ssub.s32 %s21, 1
    %s27 = ssub.s32 %s21, 2
    %s28 = sadd.s32 %s21, 1
    %s29 = ssub.s32 %s21, %s28
    %p30 = scmp.eq.s32.totalorder %s29, 0
    %s32 = sadd.s32 %s31, 1
    %s33 = scalar_select %p30, %s31, %s32
    %p36 = pneg %p30
    %p37 = scmp.eq.s32.totalorder %s21, 1
    %p38 = por %p36, %p37
    %p39 = scmp.ne.s32.totalorder %s31, %s34
    %p40 = scmp.eq.s32.totalorder %s21, 0
    %p41 = por %p39, %p40
    %p42 = scmp.ne.s32.totalorder %s31, %s34
    %p43 = scmp.eq.s32.totalorder %s26, 1
    %p44 = por %p42, %p43
    %p45 = scmp.ne.s32.totalorder %s34, %s35
    %p46 = scmp.eq.s32.totalorder %s26, 0
    %p47 = por %p45, %p46
    %p48 = scmp.ne.s32.totalorder %s34, %s35
    %p49 = scmp.eq.s32.totalorder %s27, 1
    %p50 = por %p48, %p49
    %p52 = scmp.ne.s32.totalorder %s35, %s51
    %p53 = scmp.eq.s32.totalorder %s27, 0
    %p54 = por %p52, %p53
    %s56 = sadd.s32 %s55, 1
    %p59 = scmp.eq.s32.totalorder %s21, 1
    %p60 = scmp.ne.s32.totalorder %s55, %s57
    %p61 = scmp.eq.s32.totalorder %s21, 0
    %p62 = por %p60, %p61
    %p63 = scmp.ne.s32.totalorder %s55, %s57
    %p64 = scmp.eq.s32.totalorder %s26, 1
    %p65 = por %p63, %p64
    %p66 = scmp.ne.s32.totalorder %s57, %s58
    %p67 = scmp.eq.s32.totalorder %s26, 0
    %p68 = por %p66, %p67
    %p69 = scmp.ne.s32.totalorder %s57, %s58
    %p70 = scmp.eq.s32.totalorder %s27, 1
    %p71 = por %p69, %p70
    %p73 = scmp.ne.s32.totalorder %s58, %s72
    %p74 = scmp.eq.s32.totalorder %s27, 0
    %p75 = por %p73, %p74
    %s77 = sadd.s32 %s76, 1
    %p80 = scmp.eq.s32.totalorder %s21, 1
    %p81 = scmp.ne.s32.totalorder %s76, %s78
    %p82 = scmp.eq.s32.totalorder %s21, 0
    %p83 = por %p81, %p82
    %p84 = scmp.ne.s32.totalorder %s76, %s78
    %p85 = scmp.eq.s32.totalorder %s26, 1
    %p86 = por %p84, %p85
    %p87 = scmp.ne.s32.totalorder %s78, %s79
    %p88 = scmp.eq.s32.totalorder %s26, 0
    %p89 = por %p87, %p88
    %p90 = scmp.ne.s32.totalorder %s78, %s79
    %p91 = scmp.eq.s32.totalorder %s27, 1
    %p92 = por %p90, %p91
    %p94 = scmp.ne.s32.totalorder %s79, %s93
    %p95 = scmp.eq.s32.totalorder %s27, 0
    %p96 = por %p94, %p95
    %s98 = sadd.s32 %s97, 1
    %p101 = scmp.eq.s32.totalorder %s21, 1
    %p102 = scmp.ne.s32.totalorder %s97, %s99
    %p103 = scmp.eq.s32.totalorder %s21, 0
    %p104 = por %p102, %p103
    %p105 = scmp.ne.s32.totalorder %s97, %s99
    %p106 = scmp.eq.s32.totalorder %s26, 1
    %p107 = por %p105, %p106
    %p108 = scmp.ne.s32.totalorder %s99, %s100
    %p109 = scmp.eq.s32.totalorder %s26, 0
    %p110 = por %p108, %p109
    %p111 = scmp.ne.s32.totalorder %s99, %s100
    %p112 = scmp.eq.s32.totalorder %s27, 1
    %p113 = por %p111, %p112
    %p115 = scmp.ne.s32.totalorder %s100, %s114
    %p116 = scmp.eq.s32.totalorder %s27, 0
    %p117 = por %p115, %p116
    %s119 = sadd.s32 %s118, 1
    %p122 = scmp.eq.s32.totalorder %s21, 1
    %p123 = scmp.ne.s32.totalorder %s118, %s120
    %p124 = scmp.eq.s32.totalorder %s21, 0
    %p125 = por %p123, %p124
    %p126 = scmp.ne.s32.totalorder %s118, %s120
    %p127 = scmp.eq.s32.totalorder %s26, 1
    %p128 = por %p126, %p127
    %p129 = scmp.ne.s32.totalorder %s120, %s121
    %p130 = scmp.eq.s32.totalorder %s26, 0
    %p131 = por %p129, %p130
    %p132 = scmp.ne.s32.totalorder %s120, %s121
    %p133 = scmp.eq.s32.totalorder %s27, 1
    %p134 = por %p132, %p133
    %p136 = scmp.ne.s32.totalorder %s121, %s135
    %p137 = scmp.eq.s32.totalorder %s27, 0
    %p138 = por %p136, %p137
    %s140 = sadd.s32 %s139, 1
    %p143 = scmp.eq.s32.totalorder %s21, 1
    %p144 = scmp.ne.s32.totalorder %s139, %s141
    %p145 = scmp.eq.s32.totalorder %s21, 0
    %p146 = por %p144, %p145
    %p147 = scmp.ne.s32.totalorder %s139, %s141
    %p148 = scmp.eq.s32.totalorder %s26, 1
    %p149 = por %p147, %p148
    %p150 = scmp.ne.s32.totalorder %s141, %s142
    %p151 = scmp.eq.s32.totalorder %s26, 0
    %p152 = por %p150, %p151
    %p153 = scmp.ne.s32.totalorder %s141, %s142
    %p154 = scmp.eq.s32.totalorder %s27, 1
    %p155 = por %p153, %p154
    %p157 = scmp.ne.s32.totalorder %s142, %s156
    %p158 = scmp.eq.s32.totalorder %s27, 0
    %p159 = por %p157, %p158
    %s161 = sadd.s32 %s160, 1
    %p164 = scmp.eq.s32.totalorder %s21, 1
    %p165 = scmp.ne.s32.totalorder %s160, %s162
    %p166 = scmp.eq.s32.totalorder %s21, 0
    %p167 = por %p165, %p166
    %p168 = scmp.ne.s32.totalorder %s160, %s162
    %p169 = scmp.eq.s32.totalorder %s26, 1
    %p170 = por %p168, %p169
    %p171 = scmp.ne.s32.totalorder %s162, %s163
    %p172 = scmp.eq.s32.totalorder %s26, 0
    %p173 = por %p171, %p172
    %p174 = scmp.ne.s32.totalorder %s162, %s163
    %p175 = scmp.eq.s32.totalorder %s27, 1
    %p176 = por %p174, %p175
    %p178 = scmp.ne.s32.totalorder %s163, %s177
    %p179 = scmp.eq.s32.totalorder %s27, 0
    %p180 = por %p178, %p179
    %s182 = sadd.s32 %s181, 1
    %p185 = scmp.eq.s32.totalorder %s21, 1
    %p186 = scmp.ne.s32.totalorder %s181, %s183
    %p187 = scmp.eq.s32.totalorder %s21, 0
    %p188 = por %p186, %p187
    %p189 = scmp.ne.s32.totalorder %s181, %s183
    %p190 = scmp.eq.s32.totalorder %s26, 1
    %p191 = por %p189, %p190
    %p192 = scmp.ne.s32.totalorder %s183, %s184
    %p193 = scmp.eq.s32.totalorder %s26, 0
    %p194 = por %p192, %p193
    %p195 = scmp.ne.s32.totalorder %s183, %s184
    %p196 = scmp.eq.s32.totalorder %s27, 1
    %p197 = por %p195, %p196
    %p199 = scmp.ne.s32.totalorder %s184, %s198
    %p200 = scmp.eq.s32.totalorder %s27, 0
    %p201 = por %p199, %p200
    %s203 = sadd.s32 %s202, 1
    %p206 = scmp.eq.s32.totalorder %s21, 1
    %p207 = scmp.ne.s32.totalorder %s202, %s204
    %p208 = scmp.eq.s32.totalorder %s21, 0
    %p209 = por %p207, %p208
    %p210 = scmp.ne.s32.totalorder %s202, %s204
    %p211 = scmp.eq.s32.totalorder %s26, 1
    %p212 = por %p210, %p211
    %p213 = scmp.ne.s32.totalorder %s204, %s205
    %p214 = scmp.eq.s32.totalorder %s26, 0
    %p215 = por %p213, %p214
    %p216 = scmp.ne.s32.totalorder %s204, %s205
    %p217 = scmp.eq.s32.totalorder %s27, 1
    %p218 = por %p216, %p217
    %p220 = scmp.ne.s32.totalorder %s205, %s219
    %p221 = scmp.eq.s32.totalorder %s27, 0
    %p222 = por %p220, %p221
    %s224 = sadd.s32 %s223, 1
    %p227 = scmp.eq.s32.totalorder %s21, 1
    %p228 = scmp.ne.s32.totalorder %s223, %s225
    %p229 = scmp.eq.s32.totalorder %s21, 0
    %p230 = por %p228, %p229
    %p231 = scmp.ne.s32.totalorder %s223, %s225
    %p232 = scmp.eq.s32.totalorder %s26, 1
    %p233 = por %p231, %p232
    %p234 = scmp.ne.s32.totalorder %s225, %s226
    %p235 = scmp.eq.s32.totalorder %s26, 0
    %p236 = por %p234, %p235
    %p237 = scmp.ne.s32.totalorder %s225, %s226
    %p238 = scmp.eq.s32.totalorder %s27, 1
    %p239 = por %p237, %p238
    %p241 = scmp.ne.s32.totalorder %s226, %s240
    %p242 = scmp.eq.s32.totalorder %s27, 0
    %p243 = por %p241, %p242
    %s245 = sadd.s32 %s244, 1
    %p248 = scmp.eq.s32.totalorder %s21, 1
    %p249 = scmp.ne.s32.totalorder %s244, %s246
    %p250 = scmp.eq.s32.totalorder %s21, 0
    %p251 = por %p249, %p250
    %p252 = scmp.ne.s32.totalorder %s244, %s246
    %p253 = scmp.eq.s32.totalorder %s26, 1
    %p254 = por %p252, %p253
    %p255 = scmp.ne.s32.totalorder %s246, %s247
    %p256 = scmp.eq.s32.totalorder %s26, 0
    %p257 = por %p255, %p256
    %p258 = scmp.ne.s32.totalorder %s246, %s247
    %p259 = scmp.eq.s32.totalorder %s27, 1
    %p260 = por %p258, %p259
    %p262 = scmp.ne.s32.totalorder %s247, %s261
    %p263 = scmp.eq.s32.totalorder %s27, 0
    %p264 = por %p262, %p263
    %s266 = sadd.s32 %s265, 1
    %p269 = scmp.eq.s32.totalorder %s21, 1
    %p270 = scmp.ne.s32.totalorder %s265, %s267
    %p271 = scmp.eq.s32.totalorder %s21, 0
    %p272 = por %p270, %p271
    %p273 = scmp.ne.s32.totalorder %s265, %s267
    %p274 = scmp.eq.s32.totalorder %s26, 1
    %p275 = por %p273, %p274
    %p276 = scmp.ne.s32.totalorder %s267, %s268
    %p277 = scmp.eq.s32.totalorder %s26, 0
    %p278 = por %p276, %p277
    %p279 = scmp.ne.s32.totalorder %s267, %s268
    %p280 = scmp.eq.s32.totalorder %s27, 1
    %p281 = por %p279, %p280
    %p283 = scmp.ne.s32.totalorder %s268, %s282
    %p284 = scmp.eq.s32.totalorder %s27, 0
    %p285 = por %p283, %p284
    %s287 = sadd.s32 %s286, 1
    %p290 = scmp.eq.s32.totalorder %s21, 1
    %p291 = scmp.ne.s32.totalorder %s286, %s288
    %p292 = scmp.eq.s32.totalorder %s21, 0
    %p293 = por %p291, %p292
    %p294 = scmp.ne.s32.totalorder %s286, %s288
    %p295 = scmp.eq.s32.totalorder %s26, 1
    %p296 = por %p294, %p295
    %p297 = scmp.ne.s32.totalorder %s288, %s289
    %p298 = scmp.eq.s32.totalorder %s26, 0
    %p299 = por %p297, %p298
    %p300 = scmp.ne.s32.totalorder %s288, %s289
    %p301 = scmp.eq.s32.totalorder %s27, 1
    %p302 = por %p300, %p301
    %p304 = scmp.ne.s32.totalorder %s289, %s303
    %p305 = scmp.eq.s32.totalorder %s27, 0
    %p306 = por %p304, %p305
    %s308 = sadd.s32 %s307, 1
    %p311 = scmp.eq.s32.totalorder %s21, 1
    %p312 = scmp.ne.s32.totalorder %s307, %s309
    %p313 = scmp.eq.s32.totalorder %s21, 0
    %p314 = por %p312, %p313
    %p315 = scmp.ne.s32.totalorder %s307, %s309
    %p316 = scmp.eq.s32.totalorder %s26, 1
    %p317 = por %p315, %p316
    %p318 = scmp.ne.s32.totalorder %s309, %s310
    %p319 = scmp.eq.s32.totalorder %s26, 0
    %p320 = por %p318, %p319
    %p321 = scmp.ne.s32.totalorder %s309, %s310
    %p322 = scmp.eq.s32.totalorder %s27, 1
    %p323 = por %p321, %p322
    %p325 = scmp.ne.s32.totalorder %s310, %s324
    %p326 = scmp.eq.s32.totalorder %s27, 0
    %p327 = por %p325, %p326
    %s329 = sadd.s32 %s328, 1
    %p332 = scmp.eq.s32.totalorder %s21, 1
    %p333 = scmp.ne.s32.totalorder %s328, %s330
    %p334 = scmp.eq.s32.totalorder %s21, 0
    %p335 = por %p333, %p334
    %p336 = scmp.ne.s32.totalorder %s328, %s330
    %p337 = scmp.eq.s32.totalorder %s26, 1
    %p338 = por %p336, %p337
    %p339 = scmp.ne.s32.totalorder %s330, %s331
    %p340 = scmp.eq.s32.totalorder %s26, 0
    %p341 = por %p339, %p340
    %p342 = scmp.ne.s32.totalorder %s330, %s331
    %p343 = scmp.eq.s32.totalorder %s27, 1
    %p344 = por %p342, %p343
    %p346 = scmp.ne.s32.totalorder %s331, %s345
    %p347 = scmp.eq.s32.totalorder %s27, 0
    %p348 = por %p346, %p347
    %s349 = ssub.s32 %s21, %s28
    %p350 = scmp.eq.s32.totalorder %s349, 0
    %s352 = sadd.s32 %s351, 1
    %s353 = scalar_select %p350, %s351, %s352
    %p356 = pneg %p350
    %p357 = scmp.eq.s32.totalorder %s21, 1
    %p358 = por %p356, %p357
    %p359 = scmp.ne.s32.totalorder %s351, %s354
    %p360 = scmp.eq.s32.totalorder %s21, 0
    %p361 = por %p359, %p360
    %p362 = scmp.ne.s32.totalorder %s351, %s354
    %p363 = scmp.eq.s32.totalorder %s26, 1
    %p364 = por %p362, %p363
    %p365 = scmp.ne.s32.totalorder %s354, %s355
    %p366 = scmp.eq.s32.totalorder %s26, 0
    %p367 = por %p365, %p366
    %p368 = scmp.ne.s32.totalorder %s354, %s355
    %p369 = scmp.eq.s32.totalorder %s27, 1
    %p370 = por %p368, %p369
    %p372 = scmp.ne.s32.totalorder %s355, %s371
    %p373 = scmp.eq.s32.totalorder %s27, 0
    %p374 = por %p372, %p373
    %p375 = scmp.le.s32.totalorder 1, %s21
    %p376 = scmp.lt.s32.totalorder %s21, 3
    %p377 = pnand %p375, %p376
    %p378 = pneg %p377
    // Predicated region
    $region9: #{forward.1} parent=5 // pred_check
      _
    $region10: #{forward.1} parent=5 // pred_check_branch
      %380 = sbr.rel (%p377) target = $region12
    $region11: #{forward.1} parent=5 // pred_region
      %s381 = ssub.s32 %s21, 1
      // Predicated region
      $region13: #{forward.1} parent=11 // pred_check
        %p382 = pneg %p68
      $region14: #{forward.1} parent=11 // pred_check_branch
        %384 = sbr.rel (%p382) target = $region16
      $region15: #{forward.1} parent=11 // pred_region
        _
      $region16: #{forward.1} parent=11 // pred_fallthru
        _
      // Predicated region
      $region17: #{forward.1} parent=11 // pred_check
        %p385 = pneg %p89
      $region18: #{forward.1} parent=11 // pred_check_branch
        %387 = sbr.rel (%p385) target = $region20
      $region19: #{forward.1} parent=11 // pred_region
        _
      $region20: #{forward.1} parent=11 // pred_fallthru
        _
      // Predicated region
      $region21: #{forward.1} parent=11 // pred_check
        %p388 = pneg %p110
      $region22: #{forward.1} parent=11 // pred_check_branch
        %390 = sbr.rel (%p388) target = $region24
      $region23: #{forward.1} parent=11 // pred_region
        _
      $region24: #{forward.1} parent=11 // pred_fallthru
        _
      // Predicated region
      $region25: #{forward.1} parent=11 // pred_check
        %p391 = pneg %p131
      $region26: #{forward.1} parent=11 // pred_check_branch
        %393 = sbr.rel (%p391) target = $region28
      $region27: #{forward.1} parent=11 // pred_region
        _
      $region28: #{forward.1} parent=11 // pred_fallthru
        _
      // Predicated region
      $region29: #{forward.1} parent=11 // pred_check
        %p394 = pneg %p152
      $region30: #{forward.1} parent=11 // pred_check_branch
        %396 = sbr.rel (%p394) target = $region32
      $region31: #{forward.1} parent=11 // pred_region
        _
      $region32: #{forward.1} parent=11 // pred_fallthru
        _
      // Predicated region
      $region33: #{forward.1} parent=11 // pred_check
        %p397 = pneg %p173
      $region34: #{forward.1} parent=11 // pred_check_branch
        %399 = sbr.rel (%p397) target = $region36
      $region35: #{forward.1} parent=11 // pred_region
        _
      $region36: #{forward.1} parent=11 // pred_fallthru
        _
      // Predicated region
      $region37: #{forward.1} parent=11 // pred_check
        %p400 = pneg %p194
      $region38: #{forward.1} parent=11 // pred_check_branch
        %402 = sbr.rel (%p400) target = $region40
      $region39: #{forward.1} parent=11 // pred_region
        _
      $region40: #{forward.1} parent=11 // pred_fallthru
        _
      // Predicated region
      $region41: #{forward.1} parent=11 // pred_check
        %p403 = pneg %p215
      $region42: #{forward.1} parent=11 // pred_check_branch
        %405 = sbr.rel (%p403) target = $region44
      $region43: #{forward.1} parent=11 // pred_region
        _
      $region44: #{forward.1} parent=11 // pred_fallthru
        _
      // Predicated region
      $region45: #{forward.1} parent=11 // pred_check
        %p406 = pneg %p236
      $region46: #{forward.1} parent=11 // pred_check_branch
        %408 = sbr.rel (%p406) target = $region48
      $region47: #{forward.1} parent=11 // pred_region
        _
      $region48: #{forward.1} parent=11 // pred_fallthru
        _
      // Predicated region
      $region49: #{forward.1} parent=11 // pred_check
        %p409 = pneg %p257
      $region50: #{forward.1} parent=11 // pred_check_branch
        %411 = sbr.rel (%p409) target = $region52
      $region51: #{forward.1} parent=11 // pred_region
        _
      $region52: #{forward.1} parent=11 // pred_fallthru
        _
      // Predicated region
      $region53: #{forward.1} parent=11 // pred_check
        %p412 = pneg %p278
      $region54: #{forward.1} parent=11 // pred_check_branch
        %414 = sbr.rel (%p412) target = $region56
      $region55: #{forward.1} parent=11 // pred_region
        _
      $region56: #{forward.1} parent=11 // pred_fallthru
        _
      // Predicated region
      $region57: #{forward.1} parent=11 // pred_check
        %p415 = pneg %p299
      $region58: #{forward.1} parent=11 // pred_check_branch
        %417 = sbr.rel (%p415) target = $region60
      $region59: #{forward.1} parent=11 // pred_region
        _
      $region60: #{forward.1} parent=11 // pred_fallthru
        _
      // Predicated region
      $region61: #{forward.1} parent=11 // pred_check
        %p418 = pneg %p320
      $region62: #{forward.1} parent=11 // pred_check_branch
        %420 = sbr.rel (%p418) target = $region64
      $region63: #{forward.1} parent=11 // pred_region
        _
      $region64: #{forward.1} parent=11 // pred_fallthru
        _
      // Predicated region
      $region65: #{forward.1} parent=11 // pred_check
        %p421 = pneg %p341
      $region66: #{forward.1} parent=11 // pred_check_branch
        %423 = sbr.rel (%p421) target = $region68
      $region67: #{forward.1} parent=11 // pred_region
        _
      $region68: #{forward.1} parent=11 // pred_fallthru
        _
    $region12: #{forward.1} parent=5 // pred_fallthru
      _
    %p424 = scmp.lt.s32.totalorder %s21, 2
    // Predicated region
    $region69: #{forward.1} parent=5 // pred_check
      %p425 = pneg %p424
    $region70: #{forward.1} parent=5 // pred_check_branch
      %427 = sbr.rel (%p425) target = $region72
    $region71: #{forward.1} parent=5 // pred_region
      // Predicated region
      $region73: #{forward.1} parent=71 // pred_check
        %p428 = pneg %p41
      $region74: #{forward.1} parent=71 // pred_check_branch
        %430 = sbr.rel (%p428) target = $region76
      $region75: #{forward.1} parent=71 // pred_region
        %p431 = scmp.lt.s32.totalorder %s21, 1
        %s432 = scalar_select %p431, %s21, 1
        %s433 = smul.addr %s432, 4
        %s434 = smul.addr %s433, 8
        %s435 = scalar_lea.vmem %s0, %s434
      $region76: #{forward.1} parent=71 // pred_fallthru
        _
    $region72: #{forward.1} parent=5 // pred_fallthru
      _
    %p436 = scmp.le.s32.totalorder 1, %s21
    %p437 = scmp.lt.s32.totalorder %s21, 3
    %p438 = pnand %p436, %p437
    %p439 = pneg %p438
    // Predicated region
    $region77: #{forward.1} parent=5 // pred_check
      _
    $region78: #{forward.1} parent=5 // pred_check_branch
      %441 = sbr.rel (%p438) target = $region80
    $region79: #{forward.1} parent=5 // pred_region
      %s442 = ssub.s32 %s21, 1
      %p443 = scmp.lt.s32.totalorder %s26, 1
      %s444 = scalar_select %p443, %s26, 1
      %s445 = smul.addr %s444, 4
      %s446 = smul.addr %s445, 8
      %s447 = scalar_lea.vmem %s0, %s446
      %p448 = pneg %p47
      %p449 = pneg %p44
      %p450 = pneg %p68
      %p451 = pneg %p65
      %p452 = pneg %p89
      %p453 = pneg %p86
      %p454 = pneg %p110
      %p455 = pneg %p107
      %p456 = pneg %p131
      %p457 = pneg %p128
      %p458 = pneg %p152
      %p459 = pneg %p149
      %p460 = pneg %p173
      %p461 = pneg %p170
      %p462 = pneg %p194
      %p463 = pneg %p191
      %p464 = pneg %p215
      %p465 = pneg %p212
      %p466 = pneg %p236
      %p467 = pneg %p233
      %p468 = pneg %p257
      %p469 = pneg %p254
      %p470 = pneg %p278
      %p471 = pneg %p275
      %p472 = pneg %p299
      %p473 = pneg %p296
      %p474 = pneg %p320
      %p475 = pneg %p317
      %p476 = pneg %p341
      %p477 = pneg %p338
      %p478 = pneg %p367
      %p479 = pneg %p364
      %p480 = scmp.lt.s32.totalorder %s26, 1
      %s481 = scalar_select %p480, %s26, 1
      %s482 = smul.addr %s481, 4
      %s483 = smul.addr %s482, 8
      %s484 = scalar_lea.vmem %s15, %s483
      %p485 = scmp.lt.s32.totalorder %s26, 1
      %s486 = scalar_select %p485, %s26, 1
      %s487 = smul.addr %s486, 4
      %s488 = smul.addr %s487, 8
      %s489 = scalar_lea.vmem %s0, %s488
      %p490 = scmp.lt.s32.totalorder %s26, 1
      %s491 = scalar_select %p490, %s26, 1
      %s492 = smul.addr %s491, 4
      %s493 = smul.addr %s492, 8
      %s494 = scalar_lea.vmem %s15, %s493
      %v495 = vld [vmem:[%s489] sm:$0xff]
      %v496 = vld [vmem:[%s489 + $0x8] sm:$0xff]
      %v497 = vld [vmem:[%s489 + $0x10] sm:$0xff]
      %v498 = vld [vmem:[%s489 + $0x18] sm:$0xff]
      %v499 = vld [vmem:[%s2] sm:$0xff]
      %v500 = vld [vmem:[%s2 + $0x8] sm:$0xff]
      %v501 = vld [vmem:[%s2 + $0x10] sm:$0xff]
      %v502 = vld [vmem:[%s2 + $0x18] sm:$0xff]
      %v503 = vld [vmem:[%s2 + $0x20] sm:$0xff]
      %v504 = vld [vmem:[%s2 + $0x28] sm:$0xff]
      %v505 = vld [vmem:[%s2 + $0x30] sm:$0xff]
      %v506 = vld [vmem:[%s2 + $0x38] sm:$0xff]
      %v507 = vld [vmem:[%s3] sm:$0x3]
      %v509 = vlaneseq
      %v510 = vshrl.u32 %v509, 7
      %v511 = vsub.s32 0, %v510
      %v512 = vrot.slane %v507, %v511
      %v513 = vlaneseq
      %v514 = vshrl.u32 %v513, 7
      %v515 = vsub.s32 1, %v514
      %v516 = vrot.slane %v507, %v515
      %vm519 = vcmask 261120
      %v521 = vsel %vm519, %v495, 0
      %v524 = vsel %vm519, %v496, 0
      %v527 = vsel %vm519, %v497, 0
      %v530 = vsel %vm519, %v498, 0
      %532 = vmatprep.subr.mxu0 %v500
      %533 = vmatpush1.msra.mxu0 %v499
      %534 = vmatprep.subr.mxu0 %v502
      %535 = vmatpush1.msra.mxu0 %v501
      %536 = vmatprep.subr.mxu0 %v504
      %537 = vmatpush1.msra.mxu0 %v503
      %538 = vmatprep.subr.mxu0 %v506
      %539 = vmatpush1.msra.mxu0 %v505
      %540 = vmatprep.subr.mxu0 0.0
      %541 = vmatpush1.msra.mxu0 0.0
      %542 = vmatprep.subr.mxu0 0.0
      %543 = vmatpush1.msra.mxu0 0.0
      %544 = vmatprep.subr.mxu0 0.0
      %545 = vmatpush1.msra.mxu0 0.0
      %546 = vmatprep.subr.mxu0 0.0
      %547 = vmatpush1.msra.mxu0 0.0
      %548 = vmatprep.subr.mxu0 0.0
      %549 = vmatpush1.msra.mxu0 0.0
      %550 = vmatprep.subr.mxu0 0.0
      %551 = vmatpush1.msra.mxu0 0.0
      %552 = vmatprep.subr.mxu0 0.0
      %553 = vmatpush1.msra.mxu0 0.0
      %554 = vmatprep.subr.mxu0 0.0
      %555 = vmatpush1.msra.mxu0 0.0
      %556 = vmatprep.subr.mxu0 0.0
      %557 = vmatpush1.msra.mxu0 0.0
      %558 = vmatprep.subr.mxu0 0.0
      %559 = vmatpush1.msra.mxu0 0.0
      %560 = vmatprep.subr.mxu0 0.0
      %561 = vmatpush1.msra.mxu0 0.0
      %562 = vmatprep.subr.mxu0 0.0
      %563 = vmatpush1.msra.mxu0 0.0
      %564 = vmatprep.subr.mxu0 0.0
      %565 = vmatpush1.msra.mxu0 0.0
      %566 = vmatprep.subr.mxu0 0.0
      %567 = vmatpush1.msra.mxu0 0.0
      %568 = vmatprep.subr.mxu0 0.0
      %569 = vmatpush1.msra.mxu0 0.0
      %570 = vmatprep.subr.mxu0 0.0
      %571 = vmatpush1.msra.mxu0 0.0
      %572 = vmatprep.subr.mxu0 0.0
      %573 = vmatpush1.msra.mxu0 0.0
      %574 = vmatprep.subr.mxu0 0.0
      %575 = vmatpush1.msra.mxu0 0.0
      %576 = vmatprep.subr.mxu0 0.0
      %577 = vmatpush1.msra.mxu0 0.0
      %578 = vmatprep.subr.mxu0 0.0
      %579 = vmatpush1.msra.mxu0 0.0
      %580 = vmatprep.subr.mxu0 0.0
      %581 = vmatpush1.msra.mxu0 0.0
      %582 = vmatprep.subr.mxu0 0.0
      %583 = vmatpush1.msra.mxu0 0.0
      %584 = vmatprep.subr.mxu0 0.0
      %585 = vmatpush1.msra.mxu0 0.0
      %586 = vmatprep.subr.mxu0 0.0
      %587 = vmatpush1.msra.mxu0 0.0
      %588 = vmatprep.subr.mxu0 0.0
      %589 = vmatpush1.msra.mxu0 0.0
      %590 = vmatprep.subr.mxu0 0.0
      %591 = vmatpush1.msra.mxu0 0.0
      %592 = vmatprep.subr.mxu0 0.0
      %593 = vmatpush1.msra.mxu0 0.0
      %594 = vmatprep.subr.mxu0 0.0
      %595 = vmatpush1.msra.mxu0 0.0
      %596 = vmatprep.mubr.f32.mxu0 0.0
      %597 = vmatmul.mubr.f32.gmra.mrb[0].mxu0 %v521
      %v598 = vpop.f32.mrb[0].mxu0
      %v599 = vadd.f32 %v512, %v598
      %v600 = vpop.f32.mrb[0].mxu0
      %v601 = vadd.f32 %v516, %v600
      %602 = vmatprep.mubr.f32.mxu0 0.0
      %603 = vmatmul.mubr.f32.gmra.mrb[0].mxu0 %v524
      %v604 = vpop.f32.mrb[0].mxu0
      %v605 = vadd.f32 %v512, %v604
      %v606 = vpop.f32.mrb[0].mxu0
      %v607 = vadd.f32 %v516, %v606
      %608 = vmatprep.mubr.f32.mxu0 0.0
      %609 = vmatmul.mubr.f32.gmra.mrb[0].mxu0 %v527
      %v610 = vpop.f32.mrb[0].mxu0
      %v611 = vadd.f32 %v512, %v610
      %v612 = vpop.f32.mrb[0].mxu0
      %v613 = vadd.f32 %v516, %v612
      %614 = vmatprep.mubr.f32.mxu0 0.0
      %615 = vmatmul.mubr.f32.gmra.mrb[0].mxu0 %v530
      %v616 = vpop.f32.mrb[0].mxu0
      %v617 = vadd.f32 %v512, %v616
      %v618 = vpop.f32.mrb[0].mxu0
      %v619 = vadd.f32 %v516, %v618
      %620 = vdwg.mxu0
      %v621 = vld [vmem:[%s4] sm:$0xff]
      %v622 = vld [vmem:[%s4 + $0x8] sm:$0xff]
      %v623 = vld [vmem:[%s4 + $0x10] sm:$0xff]
      %v624 = vld [vmem:[%s4 + $0x18] sm:$0xff]
      %v625 = vld [vmem:[%s4 + $0x20] sm:$0xff]
      %v626 = vld [vmem:[%s4 + $0x28] sm:$0xff]
      %v627 = vld [vmem:[%s4 + $0x30] sm:$0xff]
      %v628 = vld [vmem:[%s4 + $0x38] sm:$0xff]
      %v629 = vld [vmem:[%s4 + $0x40] sm:$0xff]
      %v630 = vld [vmem:[%s4 + $0x48] sm:$0xff]
      %v631 = vld [vmem:[%s4 + $0x50] sm:$0xff]
      %v632 = vld [vmem:[%s4 + $0x58] sm:$0xff]
      %v633 = vld [vmem:[%s4 + $0x60] sm:$0xff]
      %v634 = vld [vmem:[%s4 + $0x68] sm:$0xff]
      %v635 = vld [vmem:[%s4 + $0x70] sm:$0xff]
      %v636 = vld [vmem:[%s4 + $0x78] sm:$0xff]
      %vm637 = vcmask 523264
      %v639 = vsel %vm637, 0.0, 0
      %641 = vmatprep.subr.mxu0 %v622
      %642 = vmatpush1.msra.mxu0 %v621
      %643 = vmatprep.subr.mxu0 %v624
      %644 = vmatpush1.msra.mxu0 %v623
      %645 = vmatprep.subr.mxu0 %v626
      %646 = vmatpush1.msra.mxu0 %v625
      %647 = vmatprep.subr.mxu0 %v628
      %648 = vmatpush1.msra.mxu0 %v627
      %649 = vmatprep.subr.mxu0 %v630
      %650 = vmatpush1.msra.mxu0 %v629
      %651 = vmatprep.subr.mxu0 %v632
      %652 = vmatpush1.msra.mxu0 %v631
      %653 = vmatprep.subr.mxu0 %v634
      %654 = vmatpush1.msra.mxu0 %v633
      %655 = vmatprep.subr.mxu0 %v636
      %656 = vmatpush1.msra.mxu0 %v635
      %657 = vmatprep.subr.mxu0 0.0
      %658 = vmatpush1.msra.mxu0 0.0
      %659 = vmatprep.subr.mxu0 0.0
      %660 = vmatpush1.msra.mxu0 0.0
      %661 = vmatprep.subr.mxu0 0.0
      %662 = vmatpush1.msra.mxu0 0.0
      %663 = vmatprep.subr.mxu0 0.0
      %664 = vmatpush1.msra.mxu0 0.0
      %665 = vmatprep.subr.mxu0 0.0
      %666 = vmatpush1.msra.mxu0 0.0
      %667 = vmatprep.subr.mxu0 0.0
      %668 = vmatpush1.msra.mxu0 0.0
      %669 = vmatprep.subr.mxu0 0.0
      %670 = vmatpush1.msra.mxu0 0.0
      %671 = vmatprep.subr.mxu0 0.0
      %672 = vmatpush1.msra.mxu0 0.0
      %673 = vmatprep.subr.mxu0 0.0
      %674 = vmatpush1.msra.mxu0 0.0
      %675 = vmatprep.subr.mxu0 0.0
      %676 = vmatpush1.msra.mxu0 0.0
      %677 = vmatprep.subr.mxu0 0.0
      %678 = vmatpush1.msra.mxu0 0.0
      %679 = vmatprep.subr.mxu0 0.0
      %680 = vmatpush1.msra.mxu0 0.0
      %681 = vmatprep.subr.mxu0 0.0
      %682 = vmatpush1.msra.mxu0 0.0
      %683 = vmatprep.subr.mxu0 0.0
      %684 = vmatpush1.msra.mxu0 0.0
      %685 = vmatprep.subr.mxu0 0.0
      %686 = vmatpush1.msra.mxu0 0.0
      %687 = vmatprep.subr.mxu0 0.0
      %688 = vmatpush1.msra.mxu0 0.0
      %689 = vmatprep.subr.mxu0 0.0
      %690 = vmatpush1.msra.mxu0 0.0
      %691 = vmatprep.subr.mxu0 0.0
      %692 = vmatpush1.msra.mxu0 0.0
      %693 = vmatprep.subr.mxu0 0.0
      %694 = vmatpush1.msra.mxu0 0.0
      %695 = vmatprep.subr.mxu0 0.0
      %696 = vmatpush1.msra.mxu0 0.0
      %697 = vmatprep.subr.mxu0 0.0
      %698 = vmatpush1.msra.mxu0 0.0
      %699 = vmatprep.subr.mxu0 0.0
      %700 = vmatpush1.msra.mxu0 0.0
      %701 = vmatprep.subr.mxu0 0.0
      %702 = vmatpush1.msra.mxu0 0.0
      %703 = vmatprep.subr.mxu0 0.0
      %704 = vmatpush1.msra.mxu0 0.0
      %705 = vmatprep.mubr.f32.mxu0 0.0
      %706 = vmatmul.mubr.f32.gmra.mrb[0].mxu0 %v639
      %v707 = vpop.f32.mrb[0].mxu0
      %v708 = vadd.f32 0.0, %v707
      %v709 = vpop.f32.mrb[0].mxu0
      %v710 = vadd.f32 0.0, %v709
      %711 = vdwg.mxu0
      %v712 = vadd.f32 %v599, %v708
      %v714 = vrot.slane %v710, 4
      %v716 = vadd.f32 %v619, %v714
      %v717 = vxor.u32 %v712, 2147483648
      %v718 = vmul.f32 %v717, 1.442695
      %v719 = vpow.pop %v718
      %v720 = vadd.f32 %v719, 1.0
      %v721 = vrcp.pop %v720
      %v722 = vmul.f32 1.0, %v721
      %v723 = vxor.u32 %v716, 2147483648
      %v724 = vmul.f32 %v723, 1.442695
      %v725 = vpow.pop %v724
      %v726 = vadd.f32 %v725, 1.0
      %v727 = vrcp.pop %v726
      %v728 = vmul.f32 1.0, %v727
      %v729 = vtanh.pop %v712
      %v730 = vtanh.pop %v716
      %v731 = vmul.f32 %v722, 0.0
      %733 = vrot.lane.b32.xlu0 %v729, 32
      %v734 = vpop.permute.xlu0 %733
      %v736 = vmul.f32 %v722, %v734
      %738 = vrot.lane.b32.xlu0 %v736, 32
      %v739 = vpop.permute.xlu0 %738
      %v741 = vadd.f32 %v731, %v739
      %v742 = vmul.f32 %v728, 0.0
      %744 = vrot.lane.b32.xlu0 %v730, 32
      %v745 = vpop.permute.xlu0 %744
      %v747 = vmul.f32 %v728, %v745
      %749 = vrot.lane.b32.xlu0 %v747, 32
      %v750 = vpop.permute.xlu0 %749
      %v752 = vadd.f32 %v742, %v750
      %v753 = vtanh.pop %v741
      %755 = vrot.lane.b32.xlu0 %v753, 32
      %v756 = vpop.permute.xlu0 %755
      %v758 = vmul.f32 %v722, %v756
      %v759 = vtanh.pop %v752
      %761 = vrot.lane.b32.xlu0 %v759, 32
      %v762 = vpop.permute.xlu0 %761
      %v764 = vmul.f32 %v728, %v762
      %766 = vrot.lane.b32.xlu0 %v758, 64
      %v767 = vpop.permute.xlu0 %766
      %v770 = vrot.slane %v764, 4
      %771 = vrot.lane.b32.xlu0 %v770, 96
      %v772 = vpop.permute.xlu0 %771
      %v774 = vsel %vm519, %v767, %v772
      %vm775 = vcmask 257024
      %776 = vst.msk [vmem:[#allocation2] sm:$0xf] %vm775, %v767
      %777 = vrot.lane.b32.xlu0 %v764, 96
      %v778 = vpop.permute.xlu0 %777
      %vm780 = vcmask 523524
      %781 = vst.msk [vmem:[#allocation2 + $0x18] sm:$0xf0] %vm780, %v778
      %v783 = vsel %vm637, %v774, 0
      %785 = vmatprep.subr.mxu0 %v622
      %786 = vmatpush1.msra.mxu0 %v621
      %787 = vmatprep.subr.mxu0 %v624
      %788 = vmatpush1.msra.mxu0 %v623
      %789 = vmatprep.subr.mxu0 %v626
      %790 = vmatpush1.msra.mxu0 %v625
      %791 = vmatprep.subr.mxu0 %v628
      %792 = vmatpush1.msra.mxu0 %v627
      %793 = vmatprep.subr.mxu0 %v630
      %794 = vmatpush1.msra.mxu0 %v629
      %795 = vmatprep.subr.mxu0 %v632
      %796 = vmatpush1.msra.mxu0 %v631
      %797 = vmatprep.subr.mxu0 %v634
      %798 = vmatpush1.msra.mxu0 %v633
      %799 = vmatprep.subr.mxu0 %v636
      %800 = vmatpush1.msra.mxu0 %v635
      %801 = vmatprep.subr.mxu0 0.0
      %802 = vmatpush1.msra.mxu0 0.0
      %803 = vmatprep.subr.mxu0 0.0
      %804 = vmatpush1.msra.mxu0 0.0
      %805 = vmatprep.subr.mxu0 0.0
      %806 = vmatpush1.msra.mxu0 0.0
      %807 = vmatprep.subr.mxu0 0.0
      %808 = vmatpush1.msra.mxu0 0.0
      %809 = vmatprep.subr.mxu0 0.0
      %810 = vmatpush1.msra.mxu0 0.0
      %811 = vmatprep.subr.mxu0 0.0
      %812 = vmatpush1.msra.mxu0 0.0
      %813 = vmatprep.subr.mxu0 0.0
      %814 = vmatpush1.msra.mxu0 0.0
      %815 = vmatprep.subr.mxu0 0.0
      %816 = vmatpush1.msra.mxu0 0.0
      %817 = vmatprep.subr.mxu0 0.0
      %818 = vmatpush1.msra.mxu0 0.0
      %819 = vmatprep.subr.mxu0 0.0
      %820 = vmatpush1.msra.mxu0 0.0
      %821 = vmatprep.subr.mxu0 0.0
      %822 = vmatpush1.msra.mxu0 0.0
      %823 = vmatprep.subr.mxu0 0.0
      %824 = vmatpush1.msra.mxu0 0.0
      %825 = vmatprep.subr.mxu0 0.0
      %826 = vmatpush1.msra.mxu0 0.0
      %827 = vmatprep.subr.mxu0 0.0
      %828 = vmatpush1.msra.mxu0 0.0
      %829 = vmatprep.subr.mxu0 0.0
      %830 = vmatpush1.msra.mxu0 0.0
      %831 = vmatprep.subr.mxu0 0.0
      %832 = vmatpush1.msra.mxu0 0.0
      %833 = vmatprep.subr.mxu0 0.0
      %834 = vmatpush1.msra.mxu0 0.0
      %835 = vmatprep.subr.mxu0 0.0
      %836 = vmatpush1.msra.mxu0 0.0
      %837 = vmatprep.subr.mxu0 0.0
      %838 = vmatpush1.msra.mxu0 0.0
      %839 = vmatprep.subr.mxu0 0.0
      %840 = vmatpush1.msra.mxu0 0.0
      %841 = vmatprep.subr.mxu0 0.0
      %842 = vmatpush1.msra.mxu0 0.0
      %843 = vmatprep.subr.mxu0 0.0
      %844 = vmatpush1.msra.mxu0 0.0
      %845 = vmatprep.subr.mxu0 0.0
      %846 = vmatpush1.msra.mxu0 0.0
      %847 = vmatprep.subr.mxu0 0.0
      %848 = vmatpush1.msra.mxu0 0.0
      %849 = vmatprep.mubr.f32.mxu0 0.0
      %850 = vmatmul.mubr.f32.gmra.mrb[0].mxu0 %v783
      %v851 = vpop.f32.mrb[0].mxu0
      %v852 = vadd.f32 0.0, %v851
      %v853 = vpop.f32.mrb[0].mxu0
      %v854 = vadd.f32 0.0, %v853
      %855 = vdwg.mxu0
      %v857 = vrot.slane %v852, 4
      %v859 = vadd.f32 %v599, %v857
      %v860 = vadd.f32 %v619, %v854
      %v861 = vxor.u32 %v859, 2147483648
      %v862 = vmul.f32 %v861, 1.442695
      %v863 = vpow.pop %v862
      %v864 = vadd.f32 %v863, 1.0
      %v865 = vrcp.pop %v864
      %v866 = vmul.f32 1.0, %v865
      %v867 = vxor.u32 %v860, 2147483648
      %v868 = vmul.f32 %v867, 1.442695
      %v869 = vpow.pop %v868
      %v870 = vadd.f32 %v869, 1.0
      %v871 = vrcp.pop %v870
      %v872 = vmul.f32 1.0, %v871
      %v873 = vtanh.pop %v859
      %v874 = vtanh.pop %v860
      %v876 = vrot.slane %v741, 4
      %v878 = vmul.f32 %v866, %v876
      %880 = vrot.lane.b32.xlu0 %v873, 32
      %v881 = vpop.permute.xlu0 %880
      %v883 = vmul.f32 %v866, %v881
      %885 = vrot.lane.b32.xlu0 %v883, 32
      %v886 = vpop.permute.xlu0 %885
      %v888 = vadd.f32 %v878, %v886
      %v890 = vrot.slane %v752, 4
      %v892 = vmul.f32 %v872, %v890
      %894 = vrot.lane.b32.xlu0 %v874, 32
      %v895 = vpop.permute.xlu0 %894
      %v897 = vmul.f32 %v872, %v895
      %899 = vrot.lane.b32.xlu0 %v897, 32
      %v900 = vpop.permute.xlu0 %899
      %v902 = vadd.f32 %v892, %v900
      %v903 = vtanh.pop %v888
      %905 = vrot.lane.b32.xlu0 %v903, 32
      %v906 = vpop.permute.xlu0 %905
      %v908 = vmul.f32 %v866, %v906
      %v909 = vtanh.pop %v902
      %911 = vrot.lane.b32.xlu0 %v909, 32
      %v912 = vpop.permute.xlu0 %911
      %v914 = vmul.f32 %v872, %v912
      %916 = vrot.lane.b32.xlu0 %v908, 64
      %v917 = vpop.permute.xlu0 %916
      %v920 = vrot.slane %v914, 4
      %921 = vrot.lane.b32.xlu0 %v920, 96
      %v922 = vpop.permute.xlu0 %921
      %v924 = vsel %vm519, %v917, %v922
      %vm925 = vcmask 261124
      %926 = vst.msk [vmem:[#allocation2] sm:$0xf0] %vm925, %v917
      %927 = vrot.lane.b32.xlu0 %v914, 96
      %v928 = vpop.permute.xlu0 %927
      %vm930 = vcmask 519424
      %931 = vst.msk [vmem:[#allocation2 + $0x18] sm:$0xf] %vm930, %v928
      %v933 = vrot.slane %v924, 4
      %v934 = vsel %vm637, %v933, 0
      %936 = vmatprep.subr.mxu0 %v622
      %937 = vmatpush1.msra.mxu0 %v621
      %938 = vmatprep.subr.mxu0 %v624
      %939 = vmatpush1.msra.mxu0 %v623
      %940 = vmatprep.subr.mxu0 %v626
      %941 = vmatpush1.msra.mxu0 %v625
      %942 = vmatprep.subr.mxu0 %v628
      %943 = vmatpush1.msra.mxu0 %v627
      %944 = vmatprep.subr.mxu0 %v630
      %945 = vmatpush1.msra.mxu0 %v629
      %946 = vmatprep.subr.mxu0 %v632
      %947 = vmatpush1.msra.mxu0 %v631
      %948 = vmatprep.subr.mxu0 %v634
      %949 = vmatpush1.msra.mxu0 %v633
      %950 = vmatprep.subr.mxu0 %v636
      %951 = vmatpush1.msra.mxu0 %v635
      %952 = vmatprep.subr.mxu0 0.0
      %953 = vmatpush1.msra.mxu0 0.0
      %954 = vmatprep.subr.mxu0 0.0
      %955 = vmatpush1.msra.mxu0 0.0
      %956 = vmatprep.subr.mxu0 0.0
      %957 = vmatpush1.msra.mxu0 0.0
      %958 = vmatprep.subr.mxu0 0.0
      %959 = vmatpush1.msra.mxu0 0.0
      %960 = vmatprep.subr.mxu0 0.0
      %961 = vmatpush1.msra.mxu0 0.0
      %962 = vmatprep.subr.mxu0 0.0
      %963 = vmatpush1.msra.mxu0 0.0
      %964 = vmatprep.subr.mxu0 0.0
      %965 = vmatpush1.msra.mxu0 0.0
      %966 = vmatprep.subr.mxu0 0.0
      %967 = vmatpush1.msra.mxu0 0.0
      %968 = vmatprep.subr.mxu0 0.0
      %969 = vmatpush1.msra.mxu0 0.0
      %970 = vmatprep.subr.mxu0 0.0
      %971 = vmatpush1.msra.mxu0 0.0
      %972 = vmatprep.subr.mxu0 0.0
      %973 = vmatpush1.msra.mxu0 0.0
      %974 = vmatprep.subr.mxu0 0.0
      %975 = vmatpush1.msra.mxu0 0.0
      %976 = vmatprep.subr.mxu0 0.0
      %977 = vmatpush1.msra.mxu0 0.0
      %978 = vmatprep.subr.mxu0 0.0
      %979 = vmatpush1.msra.mxu0 0.0
      %980 = vmatprep.subr.mxu0 0.0
      %981 = vmatpush1.msra.mxu0 0.0
      %982 = vmatprep.subr.mxu0 0.0
      %983 = vmatpush1.msra.mxu0 0.0
      %984 = vmatprep.subr.mxu0 0.0
      %985 = vmatpush1.msra.mxu0 0.0
      %986 = vmatprep.subr.mxu0 0.0
      %987 = vmatpush1.msra.mxu0 0.0
      %988 = vmatprep.subr.mxu0 0.0
      %989 = vmatpush1.msra.mxu0 0.0
      %990 = vmatprep.subr.mxu0 0.0
      %991 = vmatpush1.msra.mxu0 0.0
      %992 = vmatprep.subr.mxu0 0.0
      %993 = vmatpush1.msra.mxu0 0.0
      %994 = vmatprep.subr.mxu0 0.0
      %995 = vmatpush1.msra.mxu0 0.0
      %996 = vmatprep.subr.mxu0 0.0
      %997 = vmatpush1.msra.mxu0 0.0
      %998 = vmatprep.subr.mxu0 0.0
      %999 = vmatpush1.msra.mxu0 0.0
      %1000 = vmatprep.mubr.f32.mxu0 0.0
      %1001 = vmatmul.mubr.f32.gmra.mrb[0].mxu0 %v934
      %v1002 = vpop.f32.mrb[0].mxu0
      %v1003 = vadd.f32 0.0, %v1002
      %v1004 = vpop.f32.mrb[0].mxu0
      %v1005 = vadd.f32 0.0, %v1004
      %1006 = vdwg.mxu0
      %v1007 = vadd.f32 %v605, %v1003
      %v1009 = vrot.slane %v1005, 4
      %v1011 = vadd.f32 %v613, %v1009
      %v1012 = vxor.u32 %v1007, 2147483648
      %v1013 = vmul.f32 %v1012, 1.442695
      %v1014 = vpow.pop %v1013
      %v1015 = vadd.f32 %v1014, 1.0
      %v1016 = vrcp.pop %v1015
      %v1017 = vmul.f32 1.0, %v1016
      %v1018 = vxor.u32 %v1011, 2147483648
      %v1019 = vmul.f32 %v1018, 1.442695
      %v1020 = vpow.pop %v1019
      %v1021 = vadd.f32 %v1020, 1.0
      %v1022 = vrcp.pop %v1021
      %v1023 = vmul.f32 1.0, %v1022
      %v1024 = vtanh.pop %v1007
      %v1025 = vtanh.pop %v1011
      %v1027 = vrot.slane %v888, 4
      %v1029 = vmul.f32 %v1017, %v1027
      %1031 = vrot.lane.b32.xlu0 %v1024, 32
      %v1032 = vpop.permute.xlu0 %1031
      %v1034 = vmul.f32 %v1017, %v1032
      %1036 = vrot.lane.b32.xlu0 %v1034, 32
      %v1037 = vpop.permute.xlu0 %1036
      %v1039 = vadd.f32 %v1029, %v1037
      %v1041 = vrot.slane %v902, 4
      %v1043 = vmul.f32 %v1023, %v1041
      %1045 = vrot.lane.b32.xlu0 %v1025, 32
      %v1046 = vpop.permute.xlu0 %1045
      %v1048 = vmul.f32 %v1023, %v1046
      %1050 = vrot.lane.b32.xlu0 %v1048, 32
      %v1051 = vpop.permute.xlu0 %1050
      %v1053 = vadd.f32 %v1043, %v1051
      %v1054 = vtanh.pop %v1039
      %1056 = vrot.lane.b32.xlu0 %v1054, 32
      %v1057 = vpop.permute.xlu0 %1056
      %v1059 = vmul.f32 %v1017, %v1057
      %v1060 = vtanh.pop %v1053
      %1062 = vrot.lane.b32.xlu0 %v1060, 32
      %v1063 = vpop.permute.xlu0 %1062
      %v1065 = vmul.f32 %v1023, %v1063
      %1067 = vrot.lane.b32.xlu0 %v1059, 64
      %v1068 = vpop.permute.xlu0 %1067
      %v1071 = vrot.slane %v1065, 4
      %1072 = vrot.lane.b32.xlu0 %v1071, 96
      %v1073 = vpop.permute.xlu0 %1072
      %v1075 = vsel %vm519, %v1068, %v1073
      %1076 = vst.msk [vmem:[#allocation2 + $0x8] sm:$0xf] %vm775, %v1068
      %1077 = vrot.lane.b32.xlu0 %v1065, 96
      %v1078 = vpop.permute.xlu0 %1077
      %1080 = vst.msk [vmem:[#allocation2 + $0x10] sm:$0xf0] %vm780, %v1078
      %v1082 = vsel %vm637, %v1075, 0
      %1084 = vmatprep.subr.mxu0 %v622
      %1085 = vmatpush1.msra.mxu0 %v621
      %1086 = vmatprep.subr.mxu0 %v624
      %1087 = vmatpush1.msra.mxu0 %v623
      %1088 = vmatprep.subr.mxu0 %v626
      %1089 = vmatpush1.msra.mxu0 %v625
      %1090 = vmatprep.subr.mxu0 %v628
      %1091 = vmatpush1.msra.mxu0 %v627
      %1092 = vmatprep.subr.mxu0 %v630
      %1093 = vmatpush1.msra.mxu0 %v629
      %1094 = vmatprep.subr.mxu0 %v632
      %1095 = vmatpush1.msra.mxu0 %v631
      %1096 = vmatprep.subr.mxu0 %v634
      %1097 = vmatpush1.msra.mxu0 %v633
      %1098 = vmatprep.subr.mxu0 %v636
      %1099 = vmatpush1.msra.mxu0 %v635
      %1100 = vmatprep.subr.mxu0 0.0
      %1101 = vmatpush1.msra.mxu0 0.0
      %1102 = vmatprep.subr.mxu0 0.0
      %1103 = vmatpush1.msra.mxu0 0.0
      %1104 = vmatprep.subr.mxu0 0.0
      %1105 = vmatpush1.msra.mxu0 0.0
      %1106 = vmatprep.subr.mxu0 0.0
      %1107 = vmatpush1.msra.mxu0 0.0
      %1108 = vmatprep.subr.mxu0 0.0
      %1109 = vmatpush1.msra.mxu0 0.0
      %1110 = vmatprep.subr.mxu0 0.0
      %1111 = vmatpush1.msra.mxu0 0.0
      %1112 = vmatprep.subr.mxu0 0.0
      %1113 = vmatpush1.msra.mxu0 0.0
      %1114 = vmatprep.subr.mxu0 0.0
      %1115 = vmatpush1.msra.mxu0 0.0
      %1116 = vmatprep.subr.mxu0 0.0
      %1117 = vmatpush1.msra.mxu0 0.0
      %1118 = vmatprep.subr.mxu0 0.0
      %1119 = vmatpush1.msra.mxu0 0.0
      %1120 = vmatprep.subr.mxu0 0.0
      %1121 = vmatpush1.msra.mxu0 0.0
      %1122 = vmatprep.subr.mxu0 0.0
      %1123 = vmatpush1.msra.mxu0 0.0
      %1124 = vmatprep.subr.mxu0 0.0
      %1125 = vmatpush1.msra.mxu0 0.0
      %1126 = vmatprep.subr.mxu0 0.0
      %1127 = vmatpush1.msra.mxu0 0.0
      %1128 = vmatprep.subr.mxu0 0.0
      %1129 = vmatpush1.msra.mxu0 0.0
      %1130 = vmatprep.subr.mxu0 0.0
      %1131 = vmatpush1.msra.mxu0 0.0
      %1132 = vmatprep.subr.mxu0 0.0
      %1133 = vmatpush1.msra.mxu0 0.0
      %1134 = vmatprep.subr.mxu0 0.0
      %1135 = vmatpush1.msra.mxu0 0.0
      %1136 = vmatprep.subr.mxu0 0.0
      %1137 = vmatpush1.msra.mxu0 0.0
      %1138 = vmatprep.subr.mxu0 0.0
      %1139 = vmatpush1.msra.mxu0 0.0
      %1140 = vmatprep.subr.mxu0 0.0
      %1141 = vmatpush1.msra.mxu0 0.0
      %1142 = vmatprep.subr.mxu0 0.0
      %1143 = vmatpush1.msra.mxu0 0.0
      %1144 = vmatprep.subr.mxu0 0.0
      %1145 = vmatpush1.msra.mxu0 0.0
      %1146 = vmatprep.subr.mxu0 0.0
      %1147 = vmatpush1.msra.mxu0 0.0
      %1148 = vmatprep.mubr.f32.mxu0 0.0
      %1149 = vmatmul.mubr.f32.gmra.mrb[0].mxu0 %v1082
      %v1150 = vpop.f32.mrb[0].mxu0
      %v1151 = vadd.f32 0.0, %v1150
      %v1152 = vpop.f32.mrb[0].mxu0
      %v1153 = vadd.f32 0.0, %v1152
      %1154 = vdwg.mxu0
      %v1156 = vrot.slane %v1151, 4
      %v1158 = vadd.f32 %v605, %v1156
      %v1159 = vadd.f32 %v613, %v1153
      %v1160 = vxor.u32 %v1158, 2147483648
      %v1161 = vmul.f32 %v1160, 1.442695
      %v1162 = vpow.pop %v1161
      %v1163 = vadd.f32 %v1162, 1.0
      %v1164 = vrcp.pop %v1163
      %v1165 = vmul.f32 1.0, %v1164
      %v1166 = vxor.u32 %v1159, 2147483648
      %v1167 = vmul.f32 %v1166, 1.442695
      %v1168 = vpow.pop %v1167
      %v1169 = vadd.f32 %v1168, 1.0
      %v1170 = vrcp.pop %v1169
      %v1171 = vmul.f32 1.0, %v1170
      %v1172 = vtanh.pop %v1158
      %v1173 = vtanh.pop %v1159
      %v1175 = vrot.slane %v1039, 4
      %v1177 = vmul.f32 %v1165, %v1175
      %1179 = vrot.lane.b32.xlu0 %v1172, 32
      %v1180 = vpop.permute.xlu0 %1179
      %v1182 = vmul.f32 %v1165, %v1180
      %1184 = vrot.lane.b32.xlu0 %v1182, 32
      %v1185 = vpop.permute.xlu0 %1184
      %v1187 = vadd.f32 %v1177, %v1185
      %v1189 = vrot.slane %v1053, 4
      %v1191 = vmul.f32 %v1171, %v1189
      %1193 = vrot.lane.b32.xlu0 %v1173, 32
      %v1194 = vpop.permute.xlu0 %1193
      %v1196 = vmul.f32 %v1171, %v1194
      %1198 = vrot.lane.b32.xlu0 %v1196, 32
      %v1199 = vpop.permute.xlu0 %1198
      %v1201 = vadd.f32 %v1191, %v1199
      %v1202 = vtanh.pop %v1187
      %1204 = vrot.lane.b32.xlu0 %v1202, 32
      %v1205 = vpop.permute.xlu0 %1204
      %v1207 = vmul.f32 %v1165, %v1205
      %v1208 = vtanh.pop %v1201
      %1210 = vrot.lane.b32.xlu0 %v1208, 32
      %v1211 = vpop.permute.xlu0 %1210
      %v1213 = vmul.f32 %v1171, %v1211
      %1215 = vrot.lane.b32.xlu0 %v1207, 64
      %v1216 = vpop.permute.xlu0 %1215
      %v1219 = vrot.slane %v1213, 4
      %1220 = vrot.lane.b32.xlu0 %v1219, 96
      %v1221 = vpop.permute.xlu0 %1220
      %v1223 = vsel %vm519, %v1216, %v1221
      %1224 = vst.msk [vmem:[#allocation2 + $0x8] sm:$0xf0] %vm925, %v1216
      %1225 = vrot.lane.b32.xlu0 %v1213, 96
      %v1226 = vpop.permute.xlu0 %1225
      %1228 = vst.msk [vmem:[#allocation2 + $0x10] sm:$0xf] %vm930, %v1226
      %v1230 = vrot.slane %v1223, 4
      %v1231 = vsel %vm637, %v1230, 0
      %1233 = vmatprep.subr.mxu0 %v622
      %1234 = vmatpush1.msra.mxu0 %v621
      %1235 = vmatprep.subr.mxu0 %v624
      %1236 = vmatpush1.msra.mxu0 %v623
      %1237 = vmatprep.subr.mxu0 %v626
      %1238 = vmatpush1.msra.mxu0 %v625
      %1239 = vmatprep.subr.mxu0 %v628
      %1240 = vmatpush1.msra.mxu0 %v627
      %1241 = vmatprep.subr.mxu0 %v630
      %1242 = vmatpush1.msra.mxu0 %v629
      %1243 = vmatprep.subr.mxu0 %v632
      %1244 = vmatpush1.msra.mxu0 %v631
      %1245 = vmatprep.subr.mxu0 %v634
      %1246 = vmatpush1.msra.mxu0 %v633
      %1247 = vmatprep.subr.mxu0 %v636
      %1248 = vmatpush1.msra.mxu0 %v635
      %1249 = vmatprep.subr.mxu0 0.0
      %1250 = vmatpush1.msra.mxu0 0.0
      %1251 = vmatprep.subr.mxu0 0.0
      %1252 = vmatpush1.msra.mxu0 0.0
      %1253 = vmatprep.subr.mxu0 0.0
      %1254 = vmatpush1.msra.mxu0 0.0
      %1255 = vmatprep.subr.mxu0 0.0
      %1256 = vmatpush1.msra.mxu0 0.0
      %1257 = vmatprep.subr.mxu0 0.0
      %1258 = vmatpush1.msra.mxu0 0.0
      %1259 = vmatprep.subr.mxu0 0.0
      %1260 = vmatpush1.msra.mxu0 0.0
      %1261 = vmatprep.subr.mxu0 0.0
      %1262 = vmatpush1.msra.mxu0 0.0
      %1263 = vmatprep.subr.mxu0 0.0
      %1264 = vmatpush1.msra.mxu0 0.0
      %1265 = vmatprep.subr.mxu0 0.0
      %1266 = vmatpush1.msra.mxu0 0.0
      %1267 = vmatprep.subr.mxu0 0.0
      %1268 = vmatpush1.msra.mxu0 0.0
      %1269 = vmatprep.subr.mxu0 0.0
      %1270 = vmatpush1.msra.mxu0 0.0
      %1271 = vmatprep.subr.mxu0 0.0
      %1272 = vmatpush1.msra.mxu0 0.0
      %1273 = vmatprep.subr.mxu0 0.0
      %1274 = vmatpush1.msra.mxu0 0.0
      %1275 = vmatprep.subr.mxu0 0.0
      %1276 = vmatpush1.msra.mxu0 0.0
      %1277 = vmatprep.subr.mxu0 0.0
      %1278 = vmatpush1.msra.mxu0 0.0
      %1279 = vmatprep.subr.mxu0 0.0
      %1280 = vmatpush1.msra.mxu0 0.0
      %1281 = vmatprep.subr.mxu0 0.0
      %1282 = vmatpush1.msra.mxu0 0.0
      %1283 = vmatprep.subr.mxu0 0.0
      %1284 = vmatpush1.msra.mxu0 0.0
      %1285 = vmatprep.subr.mxu0 0.0
      %1286 = vmatpush1.msra.mxu0 0.0
      %1287 = vmatprep.subr.mxu0 0.0
      %1288 = vmatpush1.msra.mxu0 0.0
      %1289 = vmatprep.subr.mxu0 0.0
      %1290 = vmatpush1.msra.mxu0 0.0
      %1291 = vmatprep.subr.mxu0 0.0
      %1292 = vmatpush1.msra.mxu0 0.0
      %1293 = vmatprep.subr.mxu0 0.0
      %1294 = vmatpush1.msra.mxu0 0.0
      %1295 = vmatprep.subr.mxu0 0.0
      %1296 = vmatpush1.msra.mxu0 0.0
      %1297 = vmatprep.mubr.f32.mxu0 0.0
      %1298 = vmatmul.mubr.f32.gmra.mrb[0].mxu0 %v1231
      %v1299 = vpop.f32.mrb[0].mxu0
      %v1300 = vadd.f32 0.0, %v1299
      %v1301 = vpop.f32.mrb[0].mxu0
      %v1302 = vadd.f32 0.0, %v1301
      %1303 = vdwg.mxu0
      %v1304 = vadd.f32 %v611, %v1300
      %v1306 = vrot.slane %v1302, 4
      %v1308 = vadd.f32 %v607, %v1306
      %v1309 = vxor.u32 %v1304, 2147483648
      %v1310 = vmul.f32 %v1309, 1.442695
      %v1311 = vpow.pop %v1310
      %v1312 = vadd.f32 %v1311, 1.0
      %v1313 = vrcp.pop %v1312
      %v1314 = vmul.f32 1.0, %v1313
      %v1315 = vxor.u32 %v1308, 2147483648
      %v1316 = vmul.f32 %v1315, 1.442695
      %v1317 = vpow.pop %v1316
      %v1318 = vadd.f32 %v1317, 1.0
      %v1319 = vrcp.pop %v1318
      %v1320 = vmul.f32 1.0, %v1319
      %v1321 = vtanh.pop %v1304
      %v1322 = vtanh.pop %v1308
      %v1324 = vrot.slane %v1187, 4
      %v1326 = vmul.f32 %v1314, %v1324
      %1328 = vrot.lane.b32.xlu0 %v1321, 32
      %v1329 = vpop.permute.xlu0 %1328
      %v1331 = vmul.f32 %v1314, %v1329
      %1333 = vrot.lane.b32.xlu0 %v1331, 32
      %v1334 = vpop.permute.xlu0 %1333
      %v1336 = vadd.f32 %v1326, %v1334
      %v1338 = vrot.slane %v1201, 4
      %v1340 = vmul.f32 %v1320, %v1338
      %1342 = vrot.lane.b32.xlu0 %v1322, 32
      %v1343 = vpop.permute.xlu0 %1342
      %v1345 = vmul.f32 %v1320, %v1343
      %1347 = vrot.lane.b32.xlu0 %v1345, 32
      %v1348 = vpop.permute.xlu0 %1347
      %v1350 = vadd.f32 %v1340, %v1348
      %v1351 = vtanh.pop %v1336
      %1353 = vrot.lane.b32.xlu0 %v1351, 32
      %v1354 = vpop.permute.xlu0 %1353
      %v1356 = vmul.f32 %v1314, %v1354
      %v1357 = vtanh.pop %v1350
      %1359 = vrot.lane.b32.xlu0 %v1357, 32
      %v1360 = vpop.permute.xlu0 %1359
      %v1362 = vmul.f32 %v1320, %v1360
      %1364 = vrot.lane.b32.xlu0 %v1356, 64
      %v1365 = vpop.permute.xlu0 %1364
      %v1368 = vrot.slane %v1362, 4
      %1369 = vrot.lane.b32.xlu0 %v1368, 96
      %v1370 = vpop.permute.xlu0 %1369
      %v1372 = vsel %vm519, %v1365, %v1370
      %1373 = vst.msk [vmem:[#allocation2 + $0x10] sm:$0xf] %vm775, %v1365
      %1374 = vrot.lane.b32.xlu0 %v1362, 96
      %v1375 = vpop.permute.xlu0 %1374
      %1377 = vst.msk [vmem:[#allocation2 + $0x8] sm:$0xf0] %vm780, %v1375
      %v1379 = vsel %vm637, %v1372, 0
      %1381 = vmatprep.subr.mxu0 %v622
      %1382 = vmatpush1.msra.mxu0 %v621
      %1383 = vmatprep.subr.mxu0 %v624
      %1384 = vmatpush1.msra.mxu0 %v623
      %1385 = vmatprep.subr.mxu0 %v626
      %1386 = vmatpush1.msra.mxu0 %v625
      %1387 = vmatprep.subr.mxu0 %v628
      %1388 = vmatpush1.msra.mxu0 %v627
      %1389 = vmatprep.subr.mxu0 %v630
      %1390 = vmatpush1.msra.mxu0 %v629
      %1391 = vmatprep.subr.mxu0 %v632
      %1392 = vmatpush1.msra.mxu0 %v631
      %1393 = vmatprep.subr.mxu0 %v634
      %1394 = vmatpush1.msra.mxu0 %v633
      %1395 = vmatprep.subr.mxu0 %v636
      %1396 = vmatpush1.msra.mxu0 %v635
      %1397 = vmatprep.subr.mxu0 0.0
      %1398 = vmatpush1.msra.mxu0 0.0
      %1399 = vmatprep.subr.mxu0 0.0
      %1400 = vmatpush1.msra.mxu0 0.0
      %1401 = vmatprep.subr.mxu0 0.0
      %1402 = vmatpush1.msra.mxu0 0.0
      %1403 = vmatprep.subr.mxu0 0.0
      %1404 = vmatpush1.msra.mxu0 0.0
      %1405 = vmatprep.subr.mxu0 0.0
      %1406 = vmatpush1.msra.mxu0 0.0
      %1407 = vmatprep.subr.mxu0 0.0
      %1408 = vmatpush1.msra.mxu0 0.0
      %1409 = vmatprep.subr.mxu0 0.0
      %1410 = vmatpush1.msra.mxu0 0.0
      %1411 = vmatprep.subr.mxu0 0.0
      %1412 = vmatpush1.msra.mxu0 0.0
      %1413 = vmatprep.subr.mxu0 0.0
      %1414 = vmatpush1.msra.mxu0 0.0
      %1415 = vmatprep.subr.mxu0 0.0
      %1416 = vmatpush1.msra.mxu0 0.0
      %1417 = vmatprep.subr.mxu0 0.0
      %1418 = vmatpush1.msra.mxu0 0.0
      %1419 = vmatprep.subr.mxu0 0.0
      %1420 = vmatpush1.msra.mxu0 0.0
      %1421 = vmatprep.subr.mxu0 0.0
      %1422 = vmatpush1.msra.mxu0 0.0
      %1423 = vmatprep.subr.mxu0 0.0
      %1424 = vmatpush1.msra.mxu0 0.0
      %1425 = vmatprep.subr.mxu0 0.0
      %1426 = vmatpush1.msra.mxu0 0.0
      %1427 = vmatprep.subr.mxu0 0.0
      %1428 = vmatpush1.msra.mxu0 0.0
      %1429 = vmatprep.subr.mxu0 0.0
      %1430 = vmatpush1.msra.mxu0 0.0
      %1431 = vmatprep.subr.mxu0 0.0
      %1432 = vmatpush1.msra.mxu0 0.0
      %1433 = vmatprep.subr.mxu0 0.0
      %1434 = vmatpush1.msra.mxu0 0.0
      %1435 = vmatprep.subr.mxu0 0.0
      %1436 = vmatpush1.msra.mxu0 0.0
      %1437 = vmatprep.subr.mxu0 0.0
      %1438 = vmatpush1.msra.mxu0 0.0
      %1439 = vmatprep.subr.mxu0 0.0
      %1440 = vmatpush1.msra.mxu0 0.0
      %1441 = vmatprep.subr.mxu0 0.0
      %1442 = vmatpush1.msra.mxu0 0.0
      %1443 = vmatprep.subr.mxu0 0.0
      %1444 = vmatpush1.msra.mxu0 0.0
      %1445 = vmatprep.mubr.f32.mxu0 0.0
      %1446 = vmatmul.mubr.f32.gmra.mrb[0].mxu0 %v1379
      %v1447 = vpop.f32.mrb[0].mxu0
      %v1448 = vadd.f32 0.0, %v1447
      %v1449 = vpop.f32.mrb[0].mxu0
      %v1450 = vadd.f32 0.0, %v1449
      %1451 = vdwg.mxu0
      %v1453 = vrot.slane %v1448, 4
      %v1455 = vadd.f32 %v611, %v1453
      %v1456 = vadd.f32 %v607, %v1450
      %v1457 = vxor.u32 %v1455, 2147483648
      %v1458 = vmul.f32 %v1457, 1.442695
      %v1459 = vpow.pop %v1458
      %v1460 = vadd.f32 %v1459, 1.0
      %v1461 = vrcp.pop %v1460
      %v1462 = vmul.f32 1.0, %v1461
      %v1463 = vxor.u32 %v1456, 2147483648
      %v1464 = vmul.f32 %v1463, 1.442695
      %v1465 = vpow.pop %v1464
      %v1466 = vadd.f32 %v1465, 1.0
      %v1467 = vrcp.pop %v1466
      %v1468 = vmul.f32 1.0, %v1467
      %v1469 = vtanh.pop %v1455
      %v1470 = vtanh.pop %v1456
      %v1472 = vrot.slane %v1336, 4
      %v1474 = vmul.f32 %v1462, %v1472
      %1476 = vrot.lane.b32.xlu0 %v1469, 32
      %v1477 = vpop.permute.xlu0 %1476
      %v1479 = vmul.f32 %v1462, %v1477
      %1481 = vrot.lane.b32.xlu0 %v1479, 32
      %v1482 = vpop.permute.xlu0 %1481
      %v1484 = vadd.f32 %v1474, %v1482
      %v1486 = vrot.slane %v1350, 4
      %v1488 = vmul.f32 %v1468, %v1486
      %1490 = vrot.lane.b32.xlu0 %v1470, 32
      %v1491 = vpop.permute.xlu0 %1490
      %v1493 = vmul.f32 %v1468, %v1491
      %1495 = vrot.lane.b32.xlu0 %v1493, 32
      %v1496 = vpop.permute.xlu0 %1495
      %v1498 = vadd.f32 %v1488, %v1496
      %v1499 = vtanh.pop %v1484
      %1501 = vrot.lane.b32.xlu0 %v1499, 32
      %v1502 = vpop.permute.xlu0 %1501
      %v1504 = vmul.f32 %v1462, %v1502
      %v1505 = vtanh.pop %v1498
      %1507 = vrot.lane.b32.xlu0 %v1505, 32
      %v1508 = vpop.permute.xlu0 %1507
      %v1510 = vmul.f32 %v1468, %v1508
      %1512 = vrot.lane.b32.xlu0 %v1504, 64
      %v1513 = vpop.permute.xlu0 %1512
      %v1516 = vrot.slane %v1510, 4
      %1517 = vrot.lane.b32.xlu0 %v1516, 96
      %v1518 = vpop.permute.xlu0 %1517
      %v1520 = vsel %vm519, %v1513, %v1518
      %1521 = vst.msk [vmem:[#allocation2 + $0x10] sm:$0xf0] %vm925, %v1513
      %1522 = vrot.lane.b32.xlu0 %v1510, 96
      %v1523 = vpop.permute.xlu0 %1522
      %1525 = vst.msk [vmem:[#allocation2 + $0x8] sm:$0xf] %vm930, %v1523
      %v1527 = vrot.slane %v1520, 4
      %v1528 = vsel %vm637, %v1527, 0
      %1530 = vmatprep.subr.mxu0 %v622
      %1531 = vmatpush1.msra.mxu0 %v621
      %1532 = vmatprep.subr.mxu0 %v624
      %1533 = vmatpush1.msra.mxu0 %v623
      %1534 = vmatprep.subr.mxu0 %v626
      %1535 = vmatpush1.msra.mxu0 %v625
      %1536 = vmatprep.subr.mxu0 %v628
      %1537 = vmatpush1.msra.mxu0 %v627
      %1538 = vmatprep.subr.mxu0 %v630
      %1539 = vmatpush1.msra.mxu0 %v629
      %1540 = vmatprep.subr.mxu0 %v632
      %1541 = vmatpush1.msra.mxu0 %v631
      %1542 = vmatprep.subr.mxu0 %v634
      %1543 = vmatpush1.msra.mxu0 %v633
      %1544 = vmatprep.subr.mxu0 %v636
      %1545 = vmatpush1.msra.mxu0 %v635
      %1546 = vmatprep.subr.mxu0 0.0
      %1547 = vmatpush1.msra.mxu0 0.0
      %1548 = vmatprep.subr.mxu0 0.0
      %1549 = vmatpush1.msra.mxu0 0.0
      %1550 = vmatprep.subr.mxu0 0.0
      %1551 = vmatpush1.msra.mxu0 0.0
      %1552 = vmatprep.subr.mxu0 0.0
      %1553 = vmatpush1.msra.mxu0 0.0
      %1554 = vmatprep.subr.mxu0 0.0
      %1555 = vmatpush1.msra.mxu0 0.0
      %1556 = vmatprep.subr.mxu0 0.0
      %1557 = vmatpush1.msra.mxu0 0.0
      %1558 = vmatprep.subr.mxu0 0.0
      %1559 = vmatpush1.msra.mxu0 0.0
      %1560 = vmatprep.subr.mxu0 0.0
      %1561 = vmatpush1.msra.mxu0 0.0
      %1562 = vmatprep.subr.mxu0 0.0
      %1563 = vmatpush1.msra.mxu0 0.0
      %1564 = vmatprep.subr.mxu0 0.0
      %1565 = vmatpush1.msra.mxu0 0.0
      %1566 = vmatprep.subr.mxu0 0.0
      %1567 = vmatpush1.msra.mxu0 0.0
      %1568 = vmatprep.subr.mxu0 0.0
      %1569 = vmatpush1.msra.mxu0 0.0
      %1570 = vmatprep.subr.mxu0 0.0
      %1571 = vmatpush1.msra.mxu0 0.0
      %1572 = vmatprep.subr.mxu0 0.0
      %1573 = vmatpush1.msra.mxu0 0.0
      %1574 = vmatprep.subr.mxu0 0.0
      %1575 = vmatpush1.msra.mxu0 0.0
      %1576 = vmatprep.subr.mxu0 0.0
      %1577 = vmatpush1.msra.mxu0 0.0
      %1578 = vmatprep.subr.mxu0 0.0
      %1579 = vmatpush1.msra.mxu0 0.0
      %1580 = vmatprep.subr.mxu0 0.0
      %1581 = vmatpush1.msra.mxu0 0.0
      %1582 = vmatprep.subr.mxu0 0.0
      %1583 = vmatpush1.msra.mxu0 0.0
      %1584 = vmatprep.subr.mxu0 0.0
      %1585 = vmatpush1.msra.mxu0 0.0
      %1586 = vmatprep.subr.mxu0 0.0
      %1587 = vmatpush1.msra.mxu0 0.0
      %1588 = vmatprep.subr.mxu0 0.0
      %1589 = vmatpush1.msra.mxu0 0.0
      %1590 = vmatprep.subr.mxu0 0.0
      %1591 = vmatpush1.msra.mxu0 0.0
      %1592 = vmatprep.subr.mxu0 0.0
      %1593 = vmatpush1.msra.mxu0 0.0
      %1594 = vmatprep.mubr.f32.mxu0 0.0
      %1595 = vmatmul.mubr.f32.gmra.mrb[0].mxu0 %v1528
      %v1596 = vpop.f32.mrb[0].mxu0
      %v1597 = vadd.f32 0.0, %v1596
      %v1598 = vpop.f32.mrb[0].mxu0
      %v1599 = vadd.f32 0.0, %v1598
      %1600 = vdwg.mxu0
      %v1601 = vadd.f32 %v617, %v1597
      %v1603 = vrot.slane %v1599, 4
      %v1605 = vadd.f32 %v601, %v1603
      %v1606 = vxor.u32 %v1601, 2147483648
      %v1607 = vmul.f32 %v1606, 1.442695
      %v1608 = vpow.pop %v1607
      %v1609 = vadd.f32 %v1608, 1.0
      %v1610 = vrcp.pop %v1609
      %v1611 = vmul.f32 1.0, %v1610
      %v1612 = vxor.u32 %v1605, 2147483648
      %v1613 = vmul.f32 %v1612, 1.442695
      %v1614 = vpow.pop %v1613
      %v1615 = vadd.f32 %v1614, 1.0
      %v1616 = vrcp.pop %v1615
      %v1617 = vmul.f32 1.0, %v1616
      %v1618 = vtanh.pop %v1601
      %v1619 = vtanh.pop %v1605
      %v1621 = vrot.slane %v1484, 4
      %v1623 = vmul.f32 %v1611, %v1621
      %1625 = vrot.lane.b32.xlu0 %v1618, 32
      %v1626 = vpop.permute.xlu0 %1625
      %v1628 = vmul.f32 %v1611, %v1626
      %1630 = vrot.lane.b32.xlu0 %v1628, 32
      %v1631 = vpop.permute.xlu0 %1630
      %v1633 = vadd.f32 %v1623, %v1631
      %v1635 = vrot.slane %v1498, 4
      %v1637 = vmul.f32 %v1617, %v1635
      %1639 = vrot.lane.b32.xlu0 %v1619, 32
      %v1640 = vpop.permute.xlu0 %1639
      %v1642 = vmul.f32 %v1617, %v1640
      %1644 = vrot.lane.b32.xlu0 %v1642, 32
      %v1645 = vpop.permute.xlu0 %1644
      %v1647 = vadd.f32 %v1637, %v1645
      %v1648 = vtanh.pop %v1633
      %1650 = vrot.lane.b32.xlu0 %v1648, 32
      %v1651 = vpop.permute.xlu0 %1650
      %v1653 = vmul.f32 %v1611, %v1651
      %v1654 = vtanh.pop %v1647
      %1656 = vrot.lane.b32.xlu0 %v1654, 32
      %v1657 = vpop.permute.xlu0 %1656
      %v1659 = vmul.f32 %v1617, %v1657
      %1661 = vrot.lane.b32.xlu0 %v1653, 64
      %v1662 = vpop.permute.xlu0 %1661
      %v1665 = vrot.slane %v1659, 4
      %1666 = vrot.lane.b32.xlu0 %v1665, 96
      %v1667 = vpop.permute.xlu0 %1666
      %v1669 = vsel %vm519, %v1662, %v1667
      %1670 = vst.msk [vmem:[#allocation2 + $0x18] sm:$0xf] %vm775, %v1662
      %1671 = vrot.lane.b32.xlu0 %v1659, 96
      %v1672 = vpop.permute.xlu0 %1671
      %1674 = vst.msk [vmem:[#allocation2] sm:$0xf0] %vm780, %v1672
      %v1676 = vsel %vm637, %v1669, 0
      %1678 = vmatprep.subr.mxu0 %v622
      %1679 = vmatpush1.msra.mxu0 %v621
      %1680 = vmatprep.subr.mxu0 %v624
      %1681 = vmatpush1.msra.mxu0 %v623
      %1682 = vmatprep.subr.mxu0 %v626
      %1683 = vmatpush1.msra.mxu0 %v625
      %1684 = vmatprep.subr.mxu0 %v628
      %1685 = vmatpush1.msra.mxu0 %v627
      %1686 = vmatprep.subr.mxu0 %v630
      %1687 = vmatpush1.msra.mxu0 %v629
      %1688 = vmatprep.subr.mxu0 %v632
      %1689 = vmatpush1.msra.mxu0 %v631
      %1690 = vmatprep.subr.mxu0 %v634
      %1691 = vmatpush1.msra.mxu0 %v633
      %1692 = vmatprep.subr.mxu0 %v636
      %1693 = vmatpush1.msra.mxu0 %v635
      %1694 = vmatprep.subr.mxu0 0.0
      %1695 = vmatpush1.msra.mxu0 0.0
      %1696 = vmatprep.subr.mxu0 0.0
      %1697 = vmatpush1.msra.mxu0 0.0
      %1698 = vmatprep.subr.mxu0 0.0
      %1699 = vmatpush1.msra.mxu0 0.0
      %1700 = vmatprep.subr.mxu0 0.0
      %1701 = vmatpush1.msra.mxu0 0.0
      %1702 = vmatprep.subr.mxu0 0.0
      %1703 = vmatpush1.msra.mxu0 0.0
      %1704 = vmatprep.subr.mxu0 0.0
      %1705 = vmatpush1.msra.mxu0 0.0
      %1706 = vmatprep.subr.mxu0 0.0
      %1707 = vmatpush1.msra.mxu0 0.0
      %1708 = vmatprep.subr.mxu0 0.0
      %1709 = vmatpush1.msra.mxu0 0.0
      %1710 = vmatprep.subr.mxu0 0.0
      %1711 = vmatpush1.msra.mxu0 0.0
      %1712 = vmatprep.subr.mxu0 0.0
      %1713 = vmatpush1.msra.mxu0 0.0
      %1714 = vmatprep.subr.mxu0 0.0
      %1715 = vmatpush1.msra.mxu0 0.0
      %1716 = vmatprep.subr.mxu0 0.0
      %1717 = vmatpush1.msra.mxu0 0.0
      %1718 = vmatprep.subr.mxu0 0.0
      %1719 = vmatpush1.msra.mxu0 0.0
      %1720 = vmatprep.subr.mxu0 0.0
      %1721 = vmatpush1.msra.mxu0 0.0
      %1722 = vmatprep.subr.mxu0 0.0
      %1723 = vmatpush1.msra.mxu0 0.0
      %1724 = vmatprep.subr.mxu0 0.0
      %1725 = vmatpush1.msra.mxu0 0.0
      %1726 = vmatprep.subr.mxu0 0.0
      %1727 = vmatpush1.msra.mxu0 0.0
      %1728 = vmatprep.subr.mxu0 0.0
      %1729 = vmatpush1.msra.mxu0 0.0
      %1730 = vmatprep.subr.mxu0 0.0
      %1731 = vmatpush1.msra.mxu0 0.0
      %1732 = vmatprep.subr.mxu0 0.0
      %1733 = vmatpush1.msra.mxu0 0.0
      %1734 = vmatprep.subr.mxu0 0.0
      %1735 = vmatpush1.msra.mxu0 0.0
      %1736 = vmatprep.subr.mxu0 0.0
      %1737 = vmatpush1.msra.mxu0 0.0
      %1738 = vmatprep.subr.mxu0 0.0
      %1739 = vmatpush1.msra.mxu0 0.0
      %1740 = vmatprep.subr.mxu0 0.0
      %1741 = vmatpush1.msra.mxu0 0.0
      %1742 = vmatprep.mubr.f32.mxu0 0.0
      %1743 = vmatmul.mubr.f32.gmra.mrb[0].mxu0 %v1676
      %v1744 = vpop.f32.mrb[0].mxu0
      %v1745 = vadd.f32 0.0, %v1744
      %v1746 = vpop.f32.mrb[0].mxu0
      %v1747 = vadd.f32 0.0, %v1746
      %1748 = vdwg.mxu0
      %v1750 = vrot.slane %v1745, 4
      %v1752 = vadd.f32 %v617, %v1750
      %v1753 = vadd.f32 %v601, %v1747
      %v1754 = vxor.u32 %v1752, 2147483648
      %v1755 = vmul.f32 %v1754, 1.442695
      %v1756 = vpow.pop %v1755
      %v1757 = vadd.f32 %v1756, 1.0
      %v1758 = vrcp.pop %v1757
      %v1759 = vmul.f32 1.0, %v1758
      %v1760 = vxor.u32 %v1753, 2147483648
      %v1761 = vmul.f32 %v1760, 1.442695
      %v1762 = vpow.pop %v1761
      %v1763 = vadd.f32 %v1762, 1.0
      %v1764 = vrcp.pop %v1763
      %v1765 = vmul.f32 1.0, %v1764
      %v1766 = vtanh.pop %v1752
      %v1767 = vtanh.pop %v1753
      %v1769 = vrot.slane %v1633, 4
      %v1771 = vmul.f32 %v1759, %v1769
      %1773 = vrot.lane.b32.xlu0 %v1766, 32
      %v1774 = vpop.permute.xlu0 %1773
      %v1776 = vmul.f32 %v1759, %v1774
      %1778 = vrot.lane.b32.xlu0 %v1776, 32
      %v1779 = vpop.permute.xlu0 %1778
      %v1781 = vadd.f32 %v1771, %v1779
      %v1783 = vrot.slane %v1647, 4
      %v1785 = vmul.f32 %v1765, %v1783
      %1787 = vrot.lane.b32.xlu0 %v1767, 32
      %v1788 = vpop.permute.xlu0 %1787
      %v1790 = vmul.f32 %v1765, %v1788
      %1792 = vrot.lane.b32.xlu0 %v1790, 32
      %v1793 = vpop.permute.xlu0 %1792
      %v1795 = vadd.f32 %v1785, %v1793
      %v1796 = vtanh.pop %v1781
      %1798 = vrot.lane.b32.xlu0 %v1796, 32
      %v1799 = vpop.permute.xlu0 %1798
      %v1801 = vmul.f32 %v1759, %v1799
      %v1802 = vtanh.pop %v1795
      %1804 = vrot.lane.b32.xlu0 %v1802, 32
      %v1805 = vpop.permute.xlu0 %1804
      %v1807 = vmul.f32 %v1765, %v1805
      %1809 = vrot.lane.b32.xlu0 %v1801, 64
      %v1810 = vpop.permute.xlu0 %1809
      %1812 = vst.msk [vmem:[#allocation2 + $0x18] sm:$0xf0] %vm925, %v1810
      %1814 = vrot.lane.b32.xlu0 %v1807, 96
      %v1815 = vpop.permute.xlu0 %1814
      %1817 = vst.msk [vmem:[#allocation2] sm:$0xf] %vm930, %v1815
      %v1818 = vld [vmem:[#allocation2] sm:$0xff]
      %v1819 = vld [vmem:[#allocation2 + $0x8] sm:$0xff]
      %v1820 = vld [vmem:[#allocation2 + $0x10] sm:$0xff]
      %v1821 = vld [vmem:[#allocation2 + $0x18] sm:$0xff]
      %v1822 = vsel %vm637, %v1818, 0.0
      %1823 = vadd.xlane.f32.xlu0 %v1822
      %v1824 = vpop.xlane.xlu0 %1823
      %v1825 = vsel %vm637, %v1819, 0.0
      %1826 = vadd.xlane.f32.xlu0 %v1825
      %v1827 = vpop.xlane.xlu0 %1826
      %v1828 = vsel %vm637, %v1820, 0.0
      %1829 = vadd.xlane.f32.xlu0 %v1828
      %v1830 = vpop.xlane.xlu0 %1829
      %v1831 = vsel %vm637, %v1821, 0.0
      %1832 = vadd.xlane.f32.xlu0 %v1831
      %v1833 = vpop.xlane.xlu0 %1832
      %v1834 = vrcp.pop 64.0
      %v1835 = vmul.f32 %v1824, %v1834
      %v1836 = vmul.f32 %v1827, %v1834
      %v1837 = vmul.f32 %v1830, %v1834
      %v1838 = vmul.f32 %v1833, %v1834
      %v1839 = vsub.f32 %v1818, %v1835
      %v1840 = vsub.f32 %v1819, %v1836
      %v1841 = vsub.f32 %v1820, %v1837
      %v1842 = vsub.f32 %v1821, %v1838
      %v1843 = vmul.f32 %v1839, %v1839
      %v1844 = vmul.f32 %v1840, %v1840
      %v1845 = vmul.f32 %v1841, %v1841
      %v1846 = vmul.f32 %v1842, %v1842
      %v1847 = vsel %vm637, %v1843, 0.0
      %1848 = vadd.xlane.f32.xlu0 %v1847
      %v1849 = vpop.xlane.xlu0 %1848
      %v1850 = vsel %vm637, %v1844, 0.0
      %1851 = vadd.xlane.f32.xlu0 %v1850
      %v1852 = vpop.xlane.xlu0 %1851
      %v1853 = vsel %vm637, %v1845, 0.0
      %1854 = vadd.xlane.f32.xlu0 %v1853
      %v1855 = vpop.xlane.xlu0 %1854
      %v1856 = vsel %vm637, %v1846, 0.0
      %1857 = vadd.xlane.f32.xlu0 %v1856
      %v1858 = vpop.xlane.xlu0 %1857
      %v1859 = vmul.f32 %v1849, %v1834
      %v1860 = vmul.f32 %v1852, %v1834
      %v1861 = vmul.f32 %v1855, %v1834
      %v1862 = vmul.f32 %v1858, %v1834
      %v1863 = vadd.f32 %v1859, 1e-05
      %v1864 = vadd.f32 %v1860, 1e-05
      %v1865 = vadd.f32 %v1861, 1e-05
      %v1866 = vadd.f32 %v1862, 1e-05
      %v1867 = vrsqrt.pop %v1863
      %v1868 = vrsqrt.pop %v1864
      %v1869 = vrsqrt.pop %v1865
      %v1870 = vrsqrt.pop %v1866
      %v1871 = vmul.f32 %v1839, %v1867
      %v1872 = vmul.f32 %v1840, %v1868
      %v1873 = vmul.f32 %v1841, %v1869
      %v1874 = vmul.f32 %v1842, %v1870
      %v1875 = vld [vmem:[%s5] sm:$0x1]
      %v1877 = vlaneseq
      %v1878 = vshrl.u32 %v1877, 7
      %v1879 = vsub.s32 0, %v1878
      %v1880 = vrot.slane %v1875, %v1879
      %v1882 = vmul.f32 %v1871, %v1880
      %v1883 = vmul.f32 %v1872, %v1880
      %v1884 = vmul.f32 %v1873, %v1880
      %v1885 = vmul.f32 %v1874, %v1880
      %v1886 = vld [vmem:[%s6] sm:$0x1]
      %v1888 = vlaneseq
      %v1889 = vshrl.u32 %v1888, 7
      %v1890 = vsub.s32 0, %v1889
      %v1891 = vrot.slane %v1886, %v1890
      %v1893 = vadd.f32 %v1882, %v1891
      %v1894 = vadd.f32 %v1883, %v1891
      %v1895 = vadd.f32 %v1884, %v1891
      %v1896 = vadd.f32 %v1885, %v1891
      %v1897 = vld [vmem:[%s7] sm:$0xff]
      %v1898 = vld [vmem:[%s7 + $0x8] sm:$0xff]
      %v1899 = vld [vmem:[%s7 + $0x10] sm:$0xff]
      %v1900 = vld [vmem:[%s7 + $0x18] sm:$0xff]
      %v1901 = vld [vmem:[%s7 + $0x20] sm:$0xff]
      %v1902 = vld [vmem:[%s7 + $0x28] sm:$0xff]
      %v1903 = vld [vmem:[%s7 + $0x30] sm:$0xff]
      %v1904 = vld [vmem:[%s7 + $0x38] sm:$0xff]
      %v1905 = vld [vmem:[%s7 + $0x40] sm:$0xff]
      %v1906 = vld [vmem:[%s7 + $0x48] sm:$0xff]
      %v1907 = vld [vmem:[%s7 + $0x50] sm:$0xff]
      %v1908 = vld [vmem:[%s7 + $0x58] sm:$0xff]
      %v1909 = vld [vmem:[%s7 + $0x60] sm:$0xff]
      %v1910 = vld [vmem:[%s7 + $0x68] sm:$0xff]
      %v1911 = vld [vmem:[%s7 + $0x70] sm:$0xff]
      %v1912 = vld [vmem:[%s7 + $0x78] sm:$0xff]
      %v1913 = vld [vmem:[%s8] sm:$0x3]
      %v1915 = vlaneseq
      %v1916 = vshrl.u32 %v1915, 7
      %v1917 = vsub.s32 0, %v1916
      %v1918 = vrot.slane %v1913, %v1917
      %v1919 = vlaneseq
      %v1920 = vshrl.u32 %v1919, 7
      %v1921 = vsub.s32 1, %v1920
      %v1922 = vrot.slane %v1913, %v1921
      %v1926 = vsel %vm637, %v1893, 0
      %v1929 = vsel %vm637, %v1894, 0
      %v1932 = vsel %vm637, %v1895, 0
      %v1935 = vsel %vm637, %v1896, 0
      %1937 = vmatprep.subr.mxu0 %v1898
      %1938 = vmatpush1.msra.mxu0 %v1897
      %1939 = vmatprep.subr.mxu0 %v1900
      %1940 = vmatpush1.msra.mxu0 %v1899
      %1941 = vmatprep.subr.mxu0 %v1902
      %1942 = vmatpush1.msra.mxu0 %v1901
      %1943 = vmatprep.subr.mxu0 %v1904
      %1944 = vmatpush1.msra.mxu0 %v1903
      %1945 = vmatprep.subr.mxu0 %v1906
      %1946 = vmatpush1.msra.mxu0 %v1905
      %1947 = vmatprep.subr.mxu0 %v1908
      %1948 = vmatpush1.msra.mxu0 %v1907
      %1949 = vmatprep.subr.mxu0 %v1910
      %1950 = vmatpush1.msra.mxu0 %v1909
      %1951 = vmatprep.subr.mxu0 %v1912
      %1952 = vmatpush1.msra.mxu0 %v1911
      %1953 = vmatprep.subr.mxu0 0.0
      %1954 = vmatpush1.msra.mxu0 0.0
      %1955 = vmatprep.subr.mxu0 0.0
      %1956 = vmatpush1.msra.mxu0 0.0
      %1957 = vmatprep.subr.mxu0 0.0
      %1958 = vmatpush1.msra.mxu0 0.0
      %1959 = vmatprep.subr.mxu0 0.0
      %1960 = vmatpush1.msra.mxu0 0.0
      %1961 = vmatprep.subr.mxu0 0.0
      %1962 = vmatpush1.msra.mxu0 0.0
      %1963 = vmatprep.subr.mxu0 0.0
      %1964 = vmatpush1.msra.mxu0 0.0
      %1965 = vmatprep.subr.mxu0 0.0
      %1966 = vmatpush1.msra.mxu0 0.0
      %1967 = vmatprep.subr.mxu0 0.0
      %1968 = vmatpush1.msra.mxu0 0.0
      %1969 = vmatprep.subr.mxu0 0.0
      %1970 = vmatpush1.msra.mxu0 0.0
      %1971 = vmatprep.subr.mxu0 0.0
      %1972 = vmatpush1.msra.mxu0 0.0
      %1973 = vmatprep.subr.mxu0 0.0
      %1974 = vmatpush1.msra.mxu0 0.0
      %1975 = vmatprep.subr.mxu0 0.0
      %1976 = vmatpush1.msra.mxu0 0.0
      %1977 = vmatprep.subr.mxu0 0.0
      %1978 = vmatpush1.msra.mxu0 0.0
      %1979 = vmatprep.subr.mxu0 0.0
      %1980 = vmatpush1.msra.mxu0 0.0
      %1981 = vmatprep.subr.mxu0 0.0
      %1982 = vmatpush1.msra.mxu0 0.0
      %1983 = vmatprep.subr.mxu0 0.0
      %1984 = vmatpush1.msra.mxu0 0.0
      %1985 = vmatprep.subr.mxu0 0.0
      %1986 = vmatpush1.msra.mxu0 0.0
      %1987 = vmatprep.subr.mxu0 0.0
      %1988 = vmatpush1.msra.mxu0 0.0
      %1989 = vmatprep.subr.mxu0 0.0
      %1990 = vmatpush1.msra.mxu0 0.0
      %1991 = vmatprep.subr.mxu0 0.0
      %1992 = vmatpush1.msra.mxu0 0.0
      %1993 = vmatprep.subr.mxu0 0.0
      %1994 = vmatpush1.msra.mxu0 0.0
      %1995 = vmatprep.subr.mxu0 0.0
      %1996 = vmatpush1.msra.mxu0 0.0
      %1997 = vmatprep.subr.mxu0 0.0
      %1998 = vmatpush1.msra.mxu0 0.0
      %1999 = vmatprep.subr.mxu0 0.0
      %2000 = vmatpush1.msra.mxu0 0.0
      %2001 = vmatprep.mubr.f32.mxu0 0.0
      %2002 = vmatmul.mubr.f32.gmra.mrb[0].mxu0 %v1926
      %v2003 = vpop.f32.mrb[0].mxu0
      %v2004 = vadd.f32 %v1918, %v2003
      %v2005 = vpop.f32.mrb[0].mxu0
      %v2006 = vadd.f32 %v1922, %v2005
      %2007 = vmatprep.mubr.f32.mxu0 0.0
      %2008 = vmatmul.mubr.f32.gmra.mrb[0].mxu0 %v1929
      %v2009 = vpop.f32.mrb[0].mxu0
      %v2010 = vadd.f32 %v1918, %v2009
      %v2011 = vpop.f32.mrb[0].mxu0
      %v2012 = vadd.f32 %v1922, %v2011
      %2013 = vmatprep.mubr.f32.mxu0 0.0
      %2014 = vmatmul.mubr.f32.gmra.mrb[0].mxu0 %v1932
      %v2015 = vpop.f32.mrb[0].mxu0
      %v2016 = vadd.f32 %v1918, %v2015
      %v2017 = vpop.f32.mrb[0].mxu0
      %v2018 = vadd.f32 %v1922, %v2017
      %2019 = vmatprep.mubr.f32.mxu0 0.0
      %2020 = vmatmul.mubr.f32.gmra.mrb[0].mxu0 %v1935
      %v2021 = vpop.f32.mrb[0].mxu0
      %v2022 = vadd.f32 %v1918, %v2021
      %v2023 = vpop.f32.mrb[0].mxu0
      %v2024 = vadd.f32 %v1922, %v2023
      %2025 = vdwg.mxu0
      %s2026 = smul.u32 %s26, 32
      %s2027 = scalar_lea.vmem %s1, %s2026
      %v2028 = vld [vmem:[%s2027] sm:$0xff]
      %v2029 = vld [vmem:[%s2027 + $0x8] sm:$0xff]
      %v2030 = vld [vmem:[%s2027 + $0x10] sm:$0xff]
      %v2031 = vld [vmem:[%s2027 + $0x18] sm:$0xff]
      %v2032 = vmul.f32 %v2004, 0.25
      %v2033 = vmul.f32 %v2010, 0.25
      %v2034 = vmul.f32 %v2016, 0.25
      %v2035 = vmul.f32 %v2022, 0.25
      %2040 = vrot.lane.b32.xlu0 %v2004, 64
      %v2041 = vpop.permute.xlu0 %2040
      %2042 = vrot.lane.b32.xlu0 %v2010, 64
      %v2043 = vpop.permute.xlu0 %2042
      %2044 = vrot.lane.b32.xlu0 %v2016, 64
      %v2045 = vpop.permute.xlu0 %2044
      %2046 = vrot.lane.b32.xlu0 %v2022, 64
      %v2047 = vpop.permute.xlu0 %2046
      %vm2048 = vcmask 130048
      %v2050 = vsel %vm2048, %v2032, 0
      %v2053 = vsel %vm2048, %v2033, 0
      %v2056 = vsel %vm2048, %v2034, 0
      %v2059 = vsel %vm2048, %v2035, 0
      %v2061 = vsel %vm2048, %v2041, 0
      %v2063 = vsel %vm2048, %v2043, 0
      %v2065 = vsel %vm2048, %v2045, 0
      %v2067 = vsel %vm2048, %v2047, 0
      %2069 = vmatprep.subr.mxu0 0.0
      %2070 = vmatpush1.xpose.msra.mxu0 %v2061
      %2071 = vmatprep.subr.mxu0 0.0
      %2072 = vmatpush1.xpose.msra.mxu0 %v2063
      %2073 = vmatprep.subr.mxu0 0.0
      %2074 = vmatpush1.xpose.msra.mxu0 %v2065
      %2075 = vmatprep.subr.mxu0 0.0
      %2076 = vmatpush1.xpose.msra.mxu0 %v2067
      %2077 = vmatprep.subr.mxu0 0.0
      %2078 = vmatpush1.xpose.msra.mxu0 0.0
      %2079 = vmatprep.subr.mxu0 0.0
      %2080 = vmatpush1.xpose.msra.mxu0 0.0
      %2081 = vmatprep.subr.mxu0 0.0
      %2082 = vmatpush1.xpose.msra.mxu0 0.0
      %2083 = vmatprep.subr.mxu0 0.0
      %2084 = vmatpush1.xpose.msra.mxu0 0.0
      %2085 = vmatprep.subr.mxu0 0.0
      %2086 = vmatpush1.xpose.msra.mxu0 0.0
      %2087 = vmatprep.subr.mxu0 0.0
      %2088 = vmatpush1.xpose.msra.mxu0 0.0
      %2089 = vmatprep.subr.mxu0 0.0
      %2090 = vmatpush1.xpose.msra.mxu0 0.0
      %2091 = vmatprep.subr.mxu0 0.0
      %2092 = vmatpush1.xpose.msra.mxu0 0.0
      %2093 = vmatprep.subr.mxu0 0.0
      %2094 = vmatpush1.xpose.msra.mxu0 0.0
      %2095 = vmatprep.subr.mxu0 0.0
      %2096 = vmatpush1.xpose.msra.mxu0 0.0
      %2097 = vmatprep.subr.mxu0 0.0
      %2098 = vmatpush1.xpose.msra.mxu0 0.0
      %2099 = vmatprep.subr.mxu0 0.0
      %2100 = vmatpush1.xpose.msra.mxu0 0.0
      %2101 = vmatprep.subr.mxu0 0.0
      %2102 = vmatpush1.xpose.msra.mxu0 0.0
      %2103 = vmatprep.subr.mxu0 0.0
      %2104 = vmatpush1.xpose.msra.mxu0 0.0
      %2105 = vmatprep.subr.mxu0 0.0
      %2106 = vmatpush1.xpose.msra.mxu0 0.0
      %2107 = vmatprep.subr.mxu0 0.0
      %2108 = vmatpush1.xpose.msra.mxu0 0.0
      %2109 = vmatprep.subr.mxu0 0.0
      %2110 = vmatpush1.xpose.msra.mxu0 0.0
      %2111 = vmatprep.subr.mxu0 0.0
      %2112 = vmatpush1.xpose.msra.mxu0 0.0
      %2113 = vmatprep.subr.mxu0 0.0
      %2114 = vmatpush1.xpose.msra.mxu0 0.0
      %2115 = vmatprep.subr.mxu0 0.0
      %2116 = vmatpush1.xpose.msra.mxu0 0.0
      %2117 = vmatprep.subr.mxu0 0.0
      %2118 = vmatpush1.xpose.msra.mxu0 0.0
      %2119 = vmatprep.subr.mxu0 0.0
      %2120 = vmatpush1.xpose.msra.mxu0 0.0
      %2121 = vmatprep.subr.mxu0 0.0
      %2122 = vmatpush1.xpose.msra.mxu0 0.0
      %2123 = vmatprep.subr.mxu0 0.0
      %2124 = vmatpush1.xpose.msra.mxu0 0.0
      %2125 = vmatprep.subr.mxu0 0.0
      %2126 = vmatpush1.xpose.msra.mxu0 0.0
      %2127 = vmatprep.subr.mxu0 0.0
      %2128 = vmatpush1.xpose.msra.mxu0 0.0
      %2129 = vmatprep.subr.mxu0 0.0
      %2130 = vmatpush1.xpose.msra.mxu0 0.0
      %2131 = vmatprep.subr.mxu0 0.0
      %2132 = vmatpush1.xpose.msra.mxu0 0.0
      %2133 = vmatprep.mubr.f32.mxu0 0.0
      %2134 = vmatmul.mubr.f32.gmra.mrb[0].mxu0 %v2050
      %v2135 = vpop.f32.mrb[0].mxu0
      %v2136 = vadd.f32 %v2028, %v2135
      %v2137 = vpop.f32.mrb[0].mxu0
      %2138 = vmatprep.mubr.f32.mxu0 0.0
      %2139 = vmatmul.mubr.f32.gmra.mrb[0].mxu0 %v2053
      %v2140 = vpop.f32.mrb[0].mxu0
      %v2141 = vadd.f32 %v2029, %v2140
      %v2142 = vpop.f32.mrb[0].mxu0
      %2143 = vmatprep.mubr.f32.mxu0 0.0
      %2144 = vmatmul.mubr.f32.gmra.mrb[0].mxu0 %v2056
      %v2145 = vpop.f32.mrb[0].mxu0
      %v2146 = vadd.f32 %v2030, %v2145
      %v2147 = vpop.f32.mrb[0].mxu0
      %2148 = vmatprep.mubr.f32.mxu0 0.0
      %2149 = vmatmul.mubr.f32.gmra.mrb[0].mxu0 %v2059
      %v2150 = vpop.f32.mrb[0].mxu0
      %v2151 = vadd.f32 %v2031, %v2150
      %v2152 = vpop.f32.mrb[0].mxu0
      %2153 = vdwg.mxu0
      %2154 = vrot.lane.b32.xlu0 %v2032, 112
      %v2155 = vpop.permute.xlu0 %2154
      %2156 = vrot.lane.b32.xlu0 %v2033, 112
      %v2157 = vpop.permute.xlu0 %2156
      %2158 = vrot.lane.b32.xlu0 %v2034, 112
      %v2159 = vpop.permute.xlu0 %2158
      %2160 = vrot.lane.b32.xlu0 %v2035, 112
      %v2161 = vpop.permute.xlu0 %2160
      %2162 = vrot.lane.b32.xlu0 %v2004, 48
      %v2163 = vpop.permute.xlu0 %2162
      %2164 = vrot.lane.b32.xlu0 %v2010, 48
      %v2165 = vpop.permute.xlu0 %2164
      %2166 = vrot.lane.b32.xlu0 %v2016, 48
      %v2167 = vpop.permute.xlu0 %2166
      %2168 = vrot.lane.b32.xlu0 %v2022, 48
      %v2169 = vpop.permute.xlu0 %2168
      %v2170 = vsel %vm2048, %v2155, 0
      %v2172 = vsel %vm2048, %v2157, 0
      %v2174 = vsel %vm2048, %v2159, 0
      %v2176 = vsel %vm2048, %v2161, 0
      %v2178 = vsel %vm2048, %v2163, 0
      %v2180 = vsel %vm2048, %v2165, 0
      %v2182 = vsel %vm2048, %v2167, 0
      %v2184 = vsel %vm2048, %v2169, 0
      %2186 = vmatprep.subr.mxu0 0.0
      %2187 = vmatpush1.xpose.msra.mxu0 %v2178
      %2188 = vmatprep.subr.mxu0 0.0
      %2189 = vmatpush1.xpose.msra.mxu0 %v2180
      %2190 = vmatprep.subr.mxu0 0.0
      %2191 = vmatpush1.xpose.msra.mxu0 %v2182
      %2192 = vmatprep.subr.mxu0 0.0
      %2193 = vmatpush1.xpose.msra.mxu0 %v2184
      %2194 = vmatprep.subr.mxu0 0.0
      %2195 = vmatpush1.xpose.msra.mxu0 0.0
      %2196 = vmatprep.subr.mxu0 0.0
      %2197 = vmatpush1.xpose.msra.mxu0 0.0
      %2198 = vmatprep.subr.mxu0 0.0
      %2199 = vmatpush1.xpose.msra.mxu0 0.0
      %2200 = vmatprep.subr.mxu0 0.0
      %2201 = vmatpush1.xpose.msra.mxu0 0.0
      %2202 = vmatprep.subr.mxu0 0.0
      %2203 = vmatpush1.xpose.msra.mxu0 0.0
      %2204 = vmatprep.subr.mxu0 0.0
      %2205 = vmatpush1.xpose.msra.mxu0 0.0
      %2206 = vmatprep.subr.mxu0 0.0
      %2207 = vmatpush1.xpose.msra.mxu0 0.0
      %2208 = vmatprep.subr.mxu0 0.0
      %2209 = vmatpush1.xpose.msra.mxu0 0.0
      %2210 = vmatprep.subr.mxu0 0.0
      %2211 = vmatpush1.xpose.msra.mxu0 0.0
      %2212 = vmatprep.subr.mxu0 0.0
      %2213 = vmatpush1.xpose.msra.mxu0 0.0
      %2214 = vmatprep.subr.mxu0 0.0
      %2215 = vmatpush1.xpose.msra.mxu0 0.0
      %2216 = vmatprep.subr.mxu0 0.0
      %2217 = vmatpush1.xpose.msra.mxu0 0.0
      %2218 = vmatprep.subr.mxu0 0.0
      %2219 = vmatpush1.xpose.msra.mxu0 0.0
      %2220 = vmatprep.subr.mxu0 0.0
      %2221 = vmatpush1.xpose.msra.mxu0 0.0
      %2222 = vmatprep.subr.mxu0 0.0
      %2223 = vmatpush1.xpose.msra.mxu0 0.0
      %2224 = vmatprep.subr.mxu0 0.0
      %2225 = vmatpush1.xpose.msra.mxu0 0.0
      %2226 = vmatprep.subr.mxu0 0.0
      %2227 = vmatpush1.xpose.msra.mxu0 0.0
      %2228 = vmatprep.subr.mxu0 0.0
      %2229 = vmatpush1.xpose.msra.mxu0 0.0
      %2230 = vmatprep.subr.mxu0 0.0
      %2231 = vmatpush1.xpose.msra.mxu0 0.0
      %2232 = vmatprep.subr.mxu0 0.0
      %2233 = vmatpush1.xpose.msra.mxu0 0.0
      %2234 = vmatprep.subr.mxu0 0.0
      %2235 = vmatpush1.xpose.msra.mxu0 0.0
      %2236 = vmatprep.subr.mxu0 0.0
      %2237 = vmatpush1.xpose.msra.mxu0 0.0
      %2238 = vmatprep.subr.mxu0 0.0
      %2239 = vmatpush1.xpose.msra.mxu0 0.0
      %2240 = vmatprep.subr.mxu0 0.0
      %2241 = vmatpush1.xpose.msra.mxu0 0.0
      %2242 = vmatprep.subr.mxu0 0.0
      %2243 = vmatpush1.xpose.msra.mxu0 0.0
      %2244 = vmatprep.subr.mxu0 0.0
      %2245 = vmatpush1.xpose.msra.mxu0 0.0
      %2246 = vmatprep.subr.mxu0 0.0
      %2247 = vmatpush1.xpose.msra.mxu0 0.0
      %2248 = vmatprep.subr.mxu0 0.0
      %2249 = vmatpush1.xpose.msra.mxu0 0.0
      %2250 = vmatprep.mubr.f32.mxu0 0.0
      %2251 = vmatmul.mubr.f32.gmra.mrb[0].mxu0 %v2170
      %v2252 = vpop.f32.mrb[0].mxu0
      %v2253 = vadd.f32 %v2028, %v2252
      %v2254 = vpop.f32.mrb[0].mxu0
      %2255 = vmatprep.mubr.f32.mxu0 0.0
      %2256 = vmatmul.mubr.f32.gmra.mrb[0].mxu0 %v2172
      %v2257 = vpop.f32.mrb[0].mxu0
      %v2258 = vadd.f32 %v2029, %v2257
      %v2259 = vpop.f32.mrb[0].mxu0
      %2260 = vmatprep.mubr.f32.mxu0 0.0
      %2261 = vmatmul.mubr.f32.gmra.mrb[0].mxu0 %v2174
      %v2262 = vpop.f32.mrb[0].mxu0
      %v2263 = vadd.f32 %v2030, %v2262
      %v2264 = vpop.f32.mrb[0].mxu0
      %2265 = vmatprep.mubr.f32.mxu0 0.0
      %2266 = vmatmul.mubr.f32.gmra.mrb[0].mxu0 %v2176
      %v2267 = vpop.f32.mrb[0].mxu0
      %v2268 = vadd.f32 %v2031, %v2267
      %v2269 = vpop.f32.mrb[0].mxu0
      %2270 = vdwg.mxu0
      %2271 = vrot.lane.b32.xlu0 %v2032, 96
      %v2272 = vpop.permute.xlu0 %2271
      %2273 = vrot.lane.b32.xlu0 %v2033, 96
      %v2274 = vpop.permute.xlu0 %2273
      %2275 = vrot.lane.b32.xlu0 %v2034, 96
      %v2276 = vpop.permute.xlu0 %2275
      %2277 = vrot.lane.b32.xlu0 %v2035, 96
      %v2278 = vpop.permute.xlu0 %2277
      %2279 = vrot.lane.b32.xlu0 %v2004, 32
      %v2280 = vpop.permute.xlu0 %2279
      %2281 = vrot.lane.b32.xlu0 %v2010, 32
      %v2282 = vpop.permute.xlu0 %2281
      %2283 = vrot.lane.b32.xlu0 %v2016, 32
      %v2284 = vpop.permute.xlu0 %2283
      %2285 = vrot.lane.b32.xlu0 %v2022, 32
      %v2286 = vpop.permute.xlu0 %2285
      %v2287 = vsel %vm2048, %v2272, 0
      %v2289 = vsel %vm2048, %v2274, 0
      %v2291 = vsel %vm2048, %v2276, 0
      %v2293 = vsel %vm2048, %v2278, 0
      %v2295 = vsel %vm2048, %v2280, 0
      %v2297 = vsel %vm2048, %v2282, 0
      %v2299 = vsel %vm2048, %v2284, 0
      %v2301 = vsel %vm2048, %v2286, 0
      %2303 = vmatprep.subr.mxu0 0.0
      %2304 = vmatpush1.xpose.msra.mxu0 %v2295
      %2305 = vmatprep.subr.mxu0 0.0
      %2306 = vmatpush1.xpose.msra.mxu0 %v2297
      %2307 = vmatprep.subr.mxu0 0.0
      %2308 = vmatpush1.xpose.msra.mxu0 %v2299
      %2309 = vmatprep.subr.mxu0 0.0
      %2310 = vmatpush1.xpose.msra.mxu0 %v2301
      %2311 = vmatprep.subr.mxu0 0.0
      %2312 = vmatpush1.xpose.msra.mxu0 0.0
      %2313 = vmatprep.subr.mxu0 0.0
      %2314 = vmatpush1.xpose.msra.mxu0 0.0
      %2315 = vmatprep.subr.mxu0 0.0
      %2316 = vmatpush1.xpose.msra.mxu0 0.0
      %2317 = vmatprep.subr.mxu0 0.0
      %2318 = vmatpush1.xpose.msra.mxu0 0.0
      %2319 = vmatprep.subr.mxu0 0.0
      %2320 = vmatpush1.xpose.msra.mxu0 0.0
      %2321 = vmatprep.subr.mxu0 0.0
      %2322 = vmatpush1.xpose.msra.mxu0 0.0
      %2323 = vmatprep.subr.mxu0 0.0
      %2324 = vmatpush1.xpose.msra.mxu0 0.0
      %2325 = vmatprep.subr.mxu0 0.0
      %2326 = vmatpush1.xpose.msra.mxu0 0.0
      %2327 = vmatprep.subr.mxu0 0.0
      %2328 = vmatpush1.xpose.msra.mxu0 0.0
      %2329 = vmatprep.subr.mxu0 0.0
      %2330 = vmatpush1.xpose.msra.mxu0 0.0
      %2331 = vmatprep.subr.mxu0 0.0
      %2332 = vmatpush1.xpose.msra.mxu0 0.0
      %2333 = vmatprep.subr.mxu0 0.0
      %2334 = vmatpush1.xpose.msra.mxu0 0.0
      %2335 = vmatprep.subr.mxu0 0.0
      %2336 = vmatpush1.xpose.msra.mxu0 0.0
      %2337 = vmatprep.subr.mxu0 0.0
      %2338 = vmatpush1.xpose.msra.mxu0 0.0
      %2339 = vmatprep.subr.mxu0 0.0
      %2340 = vmatpush1.xpose.msra.mxu0 0.0
      %2341 = vmatprep.subr.mxu0 0.0
      %2342 = vmatpush1.xpose.msra.mxu0 0.0
      %2343 = vmatprep.subr.mxu0 0.0
      %2344 = vmatpush1.xpose.msra.mxu0 0.0
      %2345 = vmatprep.subr.mxu0 0.0
      %2346 = vmatpush1.xpose.msra.mxu0 0.0
      %2347 = vmatprep.subr.mxu0 0.0
      %2348 = vmatpush1.xpose.msra.mxu0 0.0
      %2349 = vmatprep.subr.mxu0 0.0
      %2350 = vmatpush1.xpose.msra.mxu0 0.0
      %2351 = vmatprep.subr.mxu0 0.0
      %2352 = vmatpush1.xpose.msra.mxu0 0.0
      %2353 = vmatprep.subr.mxu0 0.0
      %2354 = vmatpush1.xpose.msra.mxu0 0.0
      %2355 = vmatprep.subr.mxu0 0.0
      %2356 = vmatpush1.xpose.msra.mxu0 0.0
      %2357 = vmatprep.subr.mxu0 0.0
      %2358 = vmatpush1.xpose.msra.mxu0 0.0
      %2359 = vmatprep.subr.mxu0 0.0
      %2360 = vmatpush1.xpose.msra.mxu0 0.0
      %2361 = vmatprep.subr.mxu0 0.0
      %2362 = vmatpush1.xpose.msra.mxu0 0.0
      %2363 = vmatprep.subr.mxu0 0.0
      %2364 = vmatpush1.xpose.msra.mxu0 0.0
      %2365 = vmatprep.subr.mxu0 0.0
      %2366 = vmatpush1.xpose.msra.mxu0 0.0
      %2367 = vmatprep.mubr.f32.mxu0 0.0
      %2368 = vmatmul.mubr.f32.gmra.mrb[0].mxu0 %v2287
      %v2369 = vpop.f32.mrb[0].mxu0
      %v2370 = vadd.f32 %v2028, %v2369
      %v2371 = vpop.f32.mrb[0].mxu0
      %2372 = vmatprep.mubr.f32.mxu0 0.0
      %2373 = vmatmul.mubr.f32.gmra.mrb[0].mxu0 %v2289
      %v2374 = vpop.f32.mrb[0].mxu0
      %v2375 = vadd.f32 %v2029, %v2374
      %v2376 = vpop.f32.mrb[0].mxu0
      %2377 = vmatprep.mubr.f32.mxu0 0.0
      %2378 = vmatmul.mubr.f32.gmra.mrb[0].mxu0 %v2291
      %v2379 = vpop.f32.mrb[0].mxu0
      %v2380 = vadd.f32 %v2030, %v2379
      %v2381 = vpop.f32.mrb[0].mxu0
      %2382 = vmatprep.mubr.f32.mxu0 0.0
      %2383 = vmatmul.mubr.f32.gmra.mrb[0].mxu0 %v2293
      %v2384 = vpop.f32.mrb[0].mxu0
      %v2385 = vadd.f32 %v2031, %v2384
      %v2386 = vpop.f32.mrb[0].mxu0
      %2387 = vdwg.mxu0
      %2388 = vrot.lane.b32.xlu0 %v2032, 80
      %v2389 = vpop.permute.xlu0 %2388
      %2390 = vrot.lane.b32.xlu0 %v2033, 80
      %v2391 = vpop.permute.xlu0 %2390
      %2392 = vrot.lane.b32.xlu0 %v2034, 80
      %v2393 = vpop.permute.xlu0 %2392
      %2394 = vrot.lane.b32.xlu0 %v2035, 80
      %v2395 = vpop.permute.xlu0 %2394
      %2396 = vrot.lane.b32.xlu0 %v2004, 16
      %v2397 = vpop.permute.xlu0 %2396
      %2398 = vrot.lane.b32.xlu0 %v2010, 16
      %v2399 = vpop.permute.xlu0 %2398
      %2400 = vrot.lane.b32.xlu0 %v2016, 16
      %v2401 = vpop.permute.xlu0 %2400
      %2402 = vrot.lane.b32.xlu0 %v2022, 16
      %v2403 = vpop.permute.xlu0 %2402
      %v2404 = vsel %vm2048, %v2389, 0
      %v2406 = vsel %vm2048, %v2391, 0
      %v2408 = vsel %vm2048, %v2393, 0
      %v2410 = vsel %vm2048, %v2395, 0
      %v2412 = vsel %vm2048, %v2397, 0
      %v2414 = vsel %vm2048, %v2399, 0
      %v2416 = vsel %vm2048, %v2401, 0
      %v2418 = vsel %vm2048, %v2403, 0
      %2420 = vmatprep.subr.mxu0 0.0
      %2421 = vmatpush1.xpose.msra.mxu0 %v2412
      %2422 = vmatprep.subr.mxu0 0.0
      %2423 = vmatpush1.xpose.msra.mxu0 %v2414
      %2424 = vmatprep.subr.mxu0 0.0
      %2425 = vmatpush1.xpose.msra.mxu0 %v2416
      %2426 = vmatprep.subr.mxu0 0.0
      %2427 = vmatpush1.xpose.msra.mxu0 %v2418
      %2428 = vmatprep.subr.mxu0 0.0
      %2429 = vmatpush1.xpose.msra.mxu0 0.0
      %2430 = vmatprep.subr.mxu0 0.0
      %2431 = vmatpush1.xpose.msra.mxu0 0.0
      %2432 = vmatprep.subr.mxu0 0.0
      %2433 = vmatpush1.xpose.msra.mxu0 0.0
      %2434 = vmatprep.subr.mxu0 0.0
      %2435 = vmatpush1.xpose.msra.mxu0 0.0
      %2436 = vmatprep.subr.mxu0 0.0
      %2437 = vmatpush1.xpose.msra.mxu0 0.0
      %2438 = vmatprep.subr.mxu0 0.0
      %2439 = vmatpush1.xpose.msra.mxu0 0.0
      %2440 = vmatprep.subr.mxu0 0.0
      %2441 = vmatpush1.xpose.msra.mxu0 0.0
      %2442 = vmatprep.subr.mxu0 0.0
      %2443 = vmatpush1.xpose.msra.mxu0 0.0
      %2444 = vmatprep.subr.mxu0 0.0
      %2445 = vmatpush1.xpose.msra.mxu0 0.0
      %2446 = vmatprep.subr.mxu0 0.0
      %2447 = vmatpush1.xpose.msra.mxu0 0.0
      %2448 = vmatprep.subr.mxu0 0.0
      %2449 = vmatpush1.xpose.msra.mxu0 0.0
      %2450 = vmatprep.subr.mxu0 0.0
      %2451 = vmatpush1.xpose.msra.mxu0 0.0
      %2452 = vmatprep.subr.mxu0 0.0
      %2453 = vmatpush1.xpose.msra.mxu0 0.0
      %2454 = vmatprep.subr.mxu0 0.0
      %2455 = vmatpush1.xpose.msra.mxu0 0.0
      %2456 = vmatprep.subr.mxu0 0.0
      %2457 = vmatpush1.xpose.msra.mxu0 0.0
      %2458 = vmatprep.subr.mxu0 0.0
      %2459 = vmatpush1.xpose.msra.mxu0 0.0
      %2460 = vmatprep.subr.mxu0 0.0
      %2461 = vmatpush1.xpose.msra.mxu0 0.0
      %2462 = vmatprep.subr.mxu0 0.0
      %2463 = vmatpush1.xpose.msra.mxu0 0.0
      %2464 = vmatprep.subr.mxu0 0.0
      %2465 = vmatpush1.xpose.msra.mxu0 0.0
      %2466 = vmatprep.subr.mxu0 0.0
      %2467 = vmatpush1.xpose.msra.mxu0 0.0
      %2468 = vmatprep.subr.mxu0 0.0
      %2469 = vmatpush1.xpose.msra.mxu0 0.0
      %2470 = vmatprep.subr.mxu0 0.0
      %2471 = vmatpush1.xpose.msra.mxu0 0.0
      %2472 = vmatprep.subr.mxu0 0.0
      %2473 = vmatpush1.xpose.msra.mxu0 0.0
      %2474 = vmatprep.subr.mxu0 0.0
      %2475 = vmatpush1.xpose.msra.mxu0 0.0
      %2476 = vmatprep.subr.mxu0 0.0
      %2477 = vmatpush1.xpose.msra.mxu0 0.0
      %2478 = vmatprep.subr.mxu0 0.0
      %2479 = vmatpush1.xpose.msra.mxu0 0.0
      %2480 = vmatprep.subr.mxu0 0.0
      %2481 = vmatpush1.xpose.msra.mxu0 0.0
      %2482 = vmatprep.subr.mxu0 0.0
      %2483 = vmatpush1.xpose.msra.mxu0 0.0
      %2484 = vmatprep.mubr.f32.mxu0 0.0
      %2485 = vmatmul.mubr.f32.gmra.mrb[0].mxu0 %v2404
      %v2486 = vpop.f32.mrb[0].mxu0
      %v2487 = vadd.f32 %v2028, %v2486
      %v2488 = vpop.f32.mrb[0].mxu0
      %2489 = vmatprep.mubr.f32.mxu0 0.0
      %2490 = vmatmul.mubr.f32.gmra.mrb[0].mxu0 %v2406
      %v2491 = vpop.f32.mrb[0].mxu0
      %v2492 = vadd.f32 %v2029, %v2491
      %v2493 = vpop.f32.mrb[0].mxu0
      %2494 = vmatprep.mubr.f32.mxu0 0.0
      %2495 = vmatmul.mubr.f32.gmra.mrb[0].mxu0 %v2408
      %v2496 = vpop.f32.mrb[0].mxu0
      %v2497 = vadd.f32 %v2030, %v2496
      %v2498 = vpop.f32.mrb[0].mxu0
      %2499 = vmatprep.mubr.f32.mxu0 0.0
      %2500 = vmatmul.mubr.f32.gmra.mrb[0].mxu0 %v2410
      %v2501 = vpop.f32.mrb[0].mxu0
      %v2502 = vadd.f32 %v2031, %v2501
      %v2503 = vpop.f32.mrb[0].mxu0
      %2504 = vdwg.mxu0
      %v2505 = vsel %vm519, %v2136, -inf
      %2506 = vmax.xlane.f32.xlu0 %v2505
      %v2507 = vpop.xlane.xlu0 %2506
      %v2508 = vsel %vm519, %v2141, -inf
      %2509 = vmax.xlane.f32.xlu0 %v2508
      %v2510 = vpop.xlane.xlu0 %2509
      %v2511 = vsel %vm519, %v2146, -inf
      %2512 = vmax.xlane.f32.xlu0 %v2511
      %v2513 = vpop.xlane.xlu0 %2512
      %v2514 = vsel %vm519, %v2151, -inf
      %2515 = vmax.xlane.f32.xlu0 %v2514
      %v2516 = vpop.xlane.xlu0 %2515
      %v2517 = vsel %vm519, %v2253, -inf
      %2518 = vmax.xlane.f32.xlu0 %v2517
      %v2519 = vpop.xlane.xlu0 %2518
      %v2520 = vsel %vm519, %v2258, -inf
      %2521 = vmax.xlane.f32.xlu0 %v2520
      %v2522 = vpop.xlane.xlu0 %2521
      %v2523 = vsel %vm519, %v2263, -inf
      %2524 = vmax.xlane.f32.xlu0 %v2523
      %v2525 = vpop.xlane.xlu0 %2524
      %v2526 = vsel %vm519, %v2268, -inf
      %2527 = vmax.xlane.f32.xlu0 %v2526
      %v2528 = vpop.xlane.xlu0 %2527
      %v2529 = vsel %vm519, %v2370, -inf
      %2530 = vmax.xlane.f32.xlu0 %v2529
      %v2531 = vpop.xlane.xlu0 %2530
      %v2532 = vsel %vm519, %v2375, -inf
      %2533 = vmax.xlane.f32.xlu0 %v2532
      %v2534 = vpop.xlane.xlu0 %2533
      %v2535 = vsel %vm519, %v2380, -inf
      %2536 = vmax.xlane.f32.xlu0 %v2535
      %v2537 = vpop.xlane.xlu0 %2536
      %v2538 = vsel %vm519, %v2385, -inf
      %2539 = vmax.xlane.f32.xlu0 %v2538
      %v2540 = vpop.xlane.xlu0 %2539
      %v2541 = vsel %vm519, %v2487, -inf
      %2542 = vmax.xlane.f32.xlu0 %v2541
      %v2543 = vpop.xlane.xlu0 %2542
      %v2544 = vsel %vm519, %v2492, -inf
      %2545 = vmax.xlane.f32.xlu0 %v2544
      %v2546 = vpop.xlane.xlu0 %2545
      %v2547 = vsel %vm519, %v2497, -inf
      %2548 = vmax.xlane.f32.xlu0 %v2547
      %v2549 = vpop.xlane.xlu0 %2548
      %v2550 = vsel %vm519, %v2502, -inf
      %2551 = vmax.xlane.f32.xlu0 %v2550
      %v2552 = vpop.xlane.xlu0 %2551
      %v2553 = vsub.f32 %v2136, %v2507
      %v2554 = vsub.f32 %v2141, %v2510
      %v2555 = vsub.f32 %v2146, %v2513
      %v2556 = vsub.f32 %v2151, %v2516
      %v2557 = vsub.f32 %v2253, %v2519
      %v2558 = vsub.f32 %v2258, %v2522
      %v2559 = vsub.f32 %v2263, %v2525
      %v2560 = vsub.f32 %v2268, %v2528
      %v2561 = vsub.f32 %v2370, %v2531
      %v2562 = vsub.f32 %v2375, %v2534
      %v2563 = vsub.f32 %v2380, %v2537
      %v2564 = vsub.f32 %v2385, %v2540
      %v2565 = vsub.f32 %v2487, %v2543
      %v2566 = vsub.f32 %v2492, %v2546
      %v2567 = vsub.f32 %v2497, %v2549
      %v2568 = vsub.f32 %v2502, %v2552
      %v2569 = vmul.f32 %v2553, 1.442695
      %v2570 = vpow.pop %v2569
      %v2571 = vmul.f32 %v2554, 1.442695
      %v2572 = vpow.pop %v2571
      %v2573 = vmul.f32 %v2555, 1.442695
      %v2574 = vpow.pop %v2573
      %v2575 = vmul.f32 %v2556, 1.442695
      %v2576 = vpow.pop %v2575
      %v2577 = vmul.f32 %v2557, 1.442695
      %v2578 = vpow.pop %v2577
      %v2579 = vmul.f32 %v2558, 1.442695
      %v2580 = vpow.pop %v2579
      %v2581 = vmul.f32 %v2559, 1.442695
      %v2582 = vpow.pop %v2581
      %v2583 = vmul.f32 %v2560, 1.442695
      %v2584 = vpow.pop %v2583
      %v2585 = vmul.f32 %v2561, 1.442695
      %v2586 = vpow.pop %v2585
      %v2587 = vmul.f32 %v2562, 1.442695
      %v2588 = vpow.pop %v2587
      %v2589 = vmul.f32 %v2563, 1.442695
      %v2590 = vpow.pop %v2589
      %v2591 = vmul.f32 %v2564, 1.442695
      %v2592 = vpow.pop %v2591
      %v2593 = vmul.f32 %v2565, 1.442695
      %v2594 = vpow.pop %v2593
      %v2595 = vmul.f32 %v2566, 1.442695
      %v2596 = vpow.pop %v2595
      %v2597 = vmul.f32 %v2567, 1.442695
      %v2598 = vpow.pop %v2597
      %v2599 = vmul.f32 %v2568, 1.442695
      %v2600 = vpow.pop %v2599
      %v2601 = vsel %vm519, %v2570, 0.0
      %2602 = vadd.xlane.f32.xlu0 %v2601
      %v2603 = vpop.xlane.xlu0 %2602
      %v2604 = vsel %vm519, %v2572, 0.0
      %2605 = vadd.xlane.f32.xlu0 %v2604
      %v2606 = vpop.xlane.xlu0 %2605
      %v2607 = vsel %vm519, %v2574, 0.0
      %2608 = vadd.xlane.f32.xlu0 %v2607
      %v2609 = vpop.xlane.xlu0 %2608
      %v2610 = vsel %vm519, %v2576, 0.0
      %2611 = vadd.xlane.f32.xlu0 %v2610
      %v2612 = vpop.xlane.xlu0 %2611
      %v2613 = vsel %vm519, %v2578, 0.0
      %2614 = vadd.xlane.f32.xlu0 %v2613
      %v2615 = vpop.xlane.xlu0 %2614
      %v2616 = vsel %vm519, %v2580, 0.0
      %2617 = vadd.xlane.f32.xlu0 %v2616
      %v2618 = vpop.xlane.xlu0 %2617
      %v2619 = vsel %vm519, %v2582, 0.0
      %2620 = vadd.xlane.f32.xlu0 %v2619
      %v2621 = vpop.xlane.xlu0 %2620
      %v2622 = vsel %vm519, %v2584, 0.0
      %2623 = vadd.xlane.f32.xlu0 %v2622
      %v2624 = vpop.xlane.xlu0 %2623
      %v2625 = vsel %vm519, %v2586, 0.0
      %2626 = vadd.xlane.f32.xlu0 %v2625
      %v2627 = vpop.xlane.xlu0 %2626
      %v2628 = vsel %vm519, %v2588, 0.0
      %2629 = vadd.xlane.f32.xlu0 %v2628
      %v2630 = vpop.xlane.xlu0 %2629
      %v2631 = vsel %vm519, %v2590, 0.0
      %2632 = vadd.xlane.f32.xlu0 %v2631
      %v2633 = vpop.xlane.xlu0 %2632
      %v2634 = vsel %vm519, %v2592, 0.0
      %2635 = vadd.xlane.f32.xlu0 %v2634
      %v2636 = vpop.xlane.xlu0 %2635
      %v2637 = vsel %vm519, %v2594, 0.0
      %2638 = vadd.xlane.f32.xlu0 %v2637
      %v2639 = vpop.xlane.xlu0 %2638
      %v2640 = vsel %vm519, %v2596, 0.0
      %2641 = vadd.xlane.f32.xlu0 %v2640
      %v2642 = vpop.xlane.xlu0 %2641
      %v2643 = vsel %vm519, %v2598, 0.0
      %2644 = vadd.xlane.f32.xlu0 %v2643
      %v2645 = vpop.xlane.xlu0 %2644
      %v2646 = vsel %vm519, %v2600, 0.0
      %2647 = vadd.xlane.f32.xlu0 %v2646
      %v2648 = vpop.xlane.xlu0 %2647
      %v2649 = vrcp.pop %v2603
      %v2650 = vmul.f32 %v2570, %v2649
      %v2651 = vrcp.pop %v2606
      %v2652 = vmul.f32 %v2572, %v2651
      %v2653 = vrcp.pop %v2609
      %v2654 = vmul.f32 %v2574, %v2653
      %v2655 = vrcp.pop %v2612
      %v2656 = vmul.f32 %v2576, %v2655
      %v2657 = vrcp.pop %v2615
      %v2658 = vmul.f32 %v2578, %v2657
      %v2659 = vrcp.pop %v2618
      %v2660 = vmul.f32 %v2580, %v2659
      %v2661 = vrcp.pop %v2621
      %v2662 = vmul.f32 %v2582, %v2661
      %v2663 = vrcp.pop %v2624
      %v2664 = vmul.f32 %v2584, %v2663
      %v2665 = vrcp.pop %v2627
      %v2666 = vmul.f32 %v2586, %v2665
      %v2667 = vrcp.pop %v2630
      %v2668 = vmul.f32 %v2588, %v2667
      %v2669 = vrcp.pop %v2633
      %v2670 = vmul.f32 %v2590, %v2669
      %v2671 = vrcp.pop %v2636
      %v2672 = vmul.f32 %v2592, %v2671
      %v2673 = vrcp.pop %v2639
      %v2674 = vmul.f32 %v2594, %v2673
      %v2675 = vrcp.pop %v2642
      %v2676 = vmul.f32 %v2596, %v2675
      %v2677 = vrcp.pop %v2645
      %v2678 = vmul.f32 %v2598, %v2677
      %v2679 = vrcp.pop %v2648
      %v2680 = vmul.f32 %v2600, %v2679
      %v2682 = vsel %vm519, %v2650, 0
      %v2685 = vsel %vm519, %v2652, 0
      %v2688 = vsel %vm519, %v2654, 0
      %v2691 = vsel %vm519, %v2656, 0
      %2693 = vmatprep.subr.mxu0 0.0
      %2694 = vmatpush1.msra.mxu0 %v2006
      %2695 = vmatprep.subr.mxu0 0.0
      %2696 = vmatpush1.msra.mxu0 %v2012
      %2697 = vmatprep.subr.mxu0 0.0
      %2698 = vmatpush1.msra.mxu0 %v2018
      %2699 = vmatprep.subr.mxu0 0.0
      %2700 = vmatpush1.msra.mxu0 %v2024
      %2701 = vmatprep.subr.mxu0 0.0
      %2702 = vmatpush1.msra.mxu0 0.0
      %2703 = vmatprep.subr.mxu0 0.0
      %2704 = vmatpush1.msra.mxu0 0.0
      %2705 = vmatprep.subr.mxu0 0.0
      %2706 = vmatpush1.msra.mxu0 0.0
      %2707 = vmatprep.subr.mxu0 0.0
      %2708 = vmatpush1.msra.mxu0 0.0
      %2709 = vmatprep.subr.mxu0 0.0
      %2710 = vmatpush1.msra.mxu0 0.0
      %2711 = vmatprep.subr.mxu0 0.0
      %2712 = vmatpush1.msra.mxu0 0.0
      %2713 = vmatprep.subr.mxu0 0.0
      %2714 = vmatpush1.msra.mxu0 0.0
      %2715 = vmatprep.subr.mxu0 0.0
      %2716 = vmatpush1.msra.mxu0 0.0
      %2717 = vmatprep.subr.mxu0 0.0
      %2718 = vmatpush1.msra.mxu0 0.0
      %2719 = vmatprep.subr.mxu0 0.0
      %2720 = vmatpush1.msra.mxu0 0.0
      %2721 = vmatprep.subr.mxu0 0.0
      %2722 = vmatpush1.msra.mxu0 0.0
      %2723 = vmatprep.subr.mxu0 0.0
      %2724 = vmatpush1.msra.mxu0 0.0
      %2725 = vmatprep.subr.mxu0 0.0
      %2726 = vmatpush1.msra.mxu0 0.0
      %2727 = vmatprep.subr.mxu0 0.0
      %2728 = vmatpush1.msra.mxu0 0.0
      %2729 = vmatprep.subr.mxu0 0.0
      %2730 = vmatpush1.msra.mxu0 0.0
      %2731 = vmatprep.subr.mxu0 0.0
      %2732 = vmatpush1.msra.mxu0 0.0
      %2733 = vmatprep.subr.mxu0 0.0
      %2734 = vmatpush1.msra.mxu0 0.0
      %2735 = vmatprep.subr.mxu0 0.0
      %2736 = vmatpush1.msra.mxu0 0.0
      %2737 = vmatprep.subr.mxu0 0.0
      %2738 = vmatpush1.msra.mxu0 0.0
      %2739 = vmatprep.subr.mxu0 0.0
      %2740 = vmatpush1.msra.mxu0 0.0
      %2741 = vmatprep.subr.mxu0 0.0
      %2742 = vmatpush1.msra.mxu0 0.0
      %2743 = vmatprep.subr.mxu0 0.0
      %2744 = vmatpush1.msra.mxu0 0.0
      %2745 = vmatprep.subr.mxu0 0.0
      %2746 = vmatpush1.msra.mxu0 0.0
      %2747 = vmatprep.subr.mxu0 0.0
      %2748 = vmatpush1.msra.mxu0 0.0
      %2749 = vmatprep.subr.mxu0 0.0
      %2750 = vmatpush1.msra.mxu0 0.0
      %2751 = vmatprep.subr.mxu0 0.0
      %2752 = vmatpush1.msra.mxu0 0.0
      %2753 = vmatprep.subr.mxu0 0.0
      %2754 = vmatpush1.msra.mxu0 0.0
      %2755 = vmatprep.subr.mxu0 0.0
      %2756 = vmatpush1.msra.mxu0 0.0
      %2757 = vmatprep.mubr.f32.mxu0 0.0
      %2758 = vmatmul.mubr.f32.gmra.mrb[0].mxu0 %v2682
      %v2759 = vpop.f32.mrb[0].mxu0
      %v2760 = vadd.f32 0.0, %v2759
      %v2761 = vpop.f32.mrb[0].mxu0
      %2762 = vmatprep.mubr.f32.mxu0 0.0
      %2763 = vmatmul.mubr.f32.gmra.mrb[0].mxu0 %v2685
      %v2764 = vpop.f32.mrb[0].mxu0
      %v2765 = vadd.f32 0.0, %v2764
      %v2766 = vpop.f32.mrb[0].mxu0
      %2767 = vmatprep.mubr.f32.mxu0 0.0
      %2768 = vmatmul.mubr.f32.gmra.mrb[0].mxu0 %v2688
      %v2769 = vpop.f32.mrb[0].mxu0
      %v2770 = vadd.f32 0.0, %v2769
      %v2771 = vpop.f32.mrb[0].mxu0
      %2772 = vmatprep.mubr.f32.mxu0 0.0
      %2773 = vmatmul.mubr.f32.gmra.mrb[0].mxu0 %v2691
      %v2774 = vpop.f32.mrb[0].mxu0
      %v2775 = vadd.f32 0.0, %v2774
      %v2776 = vpop.f32.mrb[0].mxu0
      %2777 = vdwg.mxu0
      %2782 = vrot.lane.b32.xlu0 %v2006, 112
      %v2783 = vpop.permute.xlu0 %2782
      %2784 = vrot.lane.b32.xlu0 %v2012, 112
      %v2785 = vpop.permute.xlu0 %2784
      %2786 = vrot.lane.b32.xlu0 %v2018, 112
      %v2787 = vpop.permute.xlu0 %2786
      %2788 = vrot.lane.b32.xlu0 %v2024, 112
      %v2789 = vpop.permute.xlu0 %2788
      %v2795 = vsel %vm519, %v2658, 0
      %v2798 = vsel %vm519, %v2660, 0
      %v2801 = vsel %vm519, %v2662, 0
      %v2804 = vsel %vm519, %v2664, 0
      %2806 = vmatprep.subr.mxu0 0.0
      %2807 = vmatpush1.msra.mxu0 %v2783
      %2808 = vmatprep.subr.mxu0 0.0
      %2809 = vmatpush1.msra.mxu0 %v2785
      %2810 = vmatprep.subr.mxu0 0.0
      %2811 = vmatpush1.msra.mxu0 %v2787
      %2812 = vmatprep.subr.mxu0 0.0
      %2813 = vmatpush1.msra.mxu0 %v2789
      %2814 = vmatprep.subr.mxu0 0.0
      %2815 = vmatpush1.msra.mxu0 0.0
      %2816 = vmatprep.subr.mxu0 0.0
      %2817 = vmatpush1.msra.mxu0 0.0
      %2818 = vmatprep.subr.mxu0 0.0
      %2819 = vmatpush1.msra.mxu0 0.0
      %2820 = vmatprep.subr.mxu0 0.0
      %2821 = vmatpush1.msra.mxu0 0.0
      %2822 = vmatprep.subr.mxu0 0.0
      %2823 = vmatpush1.msra.mxu0 0.0
      %2824 = vmatprep.subr.mxu0 0.0
      %2825 = vmatpush1.msra.mxu0 0.0
      %2826 = vmatprep.subr.mxu0 0.0
      %2827 = vmatpush1.msra.mxu0 0.0
      %2828 = vmatprep.subr.mxu0 0.0
      %2829 = vmatpush1.msra.mxu0 0.0
      %2830 = vmatprep.subr.mxu0 0.0
      %2831 = vmatpush1.msra.mxu0 0.0
      %2832 = vmatprep.subr.mxu0 0.0
      %2833 = vmatpush1.msra.mxu0 0.0
      %2834 = vmatprep.subr.mxu0 0.0
      %2835 = vmatpush1.msra.mxu0 0.0
      %2836 = vmatprep.subr.mxu0 0.0
      %2837 = vmatpush1.msra.mxu0 0.0
      %2838 = vmatprep.subr.mxu0 0.0
      %2839 = vmatpush1.msra.mxu0 0.0
      %2840 = vmatprep.subr.mxu0 0.0
      %2841 = vmatpush1.msra.mxu0 0.0
      %2842 = vmatprep.subr.mxu0 0.0
      %2843 = vmatpush1.msra.mxu0 0.0
      %2844 = vmatprep.subr.mxu0 0.0
      %2845 = vmatpush1.msra.mxu0 0.0
      %2846 = vmatprep.subr.mxu0 0.0
      %2847 = vmatpush1.msra.mxu0 0.0
      %2848 = vmatprep.subr.mxu0 0.0
      %2849 = vmatpush1.msra.mxu0 0.0
      %2850 = vmatprep.subr.mxu0 0.0
      %2851 = vmatpush1.msra.mxu0 0.0
      %2852 = vmatprep.subr.mxu0 0.0
      %2853 = vmatpush1.msra.mxu0 0.0
      %2854 = vmatprep.subr.mxu0 0.0
      %2855 = vmatpush1.msra.mxu0 0.0
      %2856 = vmatprep.subr.mxu0 0.0
      %2857 = vmatpush1.msra.mxu0 0.0
      %2858 = vmatprep.subr.mxu0 0.0
      %2859 = vmatpush1.msra.mxu0 0.0
      %2860 = vmatprep.subr.mxu0 0.0
      %2861 = vmatpush1.msra.mxu0 0.0
      %2862 = vmatprep.subr.mxu0 0.0
      %2863 = vmatpush1.msra.mxu0 0.0
      %2864 = vmatprep.subr.mxu0 0.0
      %2865 = vmatpush1.msra.mxu0 0.0
      %2866 = vmatprep.subr.mxu0 0.0
      %2867 = vmatpush1.msra.mxu0 0.0
      %2868 = vmatprep.subr.mxu0 0.0
      %2869 = vmatpush1.msra.mxu0 0.0
      %2870 = vmatprep.mubr.f32.mxu0 0.0
      %2871 = vmatmul.mubr.f32.gmra.mrb[0].mxu0 %v2795
      %v2872 = vpop.f32.mrb[0].mxu0
      %v2873 = vadd.f32 0.0, %v2872
      %v2874 = vpop.f32.mrb[0].mxu0
      %2875 = vmatprep.mubr.f32.mxu0 0.0
      %2876 = vmatmul.mubr.f32.gmra.mrb[0].mxu0 %v2798
      %v2877 = vpop.f32.mrb[0].mxu0
      %v2878 = vadd.f32 0.0, %v2877
      %v2879 = vpop.f32.mrb[0].mxu0
      %2880 = vmatprep.mubr.f32.mxu0 0.0
      %2881 = vmatmul.mubr.f32.gmra.mrb[0].mxu0 %v2801
      %v2882 = vpop.f32.mrb[0].mxu0
      %v2883 = vadd.f32 0.0, %v2882
      %v2884 = vpop.f32.mrb[0].mxu0
      %2885 = vmatprep.mubr.f32.mxu0 0.0
      %2886 = vmatmul.mubr.f32.gmra.mrb[0].mxu0 %v2804
      %v2887 = vpop.f32.mrb[0].mxu0
      %v2888 = vadd.f32 0.0, %v2887
      %v2889 = vpop.f32.mrb[0].mxu0
      %2890 = vdwg.mxu0
      %2891 = vrot.lane.b32.xlu0 %v2006, 96
      %v2892 = vpop.permute.xlu0 %2891
      %2893 = vrot.lane.b32.xlu0 %v2012, 96
      %v2894 = vpop.permute.xlu0 %2893
      %2895 = vrot.lane.b32.xlu0 %v2018, 96
      %v2896 = vpop.permute.xlu0 %2895
      %2897 = vrot.lane.b32.xlu0 %v2024, 96
      %v2898 = vpop.permute.xlu0 %2897
      %v2904 = vsel %vm519, %v2666, 0
      %v2907 = vsel %vm519, %v2668, 0
      %v2910 = vsel %vm519, %v2670, 0
      %v2913 = vsel %vm519, %v2672, 0
      %2915 = vmatprep.subr.mxu0 0.0
      %2916 = vmatpush1.msra.mxu0 %v2892
      %2917 = vmatprep.subr.mxu0 0.0
      %2918 = vmatpush1.msra.mxu0 %v2894
      %2919 = vmatprep.subr.mxu0 0.0
      %2920 = vmatpush1.msra.mxu0 %v2896
      %2921 = vmatprep.subr.mxu0 0.0
      %2922 = vmatpush1.msra.mxu0 %v2898
      %2923 = vmatprep.subr.mxu0 0.0
      %2924 = vmatpush1.msra.mxu0 0.0
      %2925 = vmatprep.subr.mxu0 0.0
      %2926 = vmatpush1.msra.mxu0 0.0
      %2927 = vmatprep.subr.mxu0 0.0
      %2928 = vmatpush1.msra.mxu0 0.0
      %2929 = vmatprep.subr.mxu0 0.0
      %2930 = vmatpush1.msra.mxu0 0.0
      %2931 = vmatprep.subr.mxu0 0.0
      %2932 = vmatpush1.msra.mxu0 0.0
      %2933 = vmatprep.subr.mxu0 0.0
      %2934 = vmatpush1.msra.mxu0 0.0
      %2935 = vmatprep.subr.mxu0 0.0
      %2936 = vmatpush1.msra.mxu0 0.0
      %2937 = vmatprep.subr.mxu0 0.0
      %2938 = vmatpush1.msra.mxu0 0.0
      %2939 = vmatprep.subr.mxu0 0.0
      %2940 = vmatpush1.msra.mxu0 0.0
      %2941 = vmatprep.subr.mxu0 0.0
      %2942 = vmatpush1.msra.mxu0 0.0
      %2943 = vmatprep.subr.mxu0 0.0
      %2944 = vmatpush1.msra.mxu0 0.0
      %2945 = vmatprep.subr.mxu0 0.0
      %2946 = vmatpush1.msra.mxu0 0.0
      %2947 = vmatprep.subr.mxu0 0.0
      %2948 = vmatpush1.msra.mxu0 0.0
      %2949 = vmatprep.subr.mxu0 0.0
      %2950 = vmatpush1.msra.mxu0 0.0
      %2951 = vmatprep.subr.mxu0 0.0
      %2952 = vmatpush1.msra.mxu0 0.0
      %2953 = vmatprep.subr.mxu0 0.0
      %2954 = vmatpush1.msra.mxu0 0.0
      %2955 = vmatprep.subr.mxu0 0.0
      %2956 = vmatpush1.msra.mxu0 0.0
      %2957 = vmatprep.subr.mxu0 0.0
      %2958 = vmatpush1.msra.mxu0 0.0
      %2959 = vmatprep.subr.mxu0 0.0
      %2960 = vmatpush1.msra.mxu0 0.0
      %2961 = vmatprep.subr.mxu0 0.0
      %2962 = vmatpush1.msra.mxu0 0.0
      %2963 = vmatprep.subr.mxu0 0.0
      %2964 = vmatpush1.msra.mxu0 0.0
      %2965 = vmatprep.subr.mxu0 0.0
      %2966 = vmatpush1.msra.mxu0 0.0
      %2967 = vmatprep.subr.mxu0 0.0
      %2968 = vmatpush1.msra.mxu0 0.0
      %2969 = vmatprep.subr.mxu0 0.0
      %2970 = vmatpush1.msra.mxu0 0.0
      %2971 = vmatprep.subr.mxu0 0.0
      %2972 = vmatpush1.msra.mxu0 0.0
      %2973 = vmatprep.subr.mxu0 0.0
      %2974 = vmatpush1.msra.mxu0 0.0
      %2975 = vmatprep.subr.mxu0 0.0
      %2976 = vmatpush1.msra.mxu0 0.0
      %2977 = vmatprep.subr.mxu0 0.0
      %2978 = vmatpush1.msra.mxu0 0.0
      %2979 = vmatprep.mubr.f32.mxu0 0.0
      %2980 = vmatmul.mubr.f32.gmra.mrb[0].mxu0 %v2904
      %v2981 = vpop.f32.mrb[0].mxu0
      %v2982 = vadd.f32 0.0, %v2981
      %v2983 = vpop.f32.mrb[0].mxu0
      %2984 = vmatprep.mubr.f32.mxu0 0.0
      %2985 = vmatmul.mubr.f32.gmra.mrb[0].mxu0 %v2907
      %v2986 = vpop.f32.mrb[0].mxu0
      %v2987 = vadd.f32 0.0, %v2986
      %v2988 = vpop.f32.mrb[0].mxu0
      %2989 = vmatprep.mubr.f32.mxu0 0.0
      %2990 = vmatmul.mubr.f32.gmra.mrb[0].mxu0 %v2910
      %v2991 = vpop.f32.mrb[0].mxu0
      %v2992 = vadd.f32 0.0, %v2991
      %v2993 = vpop.f32.mrb[0].mxu0
      %2994 = vmatprep.mubr.f32.mxu0 0.0
      %2995 = vmatmul.mubr.f32.gmra.mrb[0].mxu0 %v2913
      %v2996 = vpop.f32.mrb[0].mxu0
      %v2997 = vadd.f32 0.0, %v2996
      %v2998 = vpop.f32.mrb[0].mxu0
      %2999 = vdwg.mxu0
      %3000 = vrot.lane.b32.xlu0 %v2006, 80
      %v3001 = vpop.permute.xlu0 %3000
      %3002 = vrot.lane.b32.xlu0 %v2012, 80
      %v3003 = vpop.permute.xlu0 %3002
      %3004 = vrot.lane.b32.xlu0 %v2018, 80
      %v3005 = vpop.permute.xlu0 %3004
      %3006 = vrot.lane.b32.xlu0 %v2024, 80
      %v3007 = vpop.permute.xlu0 %3006
      %v3013 = vsel %vm519, %v2674, 0
      %v3016 = vsel %vm519, %v2676, 0
      %v3019 = vsel %vm519, %v2678, 0
      %v3022 = vsel %vm519, %v2680, 0
      %3024 = vmatprep.subr.mxu0 0.0
      %3025 = vmatpush1.msra.mxu0 %v3001
      %3026 = vmatprep.subr.mxu0 0.0
      %3027 = vmatpush1.msra.mxu0 %v3003
      %3028 = vmatprep.subr.mxu0 0.0
      %3029 = vmatpush1.msra.mxu0 %v3005
      %3030 = vmatprep.subr.mxu0 0.0
      %3031 = vmatpush1.msra.mxu0 %v3007
      %3032 = vmatprep.subr.mxu0 0.0
      %3033 = vmatpush1.msra.mxu0 0.0
      %3034 = vmatprep.subr.mxu0 0.0
      %3035 = vmatpush1.msra.mxu0 0.0
      %3036 = vmatprep.subr.mxu0 0.0
      %3037 = vmatpush1.msra.mxu0 0.0
      %3038 = vmatprep.subr.mxu0 0.0
      %3039 = vmatpush1.msra.mxu0 0.0
      %3040 = vmatprep.subr.mxu0 0.0
      %3041 = vmatpush1.msra.mxu0 0.0
      %3042 = vmatprep.subr.mxu0 0.0
      %3043 = vmatpush1.msra.mxu0 0.0
      %3044 = vmatprep.subr.mxu0 0.0
      %3045 = vmatpush1.msra.mxu0 0.0
      %3046 = vmatprep.subr.mxu0 0.0
      %3047 = vmatpush1.msra.mxu0 0.0
      %3048 = vmatprep.subr.mxu0 0.0
      %3049 = vmatpush1.msra.mxu0 0.0
      %3050 = vmatprep.subr.mxu0 0.0
      %3051 = vmatpush1.msra.mxu0 0.0
      %3052 = vmatprep.subr.mxu0 0.0
      %3053 = vmatpush1.msra.mxu0 0.0
      %3054 = vmatprep.subr.mxu0 0.0
      %3055 = vmatpush1.msra.mxu0 0.0
      %3056 = vmatprep.subr.mxu0 0.0
      %3057 = vmatpush1.msra.mxu0 0.0
      %3058 = vmatprep.subr.mxu0 0.0
      %3059 = vmatpush1.msra.mxu0 0.0
      %3060 = vmatprep.subr.mxu0 0.0
      %3061 = vmatpush1.msra.mxu0 0.0
      %3062 = vmatprep.subr.mxu0 0.0
      %3063 = vmatpush1.msra.mxu0 0.0
      %3064 = vmatprep.subr.mxu0 0.0
      %3065 = vmatpush1.msra.mxu0 0.0
      %3066 = vmatprep.subr.mxu0 0.0
      %3067 = vmatpush1.msra.mxu0 0.0
      %3068 = vmatprep.subr.mxu0 0.0
      %3069 = vmatpush1.msra.mxu0 0.0
      %3070 = vmatprep.subr.mxu0 0.0
      %3071 = vmatpush1.msra.mxu0 0.0
      %3072 = vmatprep.subr.mxu0 0.0
      %3073 = vmatpush1.msra.mxu0 0.0
      %3074 = vmatprep.subr.mxu0 0.0
      %3075 = vmatpush1.msra.mxu0 0.0
      %3076 = vmatprep.subr.mxu0 0.0
      %3077 = vmatpush1.msra.mxu0 0.0
      %3078 = vmatprep.subr.mxu0 0.0
      %3079 = vmatpush1.msra.mxu0 0.0
      %3080 = vmatprep.subr.mxu0 0.0
      %3081 = vmatpush1.msra.mxu0 0.0
      %3082 = vmatprep.subr.mxu0 0.0
      %3083 = vmatpush1.msra.mxu0 0.0
      %3084 = vmatprep.subr.mxu0 0.0
      %3085 = vmatpush1.msra.mxu0 0.0
      %3086 = vmatprep.subr.mxu0 0.0
      %3087 = vmatpush1.msra.mxu0 0.0
      %3088 = vmatprep.mubr.f32.mxu0 0.0
      %3089 = vmatmul.mubr.f32.gmra.mrb[0].mxu0 %v3013
      %v3090 = vpop.f32.mrb[0].mxu0
      %v3091 = vadd.f32 0.0, %v3090
      %v3092 = vpop.f32.mrb[0].mxu0
      %3093 = vmatprep.mubr.f32.mxu0 0.0
      %3094 = vmatmul.mubr.f32.gmra.mrb[0].mxu0 %v3016
      %v3095 = vpop.f32.mrb[0].mxu0
      %v3096 = vadd.f32 0.0, %v3095
      %v3097 = vpop.f32.mrb[0].mxu0
      %3098 = vmatprep.mubr.f32.mxu0 0.0
      %3099 = vmatmul.mubr.f32.gmra.mrb[0].mxu0 %v3019
      %v3100 = vpop.f32.mrb[0].mxu0
      %v3101 = vadd.f32 0.0, %v3100
      %v3102 = vpop.f32.mrb[0].mxu0
      %3103 = vmatprep.mubr.f32.mxu0 0.0
      %3104 = vmatmul.mubr.f32.gmra.mrb[0].mxu0 %v3022
      %v3105 = vpop.f32.mrb[0].mxu0
      %v3106 = vadd.f32 0.0, %v3105
      %v3107 = vpop.f32.mrb[0].mxu0
      %3108 = vdwg.mxu0
      %3113 = vrot.lane.b32.xlu0 %v2873, 16
      %v3114 = vpop.permute.xlu0 %3113
      %3115 = vrot.lane.b32.xlu0 %v2878, 16
      %v3116 = vpop.permute.xlu0 %3115
      %3117 = vrot.lane.b32.xlu0 %v2883, 16
      %v3118 = vpop.permute.xlu0 %3117
      %3119 = vrot.lane.b32.xlu0 %v2888, 16
      %v3120 = vpop.permute.xlu0 %3119
      %3129 = vrot.lane.b32.xlu0 %v2982, 32
      %v3130 = vpop.permute.xlu0 %3129
      %3131 = vrot.lane.b32.xlu0 %v2987, 32
      %v3132 = vpop.permute.xlu0 %3131
      %3133 = vrot.lane.b32.xlu0 %v2992, 32
      %v3134 = vpop.permute.xlu0 %3133
      %3135 = vrot.lane.b32.xlu0 %v2997, 32
      %v3136 = vpop.permute.xlu0 %3135
      %3145 = vrot.lane.b32.xlu0 %v3091, 48
      %v3146 = vpop.permute.xlu0 %3145
      %3147 = vrot.lane.b32.xlu0 %v3096, 48
      %v3148 = vpop.permute.xlu0 %3147
      %3149 = vrot.lane.b32.xlu0 %v3101, 48
      %v3150 = vpop.permute.xlu0 %3149
      %3151 = vrot.lane.b32.xlu0 %v3106, 48
      %v3152 = vpop.permute.xlu0 %3151
      %v3157 = vsel %vm2048, %v2760, %v3114
      %v3158 = vsel %vm2048, %v2765, %v3116
      %v3159 = vsel %vm2048, %v2770, %v3118
      %v3160 = vsel %vm2048, %v2775, %v3120
      %v3161 = vsel %vm519, %v3157, %v3130
      %v3162 = vsel %vm519, %v3158, %v3132
      %v3163 = vsel %vm519, %v3159, %v3134
      %v3164 = vsel %vm519, %v3160, %v3136
      %vm3165 = vcmask 392192
      %v3166 = vsel %vm3165, %v3161, %v3146
      %v3167 = vsel %vm3165, %v3162, %v3148
      %v3168 = vsel %vm3165, %v3163, %v3150
      %v3169 = vsel %vm3165, %v3164, %v3152
      %v3170 = vld [vmem:[%s9] sm:$0xff]
      %v3171 = vld [vmem:[%s9 + $0x8] sm:$0xff]
      %v3172 = vld [vmem:[%s9 + $0x10] sm:$0xff]
      %v3173 = vld [vmem:[%s9 + $0x18] sm:$0xff]
      %v3174 = vld [vmem:[%s9 + $0x20] sm:$0xff]
      %v3175 = vld [vmem:[%s9 + $0x28] sm:$0xff]
      %v3176 = vld [vmem:[%s9 + $0x30] sm:$0xff]
      %v3177 = vld [vmem:[%s9 + $0x38] sm:$0xff]
      %v3178 = vld [vmem:[%s10] sm:$0x1]
      %v3180 = vlaneseq
      %v3181 = vshrl.u32 %v3180, 7
      %v3182 = vsub.s32 0, %v3181
      %v3183 = vrot.slane %v3178, %v3182
      %v3186 = vsel %vm637, %v3166, 0
      %v3189 = vsel %vm637, %v3167, 0
      %v3192 = vsel %vm637, %v3168, 0
      %v3195 = vsel %vm637, %v3169, 0
      %3197 = vmatprep.subr.mxu0 0.0
      %3198 = vmatpush1.msra.mxu0 %v3170
      %3199 = vmatprep.subr.mxu0 0.0
      %3200 = vmatpush1.msra.mxu0 %v3171
      %3201 = vmatprep.subr.mxu0 0.0
      %3202 = vmatpush1.msra.mxu0 %v3172
      %3203 = vmatprep.subr.mxu0 0.0
      %3204 = vmatpush1.msra.mxu0 %v3173
      %3205 = vmatprep.subr.mxu0 0.0
      %3206 = vmatpush1.msra.mxu0 %v3174
      %3207 = vmatprep.subr.mxu0 0.0
      %3208 = vmatpush1.msra.mxu0 %v3175
      %3209 = vmatprep.subr.mxu0 0.0
      %3210 = vmatpush1.msra.mxu0 %v3176
      %3211 = vmatprep.subr.mxu0 0.0
      %3212 = vmatpush1.msra.mxu0 %v3177
      %3213 = vmatprep.subr.mxu0 0.0
      %3214 = vmatpush1.msra.mxu0 0.0
      %3215 = vmatprep.subr.mxu0 0.0
      %3216 = vmatpush1.msra.mxu0 0.0
      %3217 = vmatprep.subr.mxu0 0.0
      %3218 = vmatpush1.msra.mxu0 0.0
      %3219 = vmatprep.subr.mxu0 0.0
      %3220 = vmatpush1.msra.mxu0 0.0
      %3221 = vmatprep.subr.mxu0 0.0
      %3222 = vmatpush1.msra.mxu0 0.0
      %3223 = vmatprep.subr.mxu0 0.0
      %3224 = vmatpush1.msra.mxu0 0.0
      %3225 = vmatprep.subr.mxu0 0.0
      %3226 = vmatpush1.msra.mxu0 0.0
      %3227 = vmatprep.subr.mxu0 0.0
      %3228 = vmatpush1.msra.mxu0 0.0
      %3229 = vmatprep.subr.mxu0 0.0
      %3230 = vmatpush1.msra.mxu0 0.0
      %3231 = vmatprep.subr.mxu0 0.0
      %3232 = vmatpush1.msra.mxu0 0.0
      %3233 = vmatprep.subr.mxu0 0.0
      %3234 = vmatpush1.msra.mxu0 0.0
      %3235 = vmatprep.subr.mxu0 0.0
      %3236 = vmatpush1.msra.mxu0 0.0
      %3237 = vmatprep.subr.mxu0 0.0
      %3238 = vmatpush1.msra.mxu0 0.0
      %3239 = vmatprep.subr.mxu0 0.0
      %3240 = vmatpush1.msra.mxu0 0.0
      %3241 = vmatprep.subr.mxu0 0.0
      %3242 = vmatpush1.msra.mxu0 0.0
      %3243 = vmatprep.subr.mxu0 0.0
      %3244 = vmatpush1.msra.mxu0 0.0
      %3245 = vmatprep.subr.mxu0 0.0
      %3246 = vmatpush1.msra.mxu0 0.0
      %3247 = vmatprep.subr.mxu0 0.0
      %3248 = vmatpush1.msra.mxu0 0.0
      %3249 = vmatprep.subr.mxu0 0.0
      %3250 = vmatpush1.msra.mxu0 0.0
      %3251 = vmatprep.subr.mxu0 0.0
      %3252 = vmatpush1.msra.mxu0 0.0
      %3253 = vmatprep.subr.mxu0 0.0
      %3254 = vmatpush1.msra.mxu0 0.0
      %3255 = vmatprep.subr.mxu0 0.0
      %3256 = vmatpush1.msra.mxu0 0.0
      %3257 = vmatprep.subr.mxu0 0.0
      %3258 = vmatpush1.msra.mxu0 0.0
      %3259 = vmatprep.subr.mxu0 0.0
      %3260 = vmatpush1.msra.mxu0 0.0
      %3261 = vmatprep.mubr.f32.mxu0 0.0
      %3262 = vmatmul.mubr.f32.gmra.mrb[0].mxu0 %v3186
      %v3263 = vpop.f32.mrb[0].mxu0
      %v3264 = vadd.f32 %v3183, %v3263
      %v3265 = vpop.f32.mrb[0].mxu0
      %3266 = vmatprep.mubr.f32.mxu0 0.0
      %3267 = vmatmul.mubr.f32.gmra.mrb[0].mxu0 %v3189
      %v3268 = vpop.f32.mrb[0].mxu0
      %v3269 = vadd.f32 %v3183, %v3268
      %v3270 = vpop.f32.mrb[0].mxu0
      %3271 = vmatprep.mubr.f32.mxu0 0.0
      %3272 = vmatmul.mubr.f32.gmra.mrb[0].mxu0 %v3192
      %v3273 = vpop.f32.mrb[0].mxu0
      %v3274 = vadd.f32 %v3183, %v3273
      %v3275 = vpop.f32.mrb[0].mxu0
      %3276 = vmatprep.mubr.f32.mxu0 0.0
      %3277 = vmatmul.mubr.f32.gmra.mrb[0].mxu0 %v3195
      %v3278 = vpop.f32.mrb[0].mxu0
      %v3279 = vadd.f32 %v3183, %v3278
      %v3280 = vpop.f32.mrb[0].mxu0
      %3281 = vdwg.mxu0
      %v3282 = vadd.f32 %v1893, %v3264
      %v3283 = vadd.f32 %v1894, %v3269
      %v3284 = vadd.f32 %v1895, %v3274
      %v3285 = vadd.f32 %v1896, %v3279
      %v3286 = vsel %vm637, %v3282, 0.0
      %3287 = vadd.xlane.f32.xlu0 %v3286
      %v3288 = vpop.xlane.xlu0 %3287
      %v3289 = vsel %vm637, %v3283, 0.0
      %3290 = vadd.xlane.f32.xlu0 %v3289
      %v3291 = vpop.xlane.xlu0 %3290
      %v3292 = vsel %vm637, %v3284, 0.0
      %3293 = vadd.xlane.f32.xlu0 %v3292
      %v3294 = vpop.xlane.xlu0 %3293
      %v3295 = vsel %vm637, %v3285, 0.0
      %3296 = vadd.xlane.f32.xlu0 %v3295
      %v3297 = vpop.xlane.xlu0 %3296
      %v3298 = vmul.f32 %v3288, %v1834
      %v3299 = vmul.f32 %v3291, %v1834
      %v3300 = vmul.f32 %v3294, %v1834
      %v3301 = vmul.f32 %v3297, %v1834
      %v3302 = vsub.f32 %v3282, %v3298
      %v3303 = vsub.f32 %v3283, %v3299
      %v3304 = vsub.f32 %v3284, %v3300
      %v3305 = vsub.f32 %v3285, %v3301
      %v3306 = vmul.f32 %v3302, %v3302
      %v3307 = vmul.f32 %v3303, %v3303
      %v3308 = vmul.f32 %v3304, %v3304
      %v3309 = vmul.f32 %v3305, %v3305
      %v3310 = vsel %vm637, %v3306, 0.0
      %3311 = vadd.xlane.f32.xlu0 %v3310
      %v3312 = vpop.xlane.xlu0 %3311
      %v3313 = vsel %vm637, %v3307, 0.0
      %3314 = vadd.xlane.f32.xlu0 %v3313
      %v3315 = vpop.xlane.xlu0 %3314
      %v3316 = vsel %vm637, %v3308, 0.0
      %3317 = vadd.xlane.f32.xlu0 %v3316
      %v3318 = vpop.xlane.xlu0 %3317
      %v3319 = vsel %vm637, %v3309, 0.0
      %3320 = vadd.xlane.f32.xlu0 %v3319
      %v3321 = vpop.xlane.xlu0 %3320
      %v3322 = vmul.f32 %v3312, %v1834
      %v3323 = vmul.f32 %v3315, %v1834
      %v3324 = vmul.f32 %v3318, %v1834
      %v3325 = vmul.f32 %v3321, %v1834
      %v3326 = vadd.f32 %v3322, 1e-05
      %v3327 = vadd.f32 %v3323, 1e-05
      %v3328 = vadd.f32 %v3324, 1e-05
      %v3329 = vadd.f32 %v3325, 1e-05
      %v3330 = vrsqrt.pop %v3326
      %v3331 = vrsqrt.pop %v3327
      %v3332 = vrsqrt.pop %v3328
      %v3333 = vrsqrt.pop %v3329
      %v3334 = vmul.f32 %v3302, %v3330
      %v3335 = vmul.f32 %v3303, %v3331
      %v3336 = vmul.f32 %v3304, %v3332
      %v3337 = vmul.f32 %v3305, %v3333
      %v3338 = vld [vmem:[%s11] sm:$0x1]
      %v3340 = vlaneseq
      %v3341 = vshrl.u32 %v3340, 7
      %v3342 = vsub.s32 0, %v3341
      %v3343 = vrot.slane %v3338, %v3342
      %v3345 = vmul.f32 %v3334, %v3343
      %v3346 = vmul.f32 %v3335, %v3343
      %v3347 = vmul.f32 %v3336, %v3343
      %v3348 = vmul.f32 %v3337, %v3343
      %v3349 = vld [vmem:[%s12] sm:$0x1]
      %v3351 = vlaneseq
      %v3352 = vshrl.u32 %v3351, 7
      %v3353 = vsub.s32 0, %v3352
      %v3354 = vrot.slane %v3349, %v3353
      %v3356 = vadd.f32 %v3345, %v3354
      %v3357 = vadd.f32 %v3346, %v3354
      %v3358 = vadd.f32 %v3347, %v3354
      %v3359 = vadd.f32 %v3348, %v3354
      %v3360 = vld [vmem:[%s13] sm:$0xff]
      %v3361 = vld [vmem:[%s13 + $0x8] sm:$0xff]
      %v3362 = vld [vmem:[%s13 + $0x10] sm:$0xff]
      %v3363 = vld [vmem:[%s13 + $0x18] sm:$0xff]
      %v3364 = vld [vmem:[%s13 + $0x20] sm:$0xff]
      %v3365 = vld [vmem:[%s13 + $0x28] sm:$0xff]
      %v3366 = vld [vmem:[%s13 + $0x30] sm:$0xff]
      %v3367 = vld [vmem:[%s13 + $0x38] sm:$0xff]
      %v3368 = vld [vmem:[%s14] sm:$0x1]
      %v3370 = vlaneseq
      %v3371 = vshrl.u32 %v3370, 7
      %v3372 = vsub.s32 0, %v3371
      %v3373 = vrot.slane %v3368, %v3372
      %v3376 = vsel %vm637, %v3356, 0
      %v3379 = vsel %vm637, %v3357, 0
      %v3382 = vsel %vm637, %v3358, 0
      %v3385 = vsel %vm637, %v3359, 0
      %3387 = vmatprep.subr.mxu0 0.0
      %3388 = vmatpush1.msra.mxu0 %v3360
      %3389 = vmatprep.subr.mxu0 0.0
      %3390 = vmatpush1.msra.mxu0 %v3361
      %3391 = vmatprep.subr.mxu0 0.0
      %3392 = vmatpush1.msra.mxu0 %v3362
      %3393 = vmatprep.subr.mxu0 0.0
      %3394 = vmatpush1.msra.mxu0 %v3363
      %3395 = vmatprep.subr.mxu0 0.0
      %3396 = vmatpush1.msra.mxu0 %v3364
      %3397 = vmatprep.subr.mxu0 0.0
      %3398 = vmatpush1.msra.mxu0 %v3365
      %3399 = vmatprep.subr.mxu0 0.0
      %3400 = vmatpush1.msra.mxu0 %v3366
      %3401 = vmatprep.subr.mxu0 0.0
      %3402 = vmatpush1.msra.mxu0 %v3367
      %3403 = vmatprep.subr.mxu0 0.0
      %3404 = vmatpush1.msra.mxu0 0.0
      %3405 = vmatprep.subr.mxu0 0.0
      %3406 = vmatpush1.msra.mxu0 0.0
      %3407 = vmatprep.subr.mxu0 0.0
      %3408 = vmatpush1.msra.mxu0 0.0
      %3409 = vmatprep.subr.mxu0 0.0
      %3410 = vmatpush1.msra.mxu0 0.0
      %3411 = vmatprep.subr.mxu0 0.0
      %3412 = vmatpush1.msra.mxu0 0.0
      %3413 = vmatprep.subr.mxu0 0.0
      %3414 = vmatpush1.msra.mxu0 0.0
      %3415 = vmatprep.subr.mxu0 0.0
      %3416 = vmatpush1.msra.mxu0 0.0
      %3417 = vmatprep.subr.mxu0 0.0
      %3418 = vmatpush1.msra.mxu0 0.0
      %3419 = vmatprep.subr.mxu0 0.0
      %3420 = vmatpush1.msra.mxu0 0.0
      %3421 = vmatprep.subr.mxu0 0.0
      %3422 = vmatpush1.msra.mxu0 0.0
      %3423 = vmatprep.subr.mxu0 0.0
      %3424 = vmatpush1.msra.mxu0 0.0
      %3425 = vmatprep.subr.mxu0 0.0
      %3426 = vmatpush1.msra.mxu0 0.0
      %3427 = vmatprep.subr.mxu0 0.0
      %3428 = vmatpush1.msra.mxu0 0.0
      %3429 = vmatprep.subr.mxu0 0.0
      %3430 = vmatpush1.msra.mxu0 0.0
      %3431 = vmatprep.subr.mxu0 0.0
      %3432 = vmatpush1.msra.mxu0 0.0
      %3433 = vmatprep.subr.mxu0 0.0
      %3434 = vmatpush1.msra.mxu0 0.0
      %3435 = vmatprep.subr.mxu0 0.0
      %3436 = vmatpush1.msra.mxu0 0.0
      %3437 = vmatprep.subr.mxu0 0.0
      %3438 = vmatpush1.msra.mxu0 0.0
      %3439 = vmatprep.subr.mxu0 0.0
      %3440 = vmatpush1.msra.mxu0 0.0
      %3441 = vmatprep.subr.mxu0 0.0
      %3442 = vmatpush1.msra.mxu0 0.0
      %3443 = vmatprep.subr.mxu0 0.0
      %3444 = vmatpush1.msra.mxu0 0.0
      %3445 = vmatprep.subr.mxu0 0.0
      %3446 = vmatpush1.msra.mxu0 0.0
      %3447 = vmatprep.subr.mxu0 0.0
      %3448 = vmatpush1.msra.mxu0 0.0
      %3449 = vmatprep.subr.mxu0 0.0
      %3450 = vmatpush1.msra.mxu0 0.0
      %3451 = vmatprep.mubr.f32.mxu0 0.0
      %3452 = vmatmul.mubr.f32.gmra.mrb[0].mxu0 %v3376
      %v3453 = vpop.f32.mrb[0].mxu0
      %v3454 = vadd.f32 %v3373, %v3453
      %v3455 = vpop.f32.mrb[0].mxu0
      %3456 = vmatprep.mubr.f32.mxu0 0.0
      %3457 = vmatmul.mubr.f32.gmra.mrb[0].mxu0 %v3379
      %v3458 = vpop.f32.mrb[0].mxu0
      %v3459 = vadd.f32 %v3373, %v3458
      %v3460 = vpop.f32.mrb[0].mxu0
      %3461 = vmatprep.mubr.f32.mxu0 0.0
      %3462 = vmatmul.mubr.f32.gmra.mrb[0].mxu0 %v3382
      %v3463 = vpop.f32.mrb[0].mxu0
      %v3464 = vadd.f32 %v3373, %v3463
      %v3465 = vpop.f32.mrb[0].mxu0
      %3466 = vmatprep.mubr.f32.mxu0 0.0
      %3467 = vmatmul.mubr.f32.gmra.mrb[0].mxu0 %v3385
      %v3468 = vpop.f32.mrb[0].mxu0
      %v3469 = vadd.f32 %v3373, %v3468
      %v3470 = vpop.f32.mrb[0].mxu0
      %3471 = vdwg.mxu0
      %3472 = vst [vmem:[%s494] sm:$0xff] %v3454
      %3473 = vst [vmem:[%s494 + $0x8] sm:$0xff] %v3459
      %3474 = vst [vmem:[%s494 + $0x10] sm:$0xff] %v3464
      %3475 = vst [vmem:[%s494 + $0x18] sm:$0xff] %v3469
      %p3476 = scmp.lt.s32.totalorder %s26, 1
      %s3477 = scalar_select %p3476, %s26, 1
      %s3478 = smul.addr %s3477, 4
      %s3479 = smul.addr %s3478, 8
      %s3480 = scalar_lea.vmem %s15, %s3479
      // Predicated region
      $region81: #{forward.1} parent=79 // pred_check
        %p3481 = pneg %p364
      $region82: #{forward.1} parent=79 // pred_check_branch
        %3483 = sbr.rel (%p3481) target = $region84
      $region83: #{forward.1} parent=79 // pred_region
        _
      $region84: #{forward.1} parent=79 // pred_fallthru
        _
    $region80: #{forward.1} parent=5 // pred_fallthru
      _
    %p3484 = scmp.le.s32.totalorder 2, %s21
    // Predicated region
    $region85: #{forward.1} parent=5 // pred_check
      %p3485 = pneg %p3484
    $region86: #{forward.1} parent=5 // pred_check_branch
      %3487 = sbr.rel (%p3485) target = $region88
    $region87: #{forward.1} parent=5 // pred_region
      %s3488 = ssub.s32 %s21, 2
      // Predicated region
      $region89: #{forward.1} parent=87 // pred_check
        %p3489 = pneg %p370
      $region90: #{forward.1} parent=87 // pred_check_branch
        %3491 = sbr.rel (%p3489) target = $region92
      $region91: #{forward.1} parent=87 // pred_region
        %p3492 = scmp.lt.s32.totalorder %s27, 1
        %s3493 = scalar_select %p3492, %s27, 1
        %s3494 = smul.addr %s3493, 4
        %s3495 = smul.addr %s3494, 8
        %s3496 = scalar_lea.vmem %s15, %s3495
      $region92: #{forward.1} parent=87 // pred_fallthru
        _
    $region88: #{forward.1} parent=5 // pred_fallthru
      _
  $region6: #{forward.1} parent=0 // loop_footer
    %s25 = sadd.s32 1, %s21
  $region7: #{forward.1} parent=0 // loop_footer_branch
    %20 = sbr.rel target = $region3
  $region8: #{forward.1} parent=0 // loop_exit
    _

</llo_original>
